<compile_context>
chip_gen: v7x
topology: tpu7x:2x2x1
jax: 0.10.0
libtpu: 0.0.40
codegen_flags: <defaults>
</compile_context>

<pallas_src>
import functools
import math

import jax
import jax.numpy as jnp
from jax.experimental import pallas as pl
from jax.experimental.pallas import tpu as pltpu

LANE = 128


def _gelu(x):
    # tanh-approximate GELU (runs on the EUP); ~3e-4 max abs delta vs nn.GELU()'s
    # exact erf form — well inside the 2e-2 test tolerance.
    c = math.sqrt(2.0 / math.pi)
    return 0.5 * x * (1.0 + jnp.tanh(c * (x + 0.044715 * x * x * x)))


def _residual_block_kernel(H, W, Ci, Co, has_skip_conv,
                           xpad_ref, w1_ref, w2_ref, shifts_ref, *rest):
    """One batch element per grid step.

    xpad_ref:   (1, H+2, W+2, Ci)  f32, spatially zero-padded, channel-padded input
    w1_ref:     (9*Ci, Co)         bf16, conv1 weights (dh, dw, ci) x co, BN1 scale folded
    w2_ref:     (9*Co, Co)         bf16, conv2 weights, BN2 scale folded
    shifts_ref: (3, Co)            f32 rows: [BN1 shift, BN2 shift, skip bias]
    wsk_ref:    (Ci, Co)           bf16 1x1 skip conv (only when has_skip_conv)
    o_ref:      (1, H, W, Co)      f32 output
    mid_ref:    (H+2, W+2, Co)     bf16 persistent VMEM scratch (padded intermediate)
    """
    if has_skip_conv:
        wsk_ref, o_ref, mid_ref = rest
    else:
        o_ref, mid_ref = rest

    x = xpad_ref[0]                 # (H+2, W+2, Ci) f32
    sh = shifts_ref[...]            # (3, Co) f32

    # ---- conv1: im2col + one fat bf16 MXU matmul (BN1 scale pre-folded into w1).
    slabs = [x[:, dw:dw + W, :].astype(jnp.bfloat16) for dw in range(3)]
    cols = [slabs[dw][dh:dh + H].reshape(H * W, Ci)
            for dh in range(3) for dw in range(3)]
    patches = jnp.concatenate(cols, axis=1)                      # (H*W, 9*Ci) bf16
    y = jnp.dot(patches, w1_ref[...], preferred_element_type=jnp.float32)
    y = _gelu(y + sh[0:1, :])
    # TODO(synk): Dropout2d(0.1) is identity in eval mode; training-mode channel
    #             masking would need pltpu.prng_* plus a 1/0.9 rescale.

    # ---- padded bf16 intermediate in persistent VMEM scratch.
    # Only the 1-px border is re-zeroed (interior fully overwritten every step);
    # done every step (not pid==0-gated) so it is correct under megacore sharding.
    zrow = jnp.zeros((1, W + 2, Co), jnp.bfloat16)
    zcol = jnp.zeros((H + 2, 1, Co), jnp.bfloat16)
    mid_ref[pl.ds(0, 1), :, :] = zrow
    mid_ref[pl.ds(H + 1, 1), :, :] = zrow
    mid_ref[:, pl.ds(0, 1), :] = zcol
    mid_ref[:, pl.ds(W + 1, 1), :] = zcol
    mid_ref[pl.ds(1, H), pl.ds(1, W), :] = y.astype(jnp.bfloat16).reshape(H, W, Co)

    # ---- conv2: same im2col structure, slabs read straight off the scratch ref.
    slabs2 = [mid_ref[:, pl.ds(dw, W), :] for dw in range(3)]    # (H+2, W, Co) bf16
    cols2 = [slabs2[dw][dh:dh + H].reshape(H * W, Co)
             for dh in range(3) for dw in range(3)]
    patches2 = jnp.concatenate(cols2, axis=1)                    # (H*W, 9*Co) bf16
    z = jnp.dot(patches2, w2_ref[...], preferred_element_type=jnp.float32) + sh[1:2, :]

    # ---- skip connection.
    xi = x[1:H + 1, 1:W + 1, :].reshape(H * W, Ci)
    if has_skip_conv:
        idn = jnp.dot(xi.astype(jnp.bfloat16), wsk_ref[...],
                      preferred_element_type=jnp.float32) + sh[2:3, :]
    else:
        idn = xi                                                 # pure identity (Ci == Co)

    o_ref[0] = _gelu(z + idn).reshape(H, W, Co)


def _round_up(n, m):
    return ((n + m - 1) // m) * m


def residual_block_forward(x_nchw, p):
    """x_nchw: (B, C_in, H, W) float32 (PyTorch layout). Returns (B, C_out, H, W)."""
    B, C_in, H, W = x_nchw.shape
    C_out = p["w1"].shape[-1]
    eps = 1e-5
    Cip = _round_up(C_in, LANE)
    Cop = _round_up(C_out, LANE)
    has_skip_conv = C_in != C_out

    # Fold BatchNorm (eval mode): scale goes into the conv weights, shift stays additive.
    s1 = p["g1"] / jnp.sqrt(p["v1"] + eps)
    t1 = (p["b1"] - p["m1"]) * s1 + p["be1"]
    s2 = p["g2"] / jnp.sqrt(p["v2"] + eps)
    t2 = (p["b2"] - p["m2"]) * s2 + p["be2"]

    def prep_w(w, s, cip, cop):
        kh, kw, ci, co = w.shape
        w = w * s[None, None, None, :]
        w = jnp.pad(w, ((0, 0), (0, 0), (0, cip - ci), (0, cop - co)))
        return w.reshape(kh * kw * cip, cop).astype(jnp.bfloat16)

    w1f = prep_w(p["w1"], s1, Cip, Cop)            # (9*Cip, Cop) bf16
    w2f = prep_w(p["w2"], s2, Cop, Cop)            # (9*Cop, Cop) bf16

    padc = lambda v, c: jnp.pad(v.astype(jnp.float32), (0, c - v.shape[0]))
    shift_rows = [padc(t1, Cop), padc(t2, Cop)]
    if has_skip_conv:
        wskf = jnp.pad(p["wsk"], ((0, Cip - C_in), (0, Cop - C_out))).astype(jnp.bfloat16)
        shift_rows.append(padc(p["bsk"], Cop))
    else:
        shift_rows.append(jnp.zeros((Cop,), jnp.float32))
    shifts = jnp.stack(shift_rows, axis=0)         # (3, Cop) f32, one DMA

    # NCHW -> NHWC, channel pad to the 128-lane width, 1-px spatial zero-pad:
    # all three fuse into a single XLA copy pass.
    x_nhwc = jnp.transpose(x_nchw, (0, 2, 3, 1)).astype(jnp.float32)
    xpad = jnp.pad(x_nhwc, ((0, 0), (1, 1), (1, 1), (0, Cip - C_in)))

    inputs = [xpad, w1f, w2f, shifts]
    in_specs = [
        pl.BlockSpec((1, H + 2, W + 2, Cip), lambda b: (b, 0, 0, 0)),
        pl.BlockSpec((9 * Cip, Cop), lambda b: (0, 0)),
        pl.BlockSpec((9 * Cop, Cop), lambda b: (0, 0)),
        pl.BlockSpec((3, Cop), lambda b: (0, 0)),
    ]
    if has_skip_conv:
        inputs.append(wskf)
        in_specs.append(pl.BlockSpec((Cip, Cop), lambda b: (0, 0)))

    kern = functools.partial(_residual_block_kernel, H, W, Cip, Cop, has_skip_conv)

    # TODO(synk): for production-sized H*W*C, add an H-strip grid axis (1-row halo
    #             via the index_map) to bound per-step VMEM on v7x's 64 MiB part.
    out_nhwc = pl.pallas_call(
        kern,
        out_shape=jax.ShapeDtypeStruct((B, H, W, Cop), jnp.float32),
        grid_spec=pltpu.PrefetchScalarGridSpec(
            num_scalar_prefetch=0,
            grid=(B,),
            in_specs=in_specs,
            out_specs=pl.BlockSpec((1, H, W, Cop), lambda b: (b, 0, 0, 0)),
            scratch_shapes=[pltpu.VMEM((H + 2, W + 2, Cop), jnp.bfloat16)],
        ),
        compiler_params=pltpu.CompilerParams(dimension_semantics=("parallel",)),
    )(*inputs)

    out = out_nhwc[..., :C_out]                    # drop padded channels
    return jnp.transpose(out, (0, 3, 1, 2))        # back to NCHW


def reference_forward(x_nchw, p):
    """Pure-JAX reference (same eval-mode semantics, exact-erf GELU, f32)."""
    eps = 1e-5
    x = jnp.transpose(x_nchw, (0, 2, 3, 1)).astype(jnp.float32)

    def conv3(z, w, b):
        return jax.lax.conv_general_dilated(
            z, w, window_strides=(1, 1), padding="SAME",
            dimension_numbers=("NHWC", "HWIO", "NHWC")) + b

    def bn(z, g, be, m, v):
        return (z - m) / jnp.sqrt(v + eps) * g + be

    gelu = lambda z: jax.nn.gelu(z, approximate=False)

    C_in, C_out = x.shape[-1], p["w1"].shape[-1]
    if C_in == C_out:
        identity = x
    else:
        identity = jnp.einsum("bhwc,cd->bhwd", x, p["wsk"]) + p["bsk"]

    out = conv3(x, p["w1"], p["b1"])
    out = bn(out, p["g1"], p["be1"], p["m1"], p["v1"])
    out = gelu(out)                      # dropout: identity in eval mode
    out = conv3(out, p["w2"], p["b2"])
    out = bn(out, p["g2"], p["be2"], p["m2"], p["v2"])
    out = gelu(out + identity)
    return jnp.transpose(out, (0, 3, 1, 2))


def init_params(key, C_in, C_out):
    ks = jax.random.split(key, 4)

    def conv_init(k, kh, kw, ci, co):
        # PyTorch-like uniform(-1/sqrt(fan_in), 1/sqrt(fan_in))
        fan_in = ci * kh * kw
        bound = 1.0 / math.sqrt(fan_in)
        kw_, kb = jax.random.split(k)
        w = jax.random.uniform(kw_, (kh, kw, ci, co), jnp.float32, -bound, bound)
        b = jax.random.uniform(kb, (co,), jnp.float32, -bound, bound)
        return w, b

    w1, b1 = conv_init(ks[0], 3, 3, C_in, C_out)
    w2, b2 = conv_init(ks[1], 3, 3, C_out, C_out)
    p = dict(
        w1=w1, b1=b1, w2=w2, b2=b2,
        g1=jnp.ones((C_out,), jnp.float32), be1=jnp.zeros((C_out,), jnp.float32),
        m1=jnp.zeros((C_out,), jnp.float32), v1=jnp.ones((C_out,), jnp.float32),
        g2=jnp.ones((C_out,), jnp.float32), be2=jnp.zeros((C_out,), jnp.float32),
        m2=jnp.zeros((C_out,), jnp.float32), v2=jnp.ones((C_out,), jnp.float32),
    )
    if C_in != C_out:
        wsk4, bsk = conv_init(ks[2], 1, 1, C_in, C_out)
        p["wsk"] = wsk4.reshape(C_in, C_out)
        p["bsk"] = bsk
    return p


if __name__ == "__main__":
    key = jax.random.PRNGKey(0)
    B, C_in, C_out, H, W = 2, 4, 8, 16, 16

    params = init_params(key, C_in, C_out)
    x = jax.random.normal(jax.random.fold_in(key, 99), (B, C_in, H, W), jnp.float32)

    out = residual_block_forward(x, params)
    out = jax.block_until_ready(out)
    assert out.shape == (B, C_out, H, W)

    ref = reference_forward(x, params)
    max_err = float(jnp.max(jnp.abs(out - ref)))
    assert max_err < 2e-2, f"max abs err too large: {max_err}"

    print("KERNEL_OK")
</pallas_src>

<mosaic_0001>
module attributes {stable_mosaic.version = 11 : i64} {
  func.func @_residual_block_kernel(%arg0: i32, %arg1: memref<1x18x18x128xf32, #tpu.memory_space<vmem>>, %arg2: memref<1152x128xbf16, #tpu.memory_space<vmem>>, %arg3: memref<1152x128xbf16, #tpu.memory_space<vmem>>, %arg4: memref<3x128xf32, #tpu.memory_space<vmem>>, %arg5: memref<128x128xbf16, #tpu.memory_space<vmem>>, %arg6: memref<1x16x16x128xf32, #tpu.memory_space<vmem>>, %arg7: memref<18x18x128xbf16, #tpu.memory_space<vmem>>) attributes {dimension_semantics = [#tpu.dimension_semantics<parallel>], iteration_bounds = array<i64: 2>, scalar_prefetch = 0 : i64, scratch_operands = 1 : i64, tpu.core_type = #tpu.core_type<tc>, window_params = [{transform_indices = @transform_0, window_bounds = array<i64: 1, 18, 18, 128>}, {pipeline_mode = #tpu.pipeline_mode<synchronous>, transform_indices = @transform_1, window_bounds = array<i64: 1152, 128>}, {pipeline_mode = #tpu.pipeline_mode<synchronous>, transform_indices = @transform_2, window_bounds = array<i64: 1152, 128>}, {pipeline_mode = #tpu.pipeline_mode<synchronous>, transform_indices = @transform_3, window_bounds = array<i64: 3, 128>}, {pipeline_mode = #tpu.pipeline_mode<synchronous>, transform_indices = @transform_4, window_bounds = array<i64: 128, 128>}, {transform_indices = @transform_5, window_bounds = array<i64: 1, 16, 16, 128>}]} {
    %c0 = arith.constant 0 : index
    %c0_0 = arith.constant 0 : index
    %c0_1 = arith.constant 0 : index
    %c0_2 = arith.constant 0 : index
    %0 = vector.load %arg1[%c0, %c0_0, %c0_1, %c0_2] : memref<1x18x18x128xf32, #tpu.memory_space<vmem>>, vector<1x18x18x128xf32>
    %1 = vector.shape_cast %0 : vector<1x18x18x128xf32> to vector<18x18x128xf32>
    %c0_3 = arith.constant 0 : index
    %c0_4 = arith.constant 0 : index
    %2 = vector.load %arg4[%c0_3, %c0_4] : memref<3x128xf32, #tpu.memory_space<vmem>>, vector<3x128xf32>
    %3 = vector.extract_strided_slice %1 {offsets = [0, 0, 0], sizes = [18, 16, 128], strides = [1, 1, 1]} : vector<18x18x128xf32> to vector<18x16x128xf32>
    %4 = arith.truncf %3 : vector<18x16x128xf32> to vector<18x16x128xbf16>
    %5 = vector.extract_strided_slice %1 {offsets = [0, 1, 0], sizes = [18, 16, 128], strides = [1, 1, 1]} : vector<18x18x128xf32> to vector<18x16x128xf32>
    %6 = arith.truncf %5 : vector<18x16x128xf32> to vector<18x16x128xbf16>
    %7 = vector.extract_strided_slice %1 {offsets = [0, 2, 0], sizes = [18, 16, 128], strides = [1, 1, 1]} : vector<18x18x128xf32> to vector<18x16x128xf32>
    %8 = arith.truncf %7 : vector<18x16x128xf32> to vector<18x16x128xbf16>
    %9 = vector.extract_strided_slice %4 {offsets = [0, 0, 0], sizes = [16, 16, 128], strides = [1, 1, 1]} : vector<18x16x128xbf16> to vector<16x16x128xbf16>
    %10 = vector.shape_cast %9 : vector<16x16x128xbf16> to vector<256x128xbf16>
    %11 = vector.extract_strided_slice %6 {offsets = [0, 0, 0], sizes = [16, 16, 128], strides = [1, 1, 1]} : vector<18x16x128xbf16> to vector<16x16x128xbf16>
    %12 = vector.shape_cast %11 : vector<16x16x128xbf16> to vector<256x128xbf16>
    %13 = vector.extract_strided_slice %8 {offsets = [0, 0, 0], sizes = [16, 16, 128], strides = [1, 1, 1]} : vector<18x16x128xbf16> to vector<16x16x128xbf16>
    %14 = vector.shape_cast %13 : vector<16x16x128xbf16> to vector<256x128xbf16>
    %15 = vector.extract_strided_slice %4 {offsets = [1, 0, 0], sizes = [16, 16, 128], strides = [1, 1, 1]} : vector<18x16x128xbf16> to vector<16x16x128xbf16>
    %16 = vector.shape_cast %15 : vector<16x16x128xbf16> to vector<256x128xbf16>
    %17 = vector.extract_strided_slice %6 {offsets = [1, 0, 0], sizes = [16, 16, 128], strides = [1, 1, 1]} : vector<18x16x128xbf16> to vector<16x16x128xbf16>
    %18 = vector.shape_cast %17 : vector<16x16x128xbf16> to vector<256x128xbf16>
    %19 = vector.extract_strided_slice %8 {offsets = [1, 0, 0], sizes = [16, 16, 128], strides = [1, 1, 1]} : vector<18x16x128xbf16> to vector<16x16x128xbf16>
    %20 = vector.shape_cast %19 : vector<16x16x128xbf16> to vector<256x128xbf16>
    %21 = vector.extract_strided_slice %4 {offsets = [2, 0, 0], sizes = [16, 16, 128], strides = [1, 1, 1]} : vector<18x16x128xbf16> to vector<16x16x128xbf16>
    %22 = vector.shape_cast %21 : vector<16x16x128xbf16> to vector<256x128xbf16>
    %23 = vector.extract_strided_slice %6 {offsets = [2, 0, 0], sizes = [16, 16, 128], strides = [1, 1, 1]} : vector<18x16x128xbf16> to vector<16x16x128xbf16>
    %24 = vector.shape_cast %23 : vector<16x16x128xbf16> to vector<256x128xbf16>
    %25 = vector.extract_strided_slice %8 {offsets = [2, 0, 0], sizes = [16, 16, 128], strides = [1, 1, 1]} : vector<18x16x128xbf16> to vector<16x16x128xbf16>
    %26 = vector.shape_cast %25 : vector<16x16x128xbf16> to vector<256x128xbf16>
    %27 = tpu.concatenate %10, %12, %14, %16, %18, %20, %22, %24, %26 in 1 : vector<256x128xbf16>, vector<256x128xbf16>, vector<256x128xbf16>, vector<256x128xbf16>, vector<256x128xbf16>, vector<256x128xbf16>, vector<256x128xbf16>, vector<256x128xbf16>, vector<256x128xbf16> -> vector<256x1152xbf16>
    %c0_5 = arith.constant 0 : index
    %c0_6 = arith.constant 0 : index
    %28 = vector.load %arg2[%c0_5, %c0_6] : memref<1152x128xbf16, #tpu.memory_space<vmem>>, vector<1152x128xbf16>
    %cst = arith.constant dense<0.000000e+00> : vector<256x128xf32>
    %29 = tpu.matmul %27, %28, %cst {dimension_numbers = #tpu.dot_dimension_numbers<[1], [0], [0], [1], [0, 0, 1, 1], [], []>} : vector<256x1152xbf16>, vector<1152x128xbf16>, vector<256x128xf32> -> vector<256x128xf32>
    %30 = vector.extract_strided_slice %2 {offsets = [0, 0], sizes = [1, 128], strides = [1, 1]} : vector<3x128xf32> to vector<1x128xf32>
    %31 = vector.broadcast %30 : vector<1x128xf32> to vector<256x128xf32>
    %32 = arith.addf %29, %31 : vector<256x128xf32>
    %cst_7 = arith.constant 5.000000e-01 : f32
    %33 = vector.broadcast %cst_7 : f32 to vector<256x128xf32>
    %34 = arith.mulf %33, %32 : vector<256x128xf32>
    %cst_8 = arith.constant 4.471500e-02 : f32
    %35 = vector.broadcast %cst_8 : f32 to vector<256x128xf32>
    %36 = arith.mulf %35, %32 : vector<256x128xf32>
    %37 = arith.mulf %36, %32 : vector<256x128xf32>
    %38 = arith.mulf %37, %32 : vector<256x128xf32>
    %39 = arith.addf %32, %38 : vector<256x128xf32>
    %cst_9 = arith.constant 0.797884583 : f32
    %40 = vector.broadcast %cst_9 : f32 to vector<256x128xf32>
    %41 = arith.mulf %40, %39 : vector<256x128xf32>
    %42 = math.tanh %41 : vector<256x128xf32>
    %cst_10 = arith.constant 1.000000e+00 : f32
    %43 = vector.broadcast %cst_10 : f32 to vector<256x128xf32>
    %44 = arith.addf %43, %42 : vector<256x128xf32>
    %45 = arith.mulf %34, %44 : vector<256x128xf32>
    %cst_11 = arith.constant 0.000000e+00 : bf16
    %46 = vector.broadcast %cst_11 : bf16 to vector<1x18x128xbf16>
    %cst_12 = arith.constant 0.000000e+00 : bf16
    %47 = vector.broadcast %cst_12 : bf16 to vector<18x1x128xbf16>
    %c0_13 = arith.constant 0 : index
    %c0_14 = arith.constant 0 : index
    %c0_15 = arith.constant 0 : index
    %48 = vector.load %arg7[%c0_13, %c0_14, %c0_15] : memref<18x18x128xbf16, #tpu.memory_space<vmem>>, vector<1x18x128xbf16>
    tpu.vector_store %arg7[%c0_13, %c0_14, %c0_15], %46 {strides = array<i32>} : memref<18x18x128xbf16, #tpu.memory_space<vmem>>, vector<1x18x128xbf16>,
    %c17 = arith.constant 17 : index
    %c0_16 = arith.constant 0 : index
    %c0_17 = arith.constant 0 : index
    %49 = vector.load %arg7[%c17, %c0_16, %c0_17] : memref<18x18x128xbf16, #tpu.memory_space<vmem>>, vector<1x18x128xbf16>
    tpu.vector_store %arg7[%c17, %c0_16, %c0_17], %46 {strides = array<i32>} : memref<18x18x128xbf16, #tpu.memory_space<vmem>>, vector<1x18x128xbf16>,
    %c0_18 = arith.constant 0 : index
    %c0_19 = arith.constant 0 : index
    %c0_20 = arith.constant 0 : index
    %50 = vector.load %arg7[%c0_18, %c0_19, %c0_20] : memref<18x18x128xbf16, #tpu.memory_space<vmem>>, vector<18x1x128xbf16>
    tpu.vector_store %arg7[%c0_18, %c0_19, %c0_20], %47 {strides = array<i32>} : memref<18x18x128xbf16, #tpu.memory_space<vmem>>, vector<18x1x128xbf16>,
    %c0_21 = arith.constant 0 : index
    %c17_22 = arith.constant 17 : index
    %c0_23 = arith.constant 0 : index
    %51 = vector.load %arg7[%c0_21, %c17_22, %c0_23] : memref<18x18x128xbf16, #tpu.memory_space<vmem>>, vector<18x1x128xbf16>
    tpu.vector_store %arg7[%c0_21, %c17_22, %c0_23], %47 {strides = array<i32>} : memref<18x18x128xbf16, #tpu.memory_space<vmem>>, vector<18x1x128xbf16>,
    %52 = arith.truncf %45 : vector<256x128xf32> to vector<256x128xbf16>
    %53 = vector.shape_cast %52 : vector<256x128xbf16> to vector<16x16x128xbf16>
    %c1 = arith.constant 1 : index
    %c1_24 = arith.constant 1 : index
    %c0_25 = arith.constant 0 : index
    %54 = vector.load %arg7[%c1, %c1_24, %c0_25] : memref<18x18x128xbf16, #tpu.memory_space<vmem>>, vector<16x16x128xbf16>
    tpu.vector_store %arg7[%c1, %c1_24, %c0_25], %53 {strides = array<i32>} : memref<18x18x128xbf16, #tpu.memory_space<vmem>>, vector<16x16x128xbf16>,
    %c0_26 = arith.constant 0 : index
    %c0_27 = arith.constant 0 : index
    %c0_28 = arith.constant 0 : index
    %55 = vector.load %arg7[%c0_26, %c0_27, %c0_28] : memref<18x18x128xbf16, #tpu.memory_space<vmem>>, vector<18x16x128xbf16>
    %c0_29 = arith.constant 0 : index
    %c1_30 = arith.constant 1 : index
    %c0_31 = arith.constant 0 : index
    %56 = vector.load %arg7[%c0_29, %c1_30, %c0_31] : memref<18x18x128xbf16, #tpu.memory_space<vmem>>, vector<18x16x128xbf16>
    %c0_32 = arith.constant 0 : index
    %c2 = arith.constant 2 : index
    %c0_33 = arith.constant 0 : index
    %57 = vector.load %arg7[%c0_32, %c2, %c0_33] : memref<18x18x128xbf16, #tpu.memory_space<vmem>>, vector<18x16x128xbf16>
    %58 = vector.extract_strided_slice %55 {offsets = [0, 0, 0], sizes = [16, 16, 128], strides = [1, 1, 1]} : vector<18x16x128xbf16> to vector<16x16x128xbf16>
    %59 = vector.shape_cast %58 : vector<16x16x128xbf16> to vector<256x128xbf16>
    %60 = vector.extract_strided_slice %56 {offsets = [0, 0, 0], sizes = [16, 16, 128], strides = [1, 1, 1]} : vector<18x16x128xbf16> to vector<16x16x128xbf16>
    %61 = vector.shape_cast %60 : vector<16x16x128xbf16> to vector<256x128xbf16>
    %62 = vector.extract_strided_slice %57 {offsets = [0, 0, 0], sizes = [16, 16, 128], strides = [1, 1, 1]} : vector<18x16x128xbf16> to vector<16x16x128xbf16>
    %63 = vector.shape_cast %62 : vector<16x16x128xbf16> to vector<256x128xbf16>
    %64 = vector.extract_strided_slice %55 {offsets = [1, 0, 0], sizes = [16, 16, 128], strides = [1, 1, 1]} : vector<18x16x128xbf16> to vector<16x16x128xbf16>
    %65 = vector.shape_cast %64 : vector<16x16x128xbf16> to vector<256x128xbf16>
    %66 = vector.extract_strided_slice %56 {offsets = [1, 0, 0], sizes = [16, 16, 128], strides = [1, 1, 1]} : vector<18x16x128xbf16> to vector<16x16x128xbf16>
    %67 = vector.shape_cast %66 : vector<16x16x128xbf16> to vector<256x128xbf16>
    %68 = vector.extract_strided_slice %57 {offsets = [1, 0, 0], sizes = [16, 16, 128], strides = [1, 1, 1]} : vector<18x16x128xbf16> to vector<16x16x128xbf16>
    %69 = vector.shape_cast %68 : vector<16x16x128xbf16> to vector<256x128xbf16>
    %70 = vector.extract_strided_slice %55 {offsets = [2, 0, 0], sizes = [16, 16, 128], strides = [1, 1, 1]} : vector<18x16x128xbf16> to vector<16x16x128xbf16>
    %71 = vector.shape_cast %70 : vector<16x16x128xbf16> to vector<256x128xbf16>
    %72 = vector.extract_strided_slice %56 {offsets = [2, 0, 0], sizes = [16, 16, 128], strides = [1, 1, 1]} : vector<18x16x128xbf16> to vector<16x16x128xbf16>
    %73 = vector.shape_cast %72 : vector<16x16x128xbf16> to vector<256x128xbf16>
    %74 = vector.extract_strided_slice %57 {offsets = [2, 0, 0], sizes = [16, 16, 128], strides = [1, 1, 1]} : vector<18x16x128xbf16> to vector<16x16x128xbf16>
    %75 = vector.shape_cast %74 : vector<16x16x128xbf16> to vector<256x128xbf16>
    %76 = tpu.concatenate %59, %61, %63, %65, %67, %69, %71, %73, %75 in 1 : vector<256x128xbf16>, vector<256x128xbf16>, vector<256x128xbf16>, vector<256x128xbf16>, vector<256x128xbf16>, vector<256x128xbf16>, vector<256x128xbf16>, vector<256x128xbf16>, vector<256x128xbf16> -> vector<256x1152xbf16>
    %c0_34 = arith.constant 0 : index
    %c0_35 = arith.constant 0 : index
    %77 = vector.load %arg3[%c0_34, %c0_35] : memref<1152x128xbf16, #tpu.memory_space<vmem>>, vector<1152x128xbf16>
    %cst_36 = arith.constant dense<0.000000e+00> : vector<256x128xf32>
    %78 = tpu.matmul %76, %77, %cst_36 {dimension_numbers = #tpu.dot_dimension_numbers<[1], [0], [0], [1], [0, 0, 1, 1], [], []>} : vector<256x1152xbf16>, vector<1152x128xbf16>, vector<256x128xf32> -> vector<256x128xf32>
    %79 = vector.extract_strided_slice %2 {offsets = [1, 0], sizes = [1, 128], strides = [1, 1]} : vector<3x128xf32> to vector<1x128xf32>
    %80 = vector.broadcast %79 : vector<1x128xf32> to vector<256x128xf32>
    %81 = arith.addf %78, %80 : vector<256x128xf32>
    %82 = vector.extract_strided_slice %1 {offsets = [1, 1, 0], sizes = [16, 16, 128], strides = [1, 1, 1]} : vector<18x18x128xf32> to vector<16x16x128xf32>
    %83 = vector.shape_cast %82 : vector<16x16x128xf32> to vector<256x128xf32>
    %84 = arith.truncf %83 : vector<256x128xf32> to vector<256x128xbf16>
    %c0_37 = arith.constant 0 : index
    %c0_38 = arith.constant 0 : index
    %85 = vector.load %arg5[%c0_37, %c0_38] : memref<128x128xbf16, #tpu.memory_space<vmem>>, vector<128x128xbf16>
    %cst_39 = arith.constant dense<0.000000e+00> : vector<256x128xf32>
    %86 = tpu.matmul %84, %85, %cst_39 {dimension_numbers = #tpu.dot_dimension_numbers<[1], [0], [0], [1], [0, 0, 1, 1], [], []>} : vector<256x128xbf16>, vector<128x128xbf16>, vector<256x128xf32> -> vector<256x128xf32>
    %87 = vector.extract_strided_slice %2 {offsets = [2, 0], sizes = [1, 128], strides = [1, 1]} : vector<3x128xf32> to vector<1x128xf32>
    %88 = vector.broadcast %87 : vector<1x128xf32> to vector<256x128xf32>
    %89 = arith.addf %86, %88 : vector<256x128xf32>
    %90 = arith.addf %81, %89 : vector<256x128xf32>
    %cst_40 = arith.constant 5.000000e-01 : f32
    %91 = vector.broadcast %cst_40 : f32 to vector<256x128xf32>
    %92 = arith.mulf %91, %90 : vector<256x128xf32>
    %cst_41 = arith.constant 4.471500e-02 : f32
    %93 = vector.broadcast %cst_41 : f32 to vector<256x128xf32>
    %94 = arith.mulf %93, %90 : vector<256x128xf32>
    %95 = arith.mulf %94, %90 : vector<256x128xf32>
    %96 = arith.mulf %95, %90 : vector<256x128xf32>
    %97 = arith.addf %90, %96 : vector<256x128xf32>
    %cst_42 = arith.constant 0.797884583 : f32
    %98 = vector.broadcast %cst_42 : f32 to vector<256x128xf32>
    %99 = arith.mulf %98, %97 : vector<256x128xf32>
    %100 = math.tanh %99 : vector<256x128xf32>
    %cst_43 = arith.constant 1.000000e+00 : f32
    %101 = vector.broadcast %cst_43 : f32 to vector<256x128xf32>
    %102 = arith.addf %101, %100 : vector<256x128xf32>
    %103 = arith.mulf %92, %102 : vector<256x128xf32>
    %104 = vector.shape_cast %103 : vector<256x128xf32> to vector<16x16x128xf32>
    %c0_44 = arith.constant 0 : index
    %c0_45 = arith.constant 0 : index
    %c0_46 = arith.constant 0 : index
    %c0_47 = arith.constant 0 : index
    %105 = vector.load %arg6[%c0_44, %c0_45, %c0_46, %c0_47] : memref<1x16x16x128xf32, #tpu.memory_space<vmem>>, vector<1x16x16x128xf32>
    %106 = vector.shape_cast %105 : vector<1x16x16x128xf32> to vector<16x16x128xf32>
    %107 = vector.shape_cast %104 : vector<16x16x128xf32> to vector<1x16x16x128xf32>
    tpu.vector_store %arg6[%c0_44, %c0_45, %c0_46, %c0_47], %107 {strides = array<i32>} : memref<1x16x16x128xf32, #tpu.memory_space<vmem>>, vector<1x16x16x128xf32>,
    return
  }
  func.func @transform_0(%arg0: i32) -> (i32, i32, i32, i32) {
    %c0_i32 = arith.constant 0 : i32
    %c0_i32_0 = arith.constant 0 : i32
    %c0_i32_1 = arith.constant 0 : i32
    %c0_i32_2 = arith.constant 0 : i32
    return %arg0, %c0_i32, %c0_i32_0, %c0_i32_1 : i32, i32, i32, i32
  }
  func.func @transform_1(%arg0: i32) -> (i32, i32) {
    %c0_i32 = arith.constant 0 : i32
    %c0_i32_0 = arith.constant 0 : i32
    %c0_i32_1 = arith.constant 0 : i32
    return %c0_i32, %c0_i32_0 : i32, i32
  }
  func.func @transform_2(%arg0: i32) -> (i32, i32) {
    %c0_i32 = arith.constant 0 : i32
    %c0_i32_0 = arith.constant 0 : i32
    %c0_i32_1 = arith.constant 0 : i32
    return %c0_i32, %c0_i32_0 : i32, i32
  }
  func.func @transform_3(%arg0: i32) -> (i32, i32) {
    %c0_i32 = arith.constant 0 : i32
    %c0_i32_0 = arith.constant 0 : i32
    %c0_i32_1 = arith.constant 0 : i32
    return %c0_i32, %c0_i32_0 : i32, i32
  }
  func.func @transform_4(%arg0: i32) -> (i32, i32) {
    %c0_i32 = arith.constant 0 : i32
    %c0_i32_0 = arith.constant 0 : i32
    %c0_i32_1 = arith.constant 0 : i32
    return %c0_i32, %c0_i32_0 : i32, i32
  }
  func.func @transform_5(%arg0: i32) -> (i32, i32, i32, i32) {
    %c0_i32 = arith.constant 0 : i32
    %c0_i32_0 = arith.constant 0 : i32
    %c0_i32_1 = arith.constant 0 : i32
    %c0_i32_2 = arith.constant 0 : i32
    return %arg0, %c0_i32, %c0_i32_0, %c0_i32_1 : i32, i32, i32, i32
  }
}

</mosaic_0001>

<llo_original>
// kernel: tpu_custom_call.1
$region0: #{tpu_custom_call.1}
  #allocation0 [shape = 'u32[]', space=smem, size = 0x4, offset = 0x4, fixed_abs, tag = 'smem constant byte address 0x4 - core index']
  #allocation1 [shape = 'u32[144,128]{1,0:T(1,128)}', space=vmem, size = 0x12000, scoped, tag = 'internal scratch']
  #allocation2 [shape = 'bf16[18,18,128]{2,1,0:T(8,128)(2,1)}', space=vmem, size = 0x1b000, scoped, tag = 'scratch operand']
  %s0 = inlined_call_operand.vmem [shape: f32[2,18,18,128], index: 0, kind: input, shape index: {}]
  %s1 = inlined_call_operand.vmem [shape: bf16[1152,128], index: 1, kind: input, shape index: {}]
  %s2 = inlined_call_operand.vmem [shape: bf16[1152,128], index: 2, kind: input, shape index: {}]
  %s3 = inlined_call_operand.vmem [shape: f32[3,128], index: 3, kind: input, shape index: {}]
  %s4 = inlined_call_operand.vmem [shape: bf16[128,128], index: 4, kind: input, shape index: {}]
  %s5 = inlined_call_operand.hbm [shape: f32[2,16,16,128], index: 5, kind: output, shape index: {}]
  %s6 = sld [smem:[#allocation0]]
  $region53: #{tpu_custom_call.1} parent=0
    _
  %s8 = ssub.s32 1, %s6
  %s9 = scalar_select 0, %s8, %s6
  $region1: #{tpu_custom_call.1} parent=0
    #allocation3 [shape = 'u8[262144]{0}', space=vmem, size = 0x40000, scoped, tag = 'output window, operand 0']
    #allocation4 [shape = 's32[2]{0}', space=sflag, size = 0x8, scoped, tag = 'scoped memory for tpu_custom_call.1']
    %10 = vsyncpa [#allocation4], 0
    %s11 = scalar_lea.sflag [#allocation4], 1
    %12 = vsyncpa %s11, 0
    loop: start=0, step=1, limit=4
    $region2: #{tpu_custom_call.1} parent=1 // loop_pre_header
      _
    $region3: #{tpu_custom_call.1} parent=1 // loop_header
      %s14 = sphi 0, %s18
      %p15 = scmp.ge.s32.totalorder %s14, 4
      %s24 = sphi 0, %s26
      %s27 = sphi 0, %s24
      %s28 = sphi 0, %s27
      %s44 = sphi 0, %s28
      %s48 = sphi 0, %s48
      %s50 = sphi 0, %s48
      %s51 = sphi 0, %s50
      %s65 = sphi 0, %s51
      %s69 = sphi 0, %s69
      %s71 = sphi 0, %s69
      %s72 = sphi 0, %s71
      %s86 = sphi 0, %s72
      %s90 = sphi 0, %s90
      %s92 = sphi 0, %s90
      %s93 = sphi 0, %s92
      %s107 = sphi 0, %s93
      %s111 = sphi 0, %s111
      %s113 = sphi 0, %s111
      %s114 = sphi 0, %s113
      %s128 = sphi 0, %s114
      %s134 = sphi 0, %s136
      %s137 = sphi 0, %s134
      %s138 = sphi 0, %s137
      %s154 = sphi 0, %s138
    $region4: #{tpu_custom_call.1} parent=1 // loop_header_branch
      %17 = sbr.rel (%p15) target = $region8
    $region5: #{tpu_custom_call.1} parent=1 // loop_body
      %s19 = ssub.s32 %s14, 1
      %s20 = ssub.s32 %s14, 2
      %s21 = sadd.s32 %s14, 1
      %s22 = ssub.s32 %s14, %s21
      %p23 = scmp.eq.s32.totalorder %s22, 0
      %s25 = sadd.s32 %s24, 1
      %s26 = scalar_select %p23, %s24, %s25
      %p29 = pneg %p23
      %p30 = scmp.eq.s32.totalorder %s14, 1
      %p31 = por %p29, %p30
      %p32 = scmp.ne.s32.totalorder %s24, %s27
      %p33 = scmp.eq.s32.totalorder %s14, 0
      %p34 = por %p32, %p33
      %p35 = scmp.ne.s32.totalorder %s24, %s27
      %p36 = scmp.eq.s32.totalorder %s19, 1
      %p37 = por %p35, %p36
      %p38 = scmp.ne.s32.totalorder %s27, %s28
      %p39 = scmp.eq.s32.totalorder %s19, 0
      %p40 = por %p38, %p39
      %p41 = scmp.ne.s32.totalorder %s27, %s28
      %p42 = scmp.eq.s32.totalorder %s20, 1
      %p43 = por %p41, %p42
      %p45 = scmp.ne.s32.totalorder %s28, %s44
      %p46 = scmp.eq.s32.totalorder %s20, 0
      %p47 = por %p45, %p46
      %s49 = sadd.s32 %s48, 1
      %p52 = scmp.eq.s32.totalorder %s14, 1
      %p53 = scmp.ne.s32.totalorder %s48, %s50
      %p54 = scmp.eq.s32.totalorder %s14, 0
      %p55 = por %p53, %p54
      %p56 = scmp.ne.s32.totalorder %s48, %s50
      %p57 = scmp.eq.s32.totalorder %s19, 1
      %p58 = por %p56, %p57
      %p59 = scmp.ne.s32.totalorder %s50, %s51
      %p60 = scmp.eq.s32.totalorder %s19, 0
      %p61 = por %p59, %p60
      %p62 = scmp.ne.s32.totalorder %s50, %s51
      %p63 = scmp.eq.s32.totalorder %s20, 1
      %p64 = por %p62, %p63
      %p66 = scmp.ne.s32.totalorder %s51, %s65
      %p67 = scmp.eq.s32.totalorder %s20, 0
      %p68 = por %p66, %p67
      %s70 = sadd.s32 %s69, 1
      %p73 = scmp.eq.s32.totalorder %s14, 1
      %p74 = scmp.ne.s32.totalorder %s69, %s71
      %p75 = scmp.eq.s32.totalorder %s14, 0
      %p76 = por %p74, %p75
      %p77 = scmp.ne.s32.totalorder %s69, %s71
      %p78 = scmp.eq.s32.totalorder %s19, 1
      %p79 = por %p77, %p78
      %p80 = scmp.ne.s32.totalorder %s71, %s72
      %p81 = scmp.eq.s32.totalorder %s19, 0
      %p82 = por %p80, %p81
      %p83 = scmp.ne.s32.totalorder %s71, %s72
      %p84 = scmp.eq.s32.totalorder %s20, 1
      %p85 = por %p83, %p84
      %p87 = scmp.ne.s32.totalorder %s72, %s86
      %p88 = scmp.eq.s32.totalorder %s20, 0
      %p89 = por %p87, %p88
      %s91 = sadd.s32 %s90, 1
      %p94 = scmp.eq.s32.totalorder %s14, 1
      %p95 = scmp.ne.s32.totalorder %s90, %s92
      %p96 = scmp.eq.s32.totalorder %s14, 0
      %p97 = por %p95, %p96
      %p98 = scmp.ne.s32.totalorder %s90, %s92
      %p99 = scmp.eq.s32.totalorder %s19, 1
      %p100 = por %p98, %p99
      %p101 = scmp.ne.s32.totalorder %s92, %s93
      %p102 = scmp.eq.s32.totalorder %s19, 0
      %p103 = por %p101, %p102
      %p104 = scmp.ne.s32.totalorder %s92, %s93
      %p105 = scmp.eq.s32.totalorder %s20, 1
      %p106 = por %p104, %p105
      %p108 = scmp.ne.s32.totalorder %s93, %s107
      %p109 = scmp.eq.s32.totalorder %s20, 0
      %p110 = por %p108, %p109
      %s112 = sadd.s32 %s111, 1
      %p115 = scmp.eq.s32.totalorder %s14, 1
      %p116 = scmp.ne.s32.totalorder %s111, %s113
      %p117 = scmp.eq.s32.totalorder %s14, 0
      %p118 = por %p116, %p117
      %p119 = scmp.ne.s32.totalorder %s111, %s113
      %p120 = scmp.eq.s32.totalorder %s19, 1
      %p121 = por %p119, %p120
      %p122 = scmp.ne.s32.totalorder %s113, %s114
      %p123 = scmp.eq.s32.totalorder %s19, 0
      %p124 = por %p122, %p123
      %p125 = scmp.ne.s32.totalorder %s113, %s114
      %p126 = scmp.eq.s32.totalorder %s20, 1
      %p127 = por %p125, %p126
      %p129 = scmp.ne.s32.totalorder %s114, %s128
      %p130 = scmp.eq.s32.totalorder %s20, 0
      %p131 = por %p129, %p130
      %s132 = ssub.s32 %s14, %s21
      %p133 = scmp.eq.s32.totalorder %s132, 0
      %s135 = sadd.s32 %s134, 1
      %s136 = scalar_select %p133, %s134, %s135
      %p139 = pneg %p133
      %p140 = scmp.eq.s32.totalorder %s14, 1
      %p141 = por %p139, %p140
      %p142 = scmp.ne.s32.totalorder %s134, %s137
      %p143 = scmp.eq.s32.totalorder %s14, 0
      %p144 = por %p142, %p143
      %p145 = scmp.ne.s32.totalorder %s134, %s137
      %p146 = scmp.eq.s32.totalorder %s19, 1
      %p147 = por %p145, %p146
      %p148 = scmp.ne.s32.totalorder %s137, %s138
      %p149 = scmp.eq.s32.totalorder %s19, 0
      %p150 = por %p148, %p149
      %p151 = scmp.ne.s32.totalorder %s137, %s138
      %p152 = scmp.eq.s32.totalorder %s20, 1
      %p153 = por %p151, %p152
      %p155 = scmp.ne.s32.totalorder %s138, %s154
      %p156 = scmp.eq.s32.totalorder %s20, 0
      %p157 = por %p155, %p156
      %p158 = scmp.le.s32.totalorder 1, %s14
      %p159 = scmp.lt.s32.totalorder %s14, 3
      %p160 = pnand %p158, %p159
      %p161 = pneg %p160
      // Predicated region
      $region9: #{tpu_custom_call.1} parent=5 // pred_check
        _
      $region10: #{tpu_custom_call.1} parent=5 // pred_check_branch
        %163 = sbr.rel (%p160) target = $region12
      $region11: #{tpu_custom_call.1} parent=5 // pred_region
        %s164 = ssub.s32 %s14, 1
        // Predicated region
        $region13: #{tpu_custom_call.1} parent=11 // pred_check
          %p165 = pneg %p61
        $region14: #{tpu_custom_call.1} parent=11 // pred_check_branch
          %167 = sbr.rel (%p165) target = $region16
        $region15: #{tpu_custom_call.1} parent=11 // pred_region
          _
        $region16: #{tpu_custom_call.1} parent=11 // pred_fallthru
          _
        // Predicated region
        $region17: #{tpu_custom_call.1} parent=11 // pred_check
          %p168 = pneg %p82
        $region18: #{tpu_custom_call.1} parent=11 // pred_check_branch
          %170 = sbr.rel (%p168) target = $region20
        $region19: #{tpu_custom_call.1} parent=11 // pred_region
          _
        $region20: #{tpu_custom_call.1} parent=11 // pred_fallthru
          _
        // Predicated region
        $region21: #{tpu_custom_call.1} parent=11 // pred_check
          %p171 = pneg %p103
        $region22: #{tpu_custom_call.1} parent=11 // pred_check_branch
          %173 = sbr.rel (%p171) target = $region24
        $region23: #{tpu_custom_call.1} parent=11 // pred_region
          _
        $region24: #{tpu_custom_call.1} parent=11 // pred_fallthru
          _
        // Predicated region
        $region25: #{tpu_custom_call.1} parent=11 // pred_check
          %p174 = pneg %p124
        $region26: #{tpu_custom_call.1} parent=11 // pred_check_branch
          %176 = sbr.rel (%p174) target = $region28
        $region27: #{tpu_custom_call.1} parent=11 // pred_region
          _
        $region28: #{tpu_custom_call.1} parent=11 // pred_fallthru
          _
      $region12: #{tpu_custom_call.1} parent=5 // pred_fallthru
        _
      %p177 = scmp.lt.s32.totalorder %s14, 2
      // Predicated region
      $region29: #{tpu_custom_call.1} parent=5 // pred_check
        %p178 = pneg %p177
      $region30: #{tpu_custom_call.1} parent=5 // pred_check_branch
        %180 = sbr.rel (%p178) target = $region32
      $region31: #{tpu_custom_call.1} parent=5 // pred_region
        // Predicated region
        $region33: #{tpu_custom_call.1} parent=31 // pred_check
          %p181 = pneg %p34
        $region34: #{tpu_custom_call.1} parent=31 // pred_check_branch
          %183 = sbr.rel (%p181) target = $region36
        $region35: #{tpu_custom_call.1} parent=31 // pred_region
          %p184 = scmp.lt.s32.totalorder %s14, 1
          %s185 = scalar_select %p184, %s14, 1
          %s186 = smul.addr %s185, 54
          %s187 = smul.addr %s186, 8
          %s188 = scalar_lea.vmem %s0, %s187
        $region36: #{tpu_custom_call.1} parent=31 // pred_fallthru
          _
      $region32: #{tpu_custom_call.1} parent=5 // pred_fallthru
        _
      %p189 = scmp.le.s32.totalorder 1, %s14
      %p190 = scmp.lt.s32.totalorder %s14, 3
      %p191 = pnand %p189, %p190
      %p192 = pneg %p191
      // Predicated region
      $region37: #{tpu_custom_call.1} parent=5 // pred_check
        _
      $region38: #{tpu_custom_call.1} parent=5 // pred_check_branch
        %194 = sbr.rel (%p191) target = $region40
      $region39: #{tpu_custom_call.1} parent=5 // pred_region
        %s195 = ssub.s32 %s14, 1
        %p196 = scmp.lt.s32.totalorder %s19, 1
        %s197 = scalar_select %p196, %s19, 1
        %s198 = smul.addr %s197, 54
        %s199 = smul.addr %s198, 8
        %s200 = scalar_lea.vmem %s0, %s199
        %p201 = pneg %p40
        %p202 = pneg %p37
        %p203 = pneg %p61
        %p204 = pneg %p58
        %p205 = pneg %p82
        %p206 = pneg %p79
        %p207 = pneg %p103
        %p208 = pneg %p100
        %p209 = pneg %p124
        %p210 = pneg %p121
        %p211 = pneg %p150
        %p212 = pneg %p147
        %s213 = sand.u32 %s137, 1
        %s214 = scalar_lea.sflag [#allocation4], %s213
        %s215 = sand.u32 %s137, 1
        %s216 = smul.addr %s215, 256
        %s217 = scalar_lea.vmem [#allocation3], %s216
        %p218 = scmp.lt.s32.totalorder %s19, 1
        %s219 = scalar_select %p218, %s19, 1
        %s220 = smul.addr %s219, 54
        %s221 = smul.addr %s220, 8
        %s222 = scalar_lea.vmem %s0, %s221
        %v224 = vld [vmem:[%s222] sm:$0xff]
        %v225 = vld [vmem:[%s222 + $0x8] sm:$0xff]
        %v226 = vld [vmem:[%s222 + $0x10] sm:$0x3]
        %v227 = vld [vmem:[%s222 + $0x18] sm:$0xff]
        %v228 = vld [vmem:[%s222 + $0x20] sm:$0xff]
        %v229 = vld [vmem:[%s222 + $0x28] sm:$0x3]
        %v230 = vld [vmem:[%s222 + $0x30] sm:$0xff]
        %v231 = vld [vmem:[%s222 + $0x38] sm:$0xff]
        %v232 = vld [vmem:[%s222 + $0x40] sm:$0x3]
        %v233 = vld [vmem:[%s222 + $0x48] sm:$0xff]
        %v234 = vld [vmem:[%s222 + $0x50] sm:$0xff]
        %v235 = vld [vmem:[%s222 + $0x58] sm:$0x3]
        %v236 = vld [vmem:[%s222 + $0x60] sm:$0xff]
        %v237 = vld [vmem:[%s222 + $0x68] sm:$0xff]
        %v238 = vld [vmem:[%s222 + $0x70] sm:$0x3]
        %v239 = vld [vmem:[%s222 + $0x78] sm:$0xff]
        %v240 = vld [vmem:[%s222 + $0x80] sm:$0xff]
        %v241 = vld [vmem:[%s222 + $0x88] sm:$0x3]
        %v242 = vld [vmem:[%s222 + $0x90] sm:$0xff]
        %v243 = vld [vmem:[%s222 + $0x98] sm:$0xff]
        %v244 = vld [vmem:[%s222 + $0xa0] sm:$0x3]
        %v245 = vld [vmem:[%s222 + $0xa8] sm:$0xff]
        %v246 = vld [vmem:[%s222 + $0xb0] sm:$0xff]
        %v247 = vld [vmem:[%s222 + $0xb8] sm:$0x3]
        %v248 = vld [vmem:[%s222 + $0xc0] sm:$0xff]
        %v249 = vld [vmem:[%s222 + $0xc8] sm:$0xff]
        %v250 = vld [vmem:[%s222 + $0xd0] sm:$0x3]
        %v251 = vld [vmem:[%s222 + $0xd8] sm:$0xff]
        %v252 = vld [vmem:[%s222 + $0xe0] sm:$0xff]
        %v253 = vld [vmem:[%s222 + $0xe8] sm:$0x3]
        %v254 = vld [vmem:[%s222 + $0xf0] sm:$0xff]
        %v255 = vld [vmem:[%s222 + $0xf8] sm:$0xff]
        %v256 = vld [vmem:[%s222 + $0x100] sm:$0x3]
        %v257 = vld [vmem:[%s222 + $0x108] sm:$0xff]
        %v258 = vld [vmem:[%s222 + $0x110] sm:$0xff]
        %v259 = vld [vmem:[%s222 + $0x118] sm:$0x3]
        %v260 = vld [vmem:[%s222 + $0x120] sm:$0xff]
        %v261 = vld [vmem:[%s222 + $0x128] sm:$0xff]
        %v262 = vld [vmem:[%s222 + $0x130] sm:$0x3]
        %v263 = vld [vmem:[%s222 + $0x138] sm:$0xff]
        %v264 = vld [vmem:[%s222 + $0x140] sm:$0xff]
        %v265 = vld [vmem:[%s222 + $0x148] sm:$0x3]
        %v266 = vld [vmem:[%s222 + $0x150] sm:$0xff]
        %v267 = vld [vmem:[%s222 + $0x158] sm:$0xff]
        %v268 = vld [vmem:[%s222 + $0x160] sm:$0x3]
        %v269 = vld [vmem:[%s222 + $0x168] sm:$0xff]
        %v270 = vld [vmem:[%s222 + $0x170] sm:$0xff]
        %v271 = vld [vmem:[%s222 + $0x178] sm:$0x3]
        %v272 = vld [vmem:[%s222 + $0x180] sm:$0xff]
        %v273 = vld [vmem:[%s222 + $0x188] sm:$0xff]
        %v274 = vld [vmem:[%s222 + $0x190] sm:$0x3]
        %v275 = vld [vmem:[%s222 + $0x198] sm:$0xff]
        %v276 = vld [vmem:[%s222 + $0x1a0] sm:$0xff]
        %v277 = vld [vmem:[%s222 + $0x1a8] sm:$0x3]
        %v278 = vld [vmem:[%s3] sm:$0x7]
        %v279 = vpack.c.bf16 %v225, %v224
        %v280 = vpack.c.bf16 %v228, %v227
        %v281 = vpack.c.bf16 %v231, %v230
        %v282 = vpack.c.bf16 %v234, %v233
        %v283 = vpack.c.bf16 %v237, %v236
        %v284 = vpack.c.bf16 %v240, %v239
        %v285 = vpack.c.bf16 %v243, %v242
        %v286 = vpack.c.bf16 %v246, %v245
        %v287 = vpack.c.bf16 %v249, %v248
        %v288 = vpack.c.bf16 %v252, %v251
        %v289 = vpack.c.bf16 %v255, %v254
        %v290 = vpack.c.bf16 %v258, %v257
        %v291 = vpack.c.bf16 %v261, %v260
        %v292 = vpack.c.bf16 %v264, %v263
        %v293 = vpack.c.bf16 %v267, %v266
        %v294 = vpack.c.bf16 %v270, %v269
        %v295 = vpack.c.bf16 %v273, %v272
        %v296 = vpack.c.bf16 %v276, %v275
        %v297 = vpack.c.bf16 %v226, %v226
        %v298 = vpack.c.bf16 %v229, %v229
        %v299 = vpack.c.bf16 %v232, %v232
        %v300 = vpack.c.bf16 %v235, %v235
        %v301 = vpack.c.bf16 %v238, %v238
        %v302 = vpack.c.bf16 %v241, %v241
        %v303 = vpack.c.bf16 %v244, %v244
        %v304 = vpack.c.bf16 %v247, %v247
        %v305 = vpack.c.bf16 %v250, %v250
        %v306 = vpack.c.bf16 %v253, %v253
        %v307 = vpack.c.bf16 %v256, %v256
        %v308 = vpack.c.bf16 %v259, %v259
        %v309 = vpack.c.bf16 %v262, %v262
        %v310 = vpack.c.bf16 %v265, %v265
        %v311 = vpack.c.bf16 %v268, %v268
        %v312 = vpack.c.bf16 %v271, %v271
        %v313 = vpack.c.bf16 %v274, %v274
        %v314 = vpack.c.bf16 %v277, %v277
        %vm315 = vsmask.f32 7424
        %v317 = vshrl.u32 %v279, 16
        %v319 = vshll.u32 %v279, 16
        %v321 = vrot.slane %v319, 1
        %v322 = vor.u32 %v317, %v321
        %v324 = vshll.u32 %v297, 16
        %v326 = vrot.slane %v324, 1
        %v327 = vsel %vm315, %v322, %v326
        %v329 = vshrl.u32 %v280, 16
        %v331 = vshll.u32 %v280, 16
        %v333 = vrot.slane %v331, 1
        %v334 = vor.u32 %v329, %v333
        %v336 = vshll.u32 %v298, 16
        %v338 = vrot.slane %v336, 1
        %v339 = vsel %vm315, %v334, %v338
        %v341 = vshrl.u32 %v281, 16
        %v343 = vshll.u32 %v281, 16
        %v345 = vrot.slane %v343, 1
        %v346 = vor.u32 %v341, %v345
        %v348 = vshll.u32 %v299, 16
        %v350 = vrot.slane %v348, 1
        %v351 = vsel %vm315, %v346, %v350
        %v353 = vshrl.u32 %v282, 16
        %v355 = vshll.u32 %v282, 16
        %v357 = vrot.slane %v355, 1
        %v358 = vor.u32 %v353, %v357
        %v360 = vshll.u32 %v300, 16
        %v362 = vrot.slane %v360, 1
        %v363 = vsel %vm315, %v358, %v362
        %v365 = vshrl.u32 %v283, 16
        %v367 = vshll.u32 %v283, 16
        %v369 = vrot.slane %v367, 1
        %v370 = vor.u32 %v365, %v369
        %v372 = vshll.u32 %v301, 16
        %v374 = vrot.slane %v372, 1
        %v375 = vsel %vm315, %v370, %v374
        %v377 = vshrl.u32 %v284, 16
        %v379 = vshll.u32 %v284, 16
        %v381 = vrot.slane %v379, 1
        %v382 = vor.u32 %v377, %v381
        %v384 = vshll.u32 %v302, 16
        %v386 = vrot.slane %v384, 1
        %v387 = vsel %vm315, %v382, %v386
        %v389 = vshrl.u32 %v285, 16
        %v391 = vshll.u32 %v285, 16
        %v393 = vrot.slane %v391, 1
        %v394 = vor.u32 %v389, %v393
        %v396 = vshll.u32 %v303, 16
        %v398 = vrot.slane %v396, 1
        %v399 = vsel %vm315, %v394, %v398
        %v401 = vshrl.u32 %v286, 16
        %v403 = vshll.u32 %v286, 16
        %v405 = vrot.slane %v403, 1
        %v406 = vor.u32 %v401, %v405
        %v408 = vshll.u32 %v304, 16
        %v410 = vrot.slane %v408, 1
        %v411 = vsel %vm315, %v406, %v410
        %v413 = vshrl.u32 %v287, 16
        %v415 = vshll.u32 %v287, 16
        %v417 = vrot.slane %v415, 1
        %v418 = vor.u32 %v413, %v417
        %v420 = vshll.u32 %v305, 16
        %v422 = vrot.slane %v420, 1
        %v423 = vsel %vm315, %v418, %v422
        %v425 = vshrl.u32 %v288, 16
        %v427 = vshll.u32 %v288, 16
        %v429 = vrot.slane %v427, 1
        %v430 = vor.u32 %v425, %v429
        %v432 = vshll.u32 %v306, 16
        %v434 = vrot.slane %v432, 1
        %v435 = vsel %vm315, %v430, %v434
        %v437 = vshrl.u32 %v289, 16
        %v439 = vshll.u32 %v289, 16
        %v441 = vrot.slane %v439, 1
        %v442 = vor.u32 %v437, %v441
        %v444 = vshll.u32 %v307, 16
        %v446 = vrot.slane %v444, 1
        %v447 = vsel %vm315, %v442, %v446
        %v449 = vshrl.u32 %v290, 16
        %v451 = vshll.u32 %v290, 16
        %v453 = vrot.slane %v451, 1
        %v454 = vor.u32 %v449, %v453
        %v456 = vshll.u32 %v308, 16
        %v458 = vrot.slane %v456, 1
        %v459 = vsel %vm315, %v454, %v458
        %v461 = vshrl.u32 %v291, 16
        %v463 = vshll.u32 %v291, 16
        %v465 = vrot.slane %v463, 1
        %v466 = vor.u32 %v461, %v465
        %v468 = vshll.u32 %v309, 16
        %v470 = vrot.slane %v468, 1
        %v471 = vsel %vm315, %v466, %v470
        %v473 = vshrl.u32 %v292, 16
        %v475 = vshll.u32 %v292, 16
        %v477 = vrot.slane %v475, 1
        %v478 = vor.u32 %v473, %v477
        %v480 = vshll.u32 %v310, 16
        %v482 = vrot.slane %v480, 1
        %v483 = vsel %vm315, %v478, %v482
        %v485 = vshrl.u32 %v293, 16
        %v487 = vshll.u32 %v293, 16
        %v489 = vrot.slane %v487, 1
        %v490 = vor.u32 %v485, %v489
        %v492 = vshll.u32 %v311, 16
        %v494 = vrot.slane %v492, 1
        %v495 = vsel %vm315, %v490, %v494
        %v497 = vshrl.u32 %v294, 16
        %v499 = vshll.u32 %v294, 16
        %v501 = vrot.slane %v499, 1
        %v502 = vor.u32 %v497, %v501
        %v504 = vshll.u32 %v312, 16
        %v506 = vrot.slane %v504, 1
        %v507 = vsel %vm315, %v502, %v506
        %vm556 = vcmask 1046528
        %v557 = vrot.slane %v279, 1
        %v558 = vrot.slane %v297, 1
        %v559 = vsel %vm556, %v557, %v558
        %v560 = vrot.slane %v280, 1
        %v561 = vrot.slane %v298, 1
        %v562 = vsel %vm556, %v560, %v561
        %v563 = vrot.slane %v281, 1
        %v564 = vrot.slane %v299, 1
        %v565 = vsel %vm556, %v563, %v564
        %v566 = vrot.slane %v282, 1
        %v567 = vrot.slane %v300, 1
        %v568 = vsel %vm556, %v566, %v567
        %v569 = vrot.slane %v283, 1
        %v570 = vrot.slane %v301, 1
        %v571 = vsel %vm556, %v569, %v570
        %v572 = vrot.slane %v284, 1
        %v573 = vrot.slane %v302, 1
        %v574 = vsel %vm556, %v572, %v573
        %v575 = vrot.slane %v285, 1
        %v576 = vrot.slane %v303, 1
        %v577 = vsel %vm556, %v575, %v576
        %v578 = vrot.slane %v286, 1
        %v579 = vrot.slane %v304, 1
        %v580 = vsel %vm556, %v578, %v579
        %v581 = vrot.slane %v287, 1
        %v582 = vrot.slane %v305, 1
        %v583 = vsel %vm556, %v581, %v582
        %v584 = vrot.slane %v288, 1
        %v585 = vrot.slane %v306, 1
        %v586 = vsel %vm556, %v584, %v585
        %v587 = vrot.slane %v289, 1
        %v588 = vrot.slane %v307, 1
        %v589 = vsel %vm556, %v587, %v588
        %v590 = vrot.slane %v290, 1
        %v591 = vrot.slane %v308, 1
        %v592 = vsel %vm556, %v590, %v591
        %v593 = vrot.slane %v291, 1
        %v594 = vrot.slane %v309, 1
        %v595 = vsel %vm556, %v593, %v594
        %v596 = vrot.slane %v292, 1
        %v597 = vrot.slane %v310, 1
        %v598 = vsel %vm556, %v596, %v597
        %v599 = vrot.slane %v293, 1
        %v600 = vrot.slane %v311, 1
        %v601 = vsel %vm556, %v599, %v600
        %v602 = vrot.slane %v294, 1
        %v603 = vrot.slane %v312, 1
        %v604 = vsel %vm556, %v602, %v603
        %v622 = vshrl.u32 %v295, 16
        %v624 = vshll.u32 %v295, 16
        %v626 = vrot.slane %v624, 1
        %v627 = vor.u32 %v622, %v626
        %v629 = vshll.u32 %v313, 16
        %v631 = vrot.slane %v629, 1
        %v632 = vsel %vm315, %v627, %v631
        %v636 = vrot.slane %v295, 1
        %v637 = vrot.slane %v313, 1
        %v638 = vsel %vm556, %v636, %v637
        %v641 = vshrl.u32 %v296, 16
        %v643 = vshll.u32 %v296, 16
        %v645 = vrot.slane %v643, 1
        %v646 = vor.u32 %v641, %v645
        %v648 = vshll.u32 %v314, 16
        %v650 = vrot.slane %v648, 1
        %v651 = vsel %vm315, %v646, %v650
        %v655 = vrot.slane %v296, 1
        %v656 = vrot.slane %v314, 1
        %v657 = vsel %vm556, %v655, %v656
        %v659 = vld [vmem:[%s1] sm:$0xf]
        %v660 = vld [vmem:[%s1 + $0x4] sm:$0xf]
        %v661 = vld [vmem:[%s1 + $0x8] sm:$0xf]
        %v662 = vld [vmem:[%s1 + $0xc] sm:$0xf]
        %v663 = vld [vmem:[%s1 + $0x10] sm:$0xf]
        %v664 = vld [vmem:[%s1 + $0x14] sm:$0xf]
        %v665 = vld [vmem:[%s1 + $0x18] sm:$0xf]
        %v666 = vld [vmem:[%s1 + $0x1c] sm:$0xf]
        %v667 = vld [vmem:[%s1 + $0x20] sm:$0xf]
        %v668 = vld [vmem:[%s1 + $0x24] sm:$0xf]
        %v669 = vld [vmem:[%s1 + $0x28] sm:$0xf]
        %v670 = vld [vmem:[%s1 + $0x2c] sm:$0xf]
        %v671 = vld [vmem:[%s1 + $0x30] sm:$0xf]
        %v672 = vld [vmem:[%s1 + $0x34] sm:$0xf]
        %v673 = vld [vmem:[%s1 + $0x38] sm:$0xf]
        %v674 = vld [vmem:[%s1 + $0x3c] sm:$0xf]
        %v675 = vld [vmem:[%s1 + $0x40] sm:$0xf]
        %v676 = vld [vmem:[%s1 + $0x44] sm:$0xf]
        %v677 = vld [vmem:[%s1 + $0x48] sm:$0xf]
        %v678 = vld [vmem:[%s1 + $0x4c] sm:$0xf]
        %v679 = vld [vmem:[%s1 + $0x50] sm:$0xf]
        %v680 = vld [vmem:[%s1 + $0x54] sm:$0xf]
        %v681 = vld [vmem:[%s1 + $0x58] sm:$0xf]
        %v682 = vld [vmem:[%s1 + $0x5c] sm:$0xf]
        %v683 = vld [vmem:[%s1 + $0x60] sm:$0xf]
        %v684 = vld [vmem:[%s1 + $0x64] sm:$0xf]
        %v685 = vld [vmem:[%s1 + $0x68] sm:$0xf]
        %v686 = vld [vmem:[%s1 + $0x6c] sm:$0xf]
        %v687 = vld [vmem:[%s1 + $0x70] sm:$0xf]
        %v688 = vld [vmem:[%s1 + $0x74] sm:$0xf]
        %v689 = vld [vmem:[%s1 + $0x78] sm:$0xf]
        %v690 = vld [vmem:[%s1 + $0x7c] sm:$0xf]
        %v691 = vld [vmem:[%s1 + $0x80] sm:$0xf]
        %v692 = vld [vmem:[%s1 + $0x84] sm:$0xf]
        %v693 = vld [vmem:[%s1 + $0x88] sm:$0xf]
        %v694 = vld [vmem:[%s1 + $0x8c] sm:$0xf]
        %v695 = vld [vmem:[%s1 + $0x90] sm:$0xf]
        %v696 = vld [vmem:[%s1 + $0x94] sm:$0xf]
        %v697 = vld [vmem:[%s1 + $0x98] sm:$0xf]
        %v698 = vld [vmem:[%s1 + $0x9c] sm:$0xf]
        %v699 = vld [vmem:[%s1 + $0xa0] sm:$0xf]
        %v700 = vld [vmem:[%s1 + $0xa4] sm:$0xf]
        %v701 = vld [vmem:[%s1 + $0xa8] sm:$0xf]
        %v702 = vld [vmem:[%s1 + $0xac] sm:$0xf]
        %v703 = vld [vmem:[%s1 + $0xb0] sm:$0xf]
        %v704 = vld [vmem:[%s1 + $0xb4] sm:$0xf]
        %v705 = vld [vmem:[%s1 + $0xb8] sm:$0xf]
        %v706 = vld [vmem:[%s1 + $0xbc] sm:$0xf]
        %v707 = vld [vmem:[%s1 + $0xc0] sm:$0xf]
        %v708 = vld [vmem:[%s1 + $0xc4] sm:$0xf]
        %v709 = vld [vmem:[%s1 + $0xc8] sm:$0xf]
        %v710 = vld [vmem:[%s1 + $0xcc] sm:$0xf]
        %v711 = vld [vmem:[%s1 + $0xd0] sm:$0xf]
        %v712 = vld [vmem:[%s1 + $0xd4] sm:$0xf]
        %v713 = vld [vmem:[%s1 + $0xd8] sm:$0xf]
        %v714 = vld [vmem:[%s1 + $0xdc] sm:$0xf]
        %v715 = vld [vmem:[%s1 + $0xe0] sm:$0xf]
        %v716 = vld [vmem:[%s1 + $0xe4] sm:$0xf]
        %v717 = vld [vmem:[%s1 + $0xe8] sm:$0xf]
        %v718 = vld [vmem:[%s1 + $0xec] sm:$0xf]
        %v719 = vld [vmem:[%s1 + $0xf0] sm:$0xf]
        %v720 = vld [vmem:[%s1 + $0xf4] sm:$0xf]
        %v721 = vld [vmem:[%s1 + $0xf8] sm:$0xf]
        %v722 = vld [vmem:[%s1 + $0xfc] sm:$0xf]
        %v723 = vld [vmem:[%s1 + $0x100] sm:$0xf]
        %v724 = vld [vmem:[%s1 + $0x104] sm:$0xf]
        %v725 = vld [vmem:[%s1 + $0x108] sm:$0xf]
        %v726 = vld [vmem:[%s1 + $0x10c] sm:$0xf]
        %v727 = vld [vmem:[%s1 + $0x110] sm:$0xf]
        %v728 = vld [vmem:[%s1 + $0x114] sm:$0xf]
        %v729 = vld [vmem:[%s1 + $0x118] sm:$0xf]
        %v730 = vld [vmem:[%s1 + $0x11c] sm:$0xf]
        %v731 = vld [vmem:[%s1 + $0x120] sm:$0xf]
        %v732 = vld [vmem:[%s1 + $0x124] sm:$0xf]
        %v733 = vld [vmem:[%s1 + $0x128] sm:$0xf]
        %v734 = vld [vmem:[%s1 + $0x12c] sm:$0xf]
        %v735 = vld [vmem:[%s1 + $0x130] sm:$0xf]
        %v736 = vld [vmem:[%s1 + $0x134] sm:$0xf]
        %v737 = vld [vmem:[%s1 + $0x138] sm:$0xf]
        %v738 = vld [vmem:[%s1 + $0x13c] sm:$0xf]
        %v739 = vld [vmem:[%s1 + $0x140] sm:$0xf]
        %v740 = vld [vmem:[%s1 + $0x144] sm:$0xf]
        %v741 = vld [vmem:[%s1 + $0x148] sm:$0xf]
        %v742 = vld [vmem:[%s1 + $0x14c] sm:$0xf]
        %v743 = vld [vmem:[%s1 + $0x150] sm:$0xf]
        %v744 = vld [vmem:[%s1 + $0x154] sm:$0xf]
        %v745 = vld [vmem:[%s1 + $0x158] sm:$0xf]
        %v746 = vld [vmem:[%s1 + $0x15c] sm:$0xf]
        %v747 = vld [vmem:[%s1 + $0x160] sm:$0xf]
        %v748 = vld [vmem:[%s1 + $0x164] sm:$0xf]
        %v749 = vld [vmem:[%s1 + $0x168] sm:$0xf]
        %v750 = vld [vmem:[%s1 + $0x16c] sm:$0xf]
        %v751 = vld [vmem:[%s1 + $0x170] sm:$0xf]
        %v752 = vld [vmem:[%s1 + $0x174] sm:$0xf]
        %v753 = vld [vmem:[%s1 + $0x178] sm:$0xf]
        %v754 = vld [vmem:[%s1 + $0x17c] sm:$0xf]
        %v755 = vld [vmem:[%s1 + $0x180] sm:$0xf]
        %v756 = vld [vmem:[%s1 + $0x184] sm:$0xf]
        %v757 = vld [vmem:[%s1 + $0x188] sm:$0xf]
        %v758 = vld [vmem:[%s1 + $0x18c] sm:$0xf]
        %v759 = vld [vmem:[%s1 + $0x190] sm:$0xf]
        %v760 = vld [vmem:[%s1 + $0x194] sm:$0xf]
        %v761 = vld [vmem:[%s1 + $0x198] sm:$0xf]
        %v762 = vld [vmem:[%s1 + $0x19c] sm:$0xf]
        %v763 = vld [vmem:[%s1 + $0x1a0] sm:$0xf]
        %v764 = vld [vmem:[%s1 + $0x1a4] sm:$0xf]
        %v765 = vld [vmem:[%s1 + $0x1a8] sm:$0xf]
        %v766 = vld [vmem:[%s1 + $0x1ac] sm:$0xf]
        %v767 = vld [vmem:[%s1 + $0x1b0] sm:$0xf]
        %v768 = vld [vmem:[%s1 + $0x1b4] sm:$0xf]
        %v769 = vld [vmem:[%s1 + $0x1b8] sm:$0xf]
        %v770 = vld [vmem:[%s1 + $0x1bc] sm:$0xf]
        %v771 = vld [vmem:[%s1 + $0x1c0] sm:$0xf]
        %v772 = vld [vmem:[%s1 + $0x1c4] sm:$0xf]
        %v773 = vld [vmem:[%s1 + $0x1c8] sm:$0xf]
        %v774 = vld [vmem:[%s1 + $0x1cc] sm:$0xf]
        %v775 = vld [vmem:[%s1 + $0x1d0] sm:$0xf]
        %v776 = vld [vmem:[%s1 + $0x1d4] sm:$0xf]
        %v777 = vld [vmem:[%s1 + $0x1d8] sm:$0xf]
        %v778 = vld [vmem:[%s1 + $0x1dc] sm:$0xf]
        %v779 = vld [vmem:[%s1 + $0x1e0] sm:$0xf]
        %v780 = vld [vmem:[%s1 + $0x1e4] sm:$0xf]
        %v781 = vld [vmem:[%s1 + $0x1e8] sm:$0xf]
        %v782 = vld [vmem:[%s1 + $0x1ec] sm:$0xf]
        %v783 = vld [vmem:[%s1 + $0x1f0] sm:$0xf]
        %v784 = vld [vmem:[%s1 + $0x1f4] sm:$0xf]
        %v785 = vld [vmem:[%s1 + $0x1f8] sm:$0xf]
        %v786 = vld [vmem:[%s1 + $0x1fc] sm:$0xf]
        %v787 = vld [vmem:[%s1 + $0x200] sm:$0xf]
        %v788 = vld [vmem:[%s1 + $0x204] sm:$0xf]
        %v789 = vld [vmem:[%s1 + $0x208] sm:$0xf]
        %v790 = vld [vmem:[%s1 + $0x20c] sm:$0xf]
        %v791 = vld [vmem:[%s1 + $0x210] sm:$0xf]
        %v792 = vld [vmem:[%s1 + $0x214] sm:$0xf]
        %v793 = vld [vmem:[%s1 + $0x218] sm:$0xf]
        %v794 = vld [vmem:[%s1 + $0x21c] sm:$0xf]
        %v795 = vld [vmem:[%s1 + $0x220] sm:$0xf]
        %v796 = vld [vmem:[%s1 + $0x224] sm:$0xf]
        %v797 = vld [vmem:[%s1 + $0x228] sm:$0xf]
        %v798 = vld [vmem:[%s1 + $0x22c] sm:$0xf]
        %v799 = vld [vmem:[%s1 + $0x230] sm:$0xf]
        %v800 = vld [vmem:[%s1 + $0x234] sm:$0xf]
        %v801 = vld [vmem:[%s1 + $0x238] sm:$0xf]
        %v802 = vld [vmem:[%s1 + $0x23c] sm:$0xf]
        %v803 = vlaneseq
        %v804 = vshrl.u32 %v803, 7
        %v805 = vsub.s32 0, %v804
        %v806 = vrot.slane %v278, %v805
        %v951 = vunpack.c.l.b16 %v659
        %v952 = vunpack.c.l.b16 %v660
        %v953 = vunpack.c.l.b16 %v661
        %v954 = vunpack.c.l.b16 %v662
        %v955 = vunpack.c.l.b16 %v663
        %v956 = vunpack.c.l.b16 %v664
        %v957 = vunpack.c.l.b16 %v665
        %v958 = vunpack.c.l.b16 %v666
        %v959 = vunpack.c.l.b16 %v667
        %v960 = vunpack.c.l.b16 %v668
        %v961 = vunpack.c.l.b16 %v669
        %v962 = vunpack.c.l.b16 %v670
        %v963 = vunpack.c.l.b16 %v671
        %v964 = vunpack.c.l.b16 %v672
        %v965 = vunpack.c.l.b16 %v673
        %v966 = vunpack.c.l.b16 %v674
        %v967 = vunpack.c.l.b16 %v675
        %v968 = vunpack.c.l.b16 %v676
        %v969 = vunpack.c.l.b16 %v677
        %v970 = vunpack.c.l.b16 %v678
        %v971 = vunpack.c.l.b16 %v679
        %v972 = vunpack.c.l.b16 %v680
        %v973 = vunpack.c.l.b16 %v681
        %v974 = vunpack.c.l.b16 %v682
        %v975 = vunpack.c.l.b16 %v683
        %v976 = vunpack.c.l.b16 %v684
        %v977 = vunpack.c.l.b16 %v685
        %v978 = vunpack.c.l.b16 %v686
        %v979 = vunpack.c.l.b16 %v687
        %v980 = vunpack.c.l.b16 %v688
        %v981 = vunpack.c.l.b16 %v689
        %v982 = vunpack.c.l.b16 %v690
        %v983 = vunpack.c.l.b16 %v691
        %v984 = vunpack.c.l.b16 %v692
        %v985 = vunpack.c.l.b16 %v693
        %v986 = vunpack.c.l.b16 %v694
        %v987 = vunpack.c.l.b16 %v695
        %v988 = vunpack.c.l.b16 %v696
        %v989 = vunpack.c.l.b16 %v697
        %v990 = vunpack.c.l.b16 %v698
        %v991 = vunpack.c.l.b16 %v699
        %v992 = vunpack.c.l.b16 %v700
        %v993 = vunpack.c.l.b16 %v701
        %v994 = vunpack.c.l.b16 %v702
        %v995 = vunpack.c.l.b16 %v703
        %v996 = vunpack.c.l.b16 %v704
        %v997 = vunpack.c.l.b16 %v705
        %v998 = vunpack.c.l.b16 %v706
        %v999 = vunpack.c.l.b16 %v707
        %v1000 = vunpack.c.l.b16 %v708
        %v1001 = vunpack.c.l.b16 %v709
        %v1002 = vunpack.c.l.b16 %v710
        %v1003 = vunpack.c.l.b16 %v711
        %v1004 = vunpack.c.l.b16 %v712
        %v1005 = vunpack.c.l.b16 %v713
        %v1006 = vunpack.c.l.b16 %v714
        %v1007 = vunpack.c.l.b16 %v715
        %v1008 = vunpack.c.l.b16 %v716
        %v1009 = vunpack.c.l.b16 %v717
        %v1010 = vunpack.c.l.b16 %v718
        %v1011 = vunpack.c.l.b16 %v719
        %v1012 = vunpack.c.l.b16 %v720
        %v1013 = vunpack.c.l.b16 %v721
        %v1014 = vunpack.c.l.b16 %v722
        %v1015 = vunpack.c.l.b16 %v723
        %v1016 = vunpack.c.l.b16 %v724
        %v1017 = vunpack.c.l.b16 %v725
        %v1018 = vunpack.c.l.b16 %v726
        %v1019 = vunpack.c.l.b16 %v727
        %v1020 = vunpack.c.l.b16 %v728
        %v1021 = vunpack.c.l.b16 %v729
        %v1022 = vunpack.c.l.b16 %v730
        %v1023 = vunpack.c.l.b16 %v731
        %v1024 = vunpack.c.l.b16 %v732
        %v1025 = vunpack.c.l.b16 %v733
        %v1026 = vunpack.c.l.b16 %v734
        %v1027 = vunpack.c.l.b16 %v735
        %v1028 = vunpack.c.l.b16 %v736
        %v1029 = vunpack.c.l.b16 %v737
        %v1030 = vunpack.c.l.b16 %v738
        %v1031 = vunpack.c.l.b16 %v739
        %v1032 = vunpack.c.l.b16 %v740
        %v1033 = vunpack.c.l.b16 %v741
        %v1034 = vunpack.c.l.b16 %v742
        %v1035 = vunpack.c.l.b16 %v743
        %v1036 = vunpack.c.l.b16 %v744
        %v1037 = vunpack.c.l.b16 %v745
        %v1038 = vunpack.c.l.b16 %v746
        %v1039 = vunpack.c.l.b16 %v747
        %v1040 = vunpack.c.l.b16 %v748
        %v1041 = vunpack.c.l.b16 %v749
        %v1042 = vunpack.c.l.b16 %v750
        %v1043 = vunpack.c.l.b16 %v751
        %v1044 = vunpack.c.l.b16 %v752
        %v1045 = vunpack.c.l.b16 %v753
        %v1046 = vunpack.c.l.b16 %v754
        %v1047 = vunpack.c.l.b16 %v755
        %v1048 = vunpack.c.l.b16 %v756
        %v1049 = vunpack.c.l.b16 %v757
        %v1050 = vunpack.c.l.b16 %v758
        %v1051 = vunpack.c.l.b16 %v759
        %v1052 = vunpack.c.l.b16 %v760
        %v1053 = vunpack.c.l.b16 %v761
        %v1054 = vunpack.c.l.b16 %v762
        %v1055 = vunpack.c.l.b16 %v763
        %v1056 = vunpack.c.l.b16 %v764
        %v1057 = vunpack.c.l.b16 %v765
        %v1058 = vunpack.c.l.b16 %v766
        %v1059 = vunpack.c.l.b16 %v767
        %v1060 = vunpack.c.l.b16 %v768
        %v1061 = vunpack.c.l.b16 %v769
        %v1062 = vunpack.c.l.b16 %v770
        %v1063 = vunpack.c.l.b16 %v771
        %v1064 = vunpack.c.l.b16 %v772
        %v1065 = vunpack.c.l.b16 %v773
        %v1066 = vunpack.c.l.b16 %v774
        %v1067 = vunpack.c.l.b16 %v775
        %v1068 = vunpack.c.l.b16 %v776
        %v1069 = vunpack.c.l.b16 %v777
        %v1070 = vunpack.c.l.b16 %v778
        %v1071 = vunpack.c.l.b16 %v779
        %v1072 = vunpack.c.l.b16 %v780
        %v1073 = vunpack.c.l.b16 %v781
        %v1074 = vunpack.c.l.b16 %v782
        %v1075 = vunpack.c.l.b16 %v783
        %v1076 = vunpack.c.l.b16 %v784
        %v1077 = vunpack.c.l.b16 %v785
        %v1078 = vunpack.c.l.b16 %v786
        %v1079 = vunpack.c.l.b16 %v787
        %v1080 = vunpack.c.l.b16 %v788
        %v1081 = vunpack.c.l.b16 %v789
        %v1082 = vunpack.c.l.b16 %v790
        %v1083 = vunpack.c.l.b16 %v791
        %v1084 = vunpack.c.l.b16 %v792
        %v1085 = vunpack.c.l.b16 %v793
        %v1086 = vunpack.c.l.b16 %v794
        %v1087 = vunpack.c.l.b16 %v795
        %v1088 = vunpack.c.l.b16 %v796
        %v1089 = vunpack.c.l.b16 %v797
        %v1090 = vunpack.c.l.b16 %v798
        %v1091 = vunpack.c.l.b16 %v799
        %v1092 = vunpack.c.l.b16 %v800
        %v1093 = vunpack.c.l.b16 %v801
        %v1094 = vunpack.c.l.b16 %v802
        %v1095 = vpack.c.b16 %v952, %v951
        %v1096 = vpack.c.b16 %v954, %v953
        %v1097 = vpack.c.b16 %v956, %v955
        %v1098 = vpack.c.b16 %v958, %v957
        %v1099 = vpack.c.b16 %v960, %v959
        %v1100 = vpack.c.b16 %v962, %v961
        %v1101 = vpack.c.b16 %v964, %v963
        %v1102 = vpack.c.b16 %v966, %v965
        %v1103 = vpack.c.b16 %v968, %v967
        %v1104 = vpack.c.b16 %v970, %v969
        %v1105 = vpack.c.b16 %v972, %v971
        %v1106 = vpack.c.b16 %v974, %v973
        %v1107 = vpack.c.b16 %v976, %v975
        %v1108 = vpack.c.b16 %v978, %v977
        %v1109 = vpack.c.b16 %v980, %v979
        %v1110 = vpack.c.b16 %v982, %v981
        %v1111 = vpack.c.b16 %v984, %v983
        %v1112 = vpack.c.b16 %v986, %v985
        %v1113 = vpack.c.b16 %v988, %v987
        %v1114 = vpack.c.b16 %v990, %v989
        %v1115 = vpack.c.b16 %v992, %v991
        %v1116 = vpack.c.b16 %v994, %v993
        %v1117 = vpack.c.b16 %v996, %v995
        %v1118 = vpack.c.b16 %v998, %v997
        %v1119 = vpack.c.b16 %v1000, %v999
        %v1120 = vpack.c.b16 %v1002, %v1001
        %v1121 = vpack.c.b16 %v1004, %v1003
        %v1122 = vpack.c.b16 %v1006, %v1005
        %v1123 = vpack.c.b16 %v1008, %v1007
        %v1124 = vpack.c.b16 %v1010, %v1009
        %v1125 = vpack.c.b16 %v1012, %v1011
        %v1126 = vpack.c.b16 %v1014, %v1013
        %v1127 = vpack.c.b16 %v1016, %v1015
        %v1128 = vpack.c.b16 %v1018, %v1017
        %v1129 = vpack.c.b16 %v1020, %v1019
        %v1130 = vpack.c.b16 %v1022, %v1021
        %v1131 = vpack.c.b16 %v1024, %v1023
        %v1132 = vpack.c.b16 %v1026, %v1025
        %v1133 = vpack.c.b16 %v1028, %v1027
        %v1134 = vpack.c.b16 %v1030, %v1029
        %v1135 = vpack.c.b16 %v1032, %v1031
        %v1136 = vpack.c.b16 %v1034, %v1033
        %v1137 = vpack.c.b16 %v1036, %v1035
        %v1138 = vpack.c.b16 %v1038, %v1037
        %v1139 = vpack.c.b16 %v1040, %v1039
        %v1140 = vpack.c.b16 %v1042, %v1041
        %v1141 = vpack.c.b16 %v1044, %v1043
        %v1142 = vpack.c.b16 %v1046, %v1045
        %v1143 = vpack.c.b16 %v1048, %v1047
        %v1144 = vpack.c.b16 %v1050, %v1049
        %v1145 = vpack.c.b16 %v1052, %v1051
        %v1146 = vpack.c.b16 %v1054, %v1053
        %v1147 = vpack.c.b16 %v1056, %v1055
        %v1148 = vpack.c.b16 %v1058, %v1057
        %v1149 = vpack.c.b16 %v1060, %v1059
        %v1150 = vpack.c.b16 %v1062, %v1061
        %v1151 = vpack.c.b16 %v1064, %v1063
        %v1152 = vpack.c.b16 %v1066, %v1065
        %v1153 = vpack.c.b16 %v1068, %v1067
        %v1154 = vpack.c.b16 %v1070, %v1069
        %v1155 = vpack.c.b16 %v1072, %v1071
        %v1156 = vpack.c.b16 %v1074, %v1073
        %v1157 = vpack.c.b16 %v1076, %v1075
        %v1158 = vpack.c.b16 %v1078, %v1077
        %v1159 = vpack.c.b16 %v1080, %v1079
        %v1160 = vpack.c.b16 %v1082, %v1081
        %v1161 = vpack.c.b16 %v1084, %v1083
        %v1162 = vpack.c.b16 %v1086, %v1085
        %v1163 = vpack.c.b16 %v1088, %v1087
        %v1164 = vpack.c.b16 %v1090, %v1089
        %v1165 = vpack.c.b16 %v1092, %v1091
        %v1166 = vpack.c.b16 %v1094, %v1093
        %1239 = vmatprep.subr.bf16.mxu0 0
        %1240 = vmatpush1.bf16.msra.mxu0 %v1095
        %1241 = vmatprep.subr.bf16.mxu0 0
        %1242 = vmatpush1.bf16.msra.mxu0 %v1096
        %1243 = vmatprep.subr.bf16.mxu0 0
        %1244 = vmatpush1.bf16.msra.mxu0 %v1097
        %1245 = vmatprep.subr.bf16.mxu0 0
        %1246 = vmatpush1.bf16.msra.mxu0 %v1098
        %1247 = vmatprep.subr.bf16.mxu0 0
        %1248 = vmatpush1.bf16.msra.mxu0 %v1099
        %1249 = vmatprep.subr.bf16.mxu0 0
        %1250 = vmatpush1.bf16.msra.mxu0 %v1100
        %1251 = vmatprep.subr.bf16.mxu0 0
        %1252 = vmatpush1.bf16.msra.mxu0 %v1101
        %1253 = vmatprep.subr.bf16.mxu0 0
        %1254 = vmatpush1.bf16.msra.mxu0 %v1102
        %1255 = vmatprep.subr.bf16.mxu0 0
        %1256 = vmatpush1.bf16.msra.mxu0 %v1103
        %1257 = vmatprep.subr.bf16.mxu0 0
        %1258 = vmatpush1.bf16.msra.mxu0 %v1104
        %1259 = vmatprep.subr.bf16.mxu0 0
        %1260 = vmatpush1.bf16.msra.mxu0 %v1105
        %1261 = vmatprep.subr.bf16.mxu0 0
        %1262 = vmatpush1.bf16.msra.mxu0 %v1106
        %1263 = vmatprep.subr.bf16.mxu0 0
        %1264 = vmatpush1.bf16.msra.mxu0 %v1107
        %1265 = vmatprep.subr.bf16.mxu0 0
        %1266 = vmatpush1.bf16.msra.mxu0 %v1108
        %1267 = vmatprep.subr.bf16.mxu0 0
        %1268 = vmatpush1.bf16.msra.mxu0 %v1109
        %1269 = vmatprep.subr.bf16.mxu0 0
        %1270 = vmatpush1.bf16.msra.mxu0 %v1110
        %1271 = vmatprep.mubr.bf16.mxu0 %v327
        %1272 = vmatmul.mubr.bf16.gmra.mrb[0].mxu0 %v279
        %v1273 = vpop.f32.mrb[0].mxu0
        %v1274 = vadd.f32 %v806, %v1273
        %v1275 = vpop.f32.mrb[0].mxu0
        %v1276 = vpop.f32.mrb[0].mxu0
        %v1277 = vadd.f32 %v806, %v1276
        %v1278 = vpop.f32.mrb[0].mxu0
        %1279 = vmatprep.mubr.bf16.mxu0 %v339
        %1280 = vmatmul.mubr.bf16.gmra.mrb[0].mxu0 %v280
        %v1281 = vpop.f32.mrb[0].mxu0
        %v1282 = vadd.f32 %v806, %v1281
        %v1283 = vpop.f32.mrb[0].mxu0
        %v1284 = vpop.f32.mrb[0].mxu0
        %v1285 = vadd.f32 %v806, %v1284
        %v1286 = vpop.f32.mrb[0].mxu0
        %1287 = vmatprep.mubr.bf16.mxu0 %v351
        %1288 = vmatmul.mubr.bf16.gmra.mrb[0].mxu0 %v281
        %v1289 = vpop.f32.mrb[0].mxu0
        %v1290 = vadd.f32 %v806, %v1289
        %v1291 = vpop.f32.mrb[0].mxu0
        %v1292 = vpop.f32.mrb[0].mxu0
        %v1293 = vadd.f32 %v806, %v1292
        %v1294 = vpop.f32.mrb[0].mxu0
        %1295 = vmatprep.mubr.bf16.mxu0 %v363
        %1296 = vmatmul.mubr.bf16.gmra.mrb[0].mxu0 %v282
        %v1297 = vpop.f32.mrb[0].mxu0
        %v1298 = vadd.f32 %v806, %v1297
        %v1299 = vpop.f32.mrb[0].mxu0
        %v1300 = vpop.f32.mrb[0].mxu0
        %v1301 = vadd.f32 %v806, %v1300
        %v1302 = vpop.f32.mrb[0].mxu0
        %1303 = vmatprep.mubr.bf16.mxu0 %v375
        %1304 = vmatmul.mubr.bf16.gmra.mrb[0].mxu0 %v283
        %v1305 = vpop.f32.mrb[0].mxu0
        %v1306 = vadd.f32 %v806, %v1305
        %v1307 = vpop.f32.mrb[0].mxu0
        %v1308 = vpop.f32.mrb[0].mxu0
        %v1309 = vadd.f32 %v806, %v1308
        %v1310 = vpop.f32.mrb[0].mxu0
        %1311 = vmatprep.mubr.bf16.mxu0 %v387
        %1312 = vmatmul.mubr.bf16.gmra.mrb[0].mxu0 %v284
        %v1313 = vpop.f32.mrb[0].mxu0
        %v1314 = vadd.f32 %v806, %v1313
        %v1315 = vpop.f32.mrb[0].mxu0
        %v1316 = vpop.f32.mrb[0].mxu0
        %v1317 = vadd.f32 %v806, %v1316
        %v1318 = vpop.f32.mrb[0].mxu0
        %1319 = vmatprep.mubr.bf16.mxu0 %v399
        %1320 = vmatmul.mubr.bf16.gmra.mrb[0].mxu0 %v285
        %v1321 = vpop.f32.mrb[0].mxu0
        %v1322 = vadd.f32 %v806, %v1321
        %v1323 = vpop.f32.mrb[0].mxu0
        %v1324 = vpop.f32.mrb[0].mxu0
        %v1325 = vadd.f32 %v806, %v1324
        %v1326 = vpop.f32.mrb[0].mxu0
        %1327 = vmatprep.mubr.bf16.mxu0 %v411
        %1328 = vmatmul.mubr.bf16.gmra.mrb[0].mxu0 %v286
        %v1329 = vpop.f32.mrb[0].mxu0
        %v1330 = vadd.f32 %v806, %v1329
        %v1331 = vpop.f32.mrb[0].mxu0
        %v1332 = vpop.f32.mrb[0].mxu0
        %v1333 = vadd.f32 %v806, %v1332
        %v1334 = vpop.f32.mrb[0].mxu0
        %1335 = vmatprep.mubr.bf16.mxu0 %v423
        %1336 = vmatmul.mubr.bf16.gmra.mrb[0].mxu0 %v287
        %v1337 = vpop.f32.mrb[0].mxu0
        %v1338 = vadd.f32 %v806, %v1337
        %v1339 = vpop.f32.mrb[0].mxu0
        %v1340 = vpop.f32.mrb[0].mxu0
        %v1341 = vadd.f32 %v806, %v1340
        %v1342 = vpop.f32.mrb[0].mxu0
        %1343 = vmatprep.mubr.bf16.mxu0 %v435
        %1344 = vmatmul.mubr.bf16.gmra.mrb[0].mxu0 %v288
        %v1345 = vpop.f32.mrb[0].mxu0
        %v1346 = vadd.f32 %v806, %v1345
        %v1347 = vpop.f32.mrb[0].mxu0
        %v1348 = vpop.f32.mrb[0].mxu0
        %v1349 = vadd.f32 %v806, %v1348
        %v1350 = vpop.f32.mrb[0].mxu0
        %1351 = vmatprep.mubr.bf16.mxu0 %v447
        %1352 = vmatmul.mubr.bf16.gmra.mrb[0].mxu0 %v289
        %v1353 = vpop.f32.mrb[0].mxu0
        %v1354 = vadd.f32 %v806, %v1353
        %v1355 = vpop.f32.mrb[0].mxu0
        %v1356 = vpop.f32.mrb[0].mxu0
        %v1357 = vadd.f32 %v806, %v1356
        %v1358 = vpop.f32.mrb[0].mxu0
        %1359 = vmatprep.mubr.bf16.mxu0 %v459
        %1360 = vmatmul.mubr.bf16.gmra.mrb[0].mxu0 %v290
        %v1361 = vpop.f32.mrb[0].mxu0
        %v1362 = vadd.f32 %v806, %v1361
        %v1363 = vpop.f32.mrb[0].mxu0
        %v1364 = vpop.f32.mrb[0].mxu0
        %v1365 = vadd.f32 %v806, %v1364
        %v1366 = vpop.f32.mrb[0].mxu0
        %1367 = vmatprep.mubr.bf16.mxu0 %v471
        %1368 = vmatmul.mubr.bf16.gmra.mrb[0].mxu0 %v291
        %v1369 = vpop.f32.mrb[0].mxu0
        %v1370 = vadd.f32 %v806, %v1369
        %v1371 = vpop.f32.mrb[0].mxu0
        %v1372 = vpop.f32.mrb[0].mxu0
        %v1373 = vadd.f32 %v806, %v1372
        %v1374 = vpop.f32.mrb[0].mxu0
        %1375 = vmatprep.mubr.bf16.mxu0 %v483
        %1376 = vmatmul.mubr.bf16.gmra.mrb[0].mxu0 %v292
        %v1377 = vpop.f32.mrb[0].mxu0
        %v1378 = vadd.f32 %v806, %v1377
        %v1379 = vpop.f32.mrb[0].mxu0
        %v1380 = vpop.f32.mrb[0].mxu0
        %v1381 = vadd.f32 %v806, %v1380
        %v1382 = vpop.f32.mrb[0].mxu0
        %1383 = vmatprep.mubr.bf16.mxu0 %v495
        %1384 = vmatmul.mubr.bf16.gmra.mrb[0].mxu0 %v293
        %v1385 = vpop.f32.mrb[0].mxu0
        %v1386 = vadd.f32 %v806, %v1385
        %v1387 = vpop.f32.mrb[0].mxu0
        %v1388 = vpop.f32.mrb[0].mxu0
        %v1389 = vadd.f32 %v806, %v1388
        %v1390 = vpop.f32.mrb[0].mxu0
        %1391 = vmatprep.mubr.bf16.mxu0 %v507
        %1392 = vmatmul.mubr.bf16.gmra.mrb[0].mxu0 %v294
        %v1393 = vpop.f32.mrb[0].mxu0
        %v1394 = vadd.f32 %v806, %v1393
        %v1395 = vpop.f32.mrb[0].mxu0
        %v1396 = vpop.f32.mrb[0].mxu0
        %v1397 = vadd.f32 %v806, %v1396
        %v1398 = vpop.f32.mrb[0].mxu0
        %1399 = vdwg.mxu0
        %1400 = vmatprep.subr.bf16.mxu0 0
        %1401 = vmatpush1.bf16.msra.mxu0 %v1111
        %1402 = vmatprep.subr.bf16.mxu0 0
        %1403 = vmatpush1.bf16.msra.mxu0 %v1112
        %1404 = vmatprep.subr.bf16.mxu0 0
        %1405 = vmatpush1.bf16.msra.mxu0 %v1113
        %1406 = vmatprep.subr.bf16.mxu0 0
        %1407 = vmatpush1.bf16.msra.mxu0 %v1114
        %1408 = vmatprep.subr.bf16.mxu0 0
        %1409 = vmatpush1.bf16.msra.mxu0 %v1115
        %1410 = vmatprep.subr.bf16.mxu0 0
        %1411 = vmatpush1.bf16.msra.mxu0 %v1116
        %1412 = vmatprep.subr.bf16.mxu0 0
        %1413 = vmatpush1.bf16.msra.mxu0 %v1117
        %1414 = vmatprep.subr.bf16.mxu0 0
        %1415 = vmatpush1.bf16.msra.mxu0 %v1118
        %1416 = vmatprep.subr.bf16.mxu0 0
        %1417 = vmatpush1.bf16.msra.mxu0 %v1119
        %1418 = vmatprep.subr.bf16.mxu0 0
        %1419 = vmatpush1.bf16.msra.mxu0 %v1120
        %1420 = vmatprep.subr.bf16.mxu0 0
        %1421 = vmatpush1.bf16.msra.mxu0 %v1121
        %1422 = vmatprep.subr.bf16.mxu0 0
        %1423 = vmatpush1.bf16.msra.mxu0 %v1122
        %1424 = vmatprep.subr.bf16.mxu0 0
        %1425 = vmatpush1.bf16.msra.mxu0 %v1123
        %1426 = vmatprep.subr.bf16.mxu0 0
        %1427 = vmatpush1.bf16.msra.mxu0 %v1124
        %1428 = vmatprep.subr.bf16.mxu0 0
        %1429 = vmatpush1.bf16.msra.mxu0 %v1125
        %1430 = vmatprep.subr.bf16.mxu0 0
        %1431 = vmatpush1.bf16.msra.mxu0 %v1126
        %1432 = vmatprep.mubr.bf16.mxu0 %v280
        %1433 = vmatmul.mubr.bf16.gmra.mrb[0].mxu0 %v559
        %v1434 = vpop.f32.mrb[0].mxu0
        %v1435 = vadd.f32 %v1274, %v1434
        %v1436 = vpop.f32.mrb[0].mxu0
        %v1437 = vpop.f32.mrb[0].mxu0
        %v1438 = vadd.f32 %v1277, %v1437
        %v1439 = vpop.f32.mrb[0].mxu0
        %1440 = vmatprep.mubr.bf16.mxu0 %v281
        %1441 = vmatmul.mubr.bf16.gmra.mrb[0].mxu0 %v562
        %v1442 = vpop.f32.mrb[0].mxu0
        %v1443 = vadd.f32 %v1282, %v1442
        %v1444 = vpop.f32.mrb[0].mxu0
        %v1445 = vpop.f32.mrb[0].mxu0
        %v1446 = vadd.f32 %v1285, %v1445
        %v1447 = vpop.f32.mrb[0].mxu0
        %1448 = vmatprep.mubr.bf16.mxu0 %v282
        %1449 = vmatmul.mubr.bf16.gmra.mrb[0].mxu0 %v565
        %v1450 = vpop.f32.mrb[0].mxu0
        %v1451 = vadd.f32 %v1290, %v1450
        %v1452 = vpop.f32.mrb[0].mxu0
        %v1453 = vpop.f32.mrb[0].mxu0
        %v1454 = vadd.f32 %v1293, %v1453
        %v1455 = vpop.f32.mrb[0].mxu0
        %1456 = vmatprep.mubr.bf16.mxu0 %v283
        %1457 = vmatmul.mubr.bf16.gmra.mrb[0].mxu0 %v568
        %v1458 = vpop.f32.mrb[0].mxu0
        %v1459 = vadd.f32 %v1298, %v1458
        %v1460 = vpop.f32.mrb[0].mxu0
        %v1461 = vpop.f32.mrb[0].mxu0
        %v1462 = vadd.f32 %v1301, %v1461
        %v1463 = vpop.f32.mrb[0].mxu0
        %1464 = vmatprep.mubr.bf16.mxu0 %v284
        %1465 = vmatmul.mubr.bf16.gmra.mrb[0].mxu0 %v571
        %v1466 = vpop.f32.mrb[0].mxu0
        %v1467 = vadd.f32 %v1306, %v1466
        %v1468 = vpop.f32.mrb[0].mxu0
        %v1469 = vpop.f32.mrb[0].mxu0
        %v1470 = vadd.f32 %v1309, %v1469
        %v1471 = vpop.f32.mrb[0].mxu0
        %1472 = vmatprep.mubr.bf16.mxu0 %v285
        %1473 = vmatmul.mubr.bf16.gmra.mrb[0].mxu0 %v574
        %v1474 = vpop.f32.mrb[0].mxu0
        %v1475 = vadd.f32 %v1314, %v1474
        %v1476 = vpop.f32.mrb[0].mxu0
        %v1477 = vpop.f32.mrb[0].mxu0
        %v1478 = vadd.f32 %v1317, %v1477
        %v1479 = vpop.f32.mrb[0].mxu0
        %1480 = vmatprep.mubr.bf16.mxu0 %v286
        %1481 = vmatmul.mubr.bf16.gmra.mrb[0].mxu0 %v577
        %v1482 = vpop.f32.mrb[0].mxu0
        %v1483 = vadd.f32 %v1322, %v1482
        %v1484 = vpop.f32.mrb[0].mxu0
        %v1485 = vpop.f32.mrb[0].mxu0
        %v1486 = vadd.f32 %v1325, %v1485
        %v1487 = vpop.f32.mrb[0].mxu0
        %1488 = vmatprep.mubr.bf16.mxu0 %v287
        %1489 = vmatmul.mubr.bf16.gmra.mrb[0].mxu0 %v580
        %v1490 = vpop.f32.mrb[0].mxu0
        %v1491 = vadd.f32 %v1330, %v1490
        %v1492 = vpop.f32.mrb[0].mxu0
        %v1493 = vpop.f32.mrb[0].mxu0
        %v1494 = vadd.f32 %v1333, %v1493
        %v1495 = vpop.f32.mrb[0].mxu0
        %1496 = vmatprep.mubr.bf16.mxu0 %v288
        %1497 = vmatmul.mubr.bf16.gmra.mrb[0].mxu0 %v583
        %v1498 = vpop.f32.mrb[0].mxu0
        %v1499 = vadd.f32 %v1338, %v1498
        %v1500 = vpop.f32.mrb[0].mxu0
        %v1501 = vpop.f32.mrb[0].mxu0
        %v1502 = vadd.f32 %v1341, %v1501
        %v1503 = vpop.f32.mrb[0].mxu0
        %1504 = vmatprep.mubr.bf16.mxu0 %v289
        %1505 = vmatmul.mubr.bf16.gmra.mrb[0].mxu0 %v586
        %v1506 = vpop.f32.mrb[0].mxu0
        %v1507 = vadd.f32 %v1346, %v1506
        %v1508 = vpop.f32.mrb[0].mxu0
        %v1509 = vpop.f32.mrb[0].mxu0
        %v1510 = vadd.f32 %v1349, %v1509
        %v1511 = vpop.f32.mrb[0].mxu0
        %1512 = vmatprep.mubr.bf16.mxu0 %v290
        %1513 = vmatmul.mubr.bf16.gmra.mrb[0].mxu0 %v589
        %v1514 = vpop.f32.mrb[0].mxu0
        %v1515 = vadd.f32 %v1354, %v1514
        %v1516 = vpop.f32.mrb[0].mxu0
        %v1517 = vpop.f32.mrb[0].mxu0
        %v1518 = vadd.f32 %v1357, %v1517
        %v1519 = vpop.f32.mrb[0].mxu0
        %1520 = vmatprep.mubr.bf16.mxu0 %v291
        %1521 = vmatmul.mubr.bf16.gmra.mrb[0].mxu0 %v592
        %v1522 = vpop.f32.mrb[0].mxu0
        %v1523 = vadd.f32 %v1362, %v1522
        %v1524 = vpop.f32.mrb[0].mxu0
        %v1525 = vpop.f32.mrb[0].mxu0
        %v1526 = vadd.f32 %v1365, %v1525
        %v1527 = vpop.f32.mrb[0].mxu0
        %1528 = vmatprep.mubr.bf16.mxu0 %v292
        %1529 = vmatmul.mubr.bf16.gmra.mrb[0].mxu0 %v595
        %v1530 = vpop.f32.mrb[0].mxu0
        %v1531 = vadd.f32 %v1370, %v1530
        %v1532 = vpop.f32.mrb[0].mxu0
        %v1533 = vpop.f32.mrb[0].mxu0
        %v1534 = vadd.f32 %v1373, %v1533
        %v1535 = vpop.f32.mrb[0].mxu0
        %1536 = vmatprep.mubr.bf16.mxu0 %v293
        %1537 = vmatmul.mubr.bf16.gmra.mrb[0].mxu0 %v598
        %v1538 = vpop.f32.mrb[0].mxu0
        %v1539 = vadd.f32 %v1378, %v1538
        %v1540 = vpop.f32.mrb[0].mxu0
        %v1541 = vpop.f32.mrb[0].mxu0
        %v1542 = vadd.f32 %v1381, %v1541
        %v1543 = vpop.f32.mrb[0].mxu0
        %1544 = vmatprep.mubr.bf16.mxu0 %v294
        %1545 = vmatmul.mubr.bf16.gmra.mrb[0].mxu0 %v601
        %v1546 = vpop.f32.mrb[0].mxu0
        %v1547 = vadd.f32 %v1386, %v1546
        %v1548 = vpop.f32.mrb[0].mxu0
        %v1549 = vpop.f32.mrb[0].mxu0
        %v1550 = vadd.f32 %v1389, %v1549
        %v1551 = vpop.f32.mrb[0].mxu0
        %1552 = vmatprep.mubr.bf16.mxu0 %v295
        %1553 = vmatmul.mubr.bf16.gmra.mrb[0].mxu0 %v604
        %v1554 = vpop.f32.mrb[0].mxu0
        %v1555 = vadd.f32 %v1394, %v1554
        %v1556 = vpop.f32.mrb[0].mxu0
        %v1557 = vpop.f32.mrb[0].mxu0
        %v1558 = vadd.f32 %v1397, %v1557
        %v1559 = vpop.f32.mrb[0].mxu0
        %1560 = vdwg.mxu0
        %1561 = vmatprep.subr.bf16.mxu0 0
        %1562 = vmatpush1.bf16.msra.mxu0 %v1127
        %1563 = vmatprep.subr.bf16.mxu0 0
        %1564 = vmatpush1.bf16.msra.mxu0 %v1128
        %1565 = vmatprep.subr.bf16.mxu0 0
        %1566 = vmatpush1.bf16.msra.mxu0 %v1129
        %1567 = vmatprep.subr.bf16.mxu0 0
        %1568 = vmatpush1.bf16.msra.mxu0 %v1130
        %1569 = vmatprep.subr.bf16.mxu0 0
        %1570 = vmatpush1.bf16.msra.mxu0 %v1131
        %1571 = vmatprep.subr.bf16.mxu0 0
        %1572 = vmatpush1.bf16.msra.mxu0 %v1132
        %1573 = vmatprep.subr.bf16.mxu0 0
        %1574 = vmatpush1.bf16.msra.mxu0 %v1133
        %1575 = vmatprep.subr.bf16.mxu0 0
        %1576 = vmatpush1.bf16.msra.mxu0 %v1134
        %1577 = vmatprep.subr.bf16.mxu0 0
        %1578 = vmatpush1.bf16.msra.mxu0 %v1135
        %1579 = vmatprep.subr.bf16.mxu0 0
        %1580 = vmatpush1.bf16.msra.mxu0 %v1136
        %1581 = vmatprep.subr.bf16.mxu0 0
        %1582 = vmatpush1.bf16.msra.mxu0 %v1137
        %1583 = vmatprep.subr.bf16.mxu0 0
        %1584 = vmatpush1.bf16.msra.mxu0 %v1138
        %1585 = vmatprep.subr.bf16.mxu0 0
        %1586 = vmatpush1.bf16.msra.mxu0 %v1139
        %1587 = vmatprep.subr.bf16.mxu0 0
        %1588 = vmatpush1.bf16.msra.mxu0 %v1140
        %1589 = vmatprep.subr.bf16.mxu0 0
        %1590 = vmatpush1.bf16.msra.mxu0 %v1141
        %1591 = vmatprep.subr.bf16.mxu0 0
        %1592 = vmatpush1.bf16.msra.mxu0 %v1142
        %1593 = vmatprep.mubr.bf16.mxu0 %v562
        %1594 = vmatmul.mubr.bf16.gmra.mrb[0].mxu0 %v339
        %v1595 = vpop.f32.mrb[0].mxu0
        %v1596 = vadd.f32 %v1435, %v1595
        %v1597 = vpop.f32.mrb[0].mxu0
        %v1598 = vpop.f32.mrb[0].mxu0
        %v1599 = vadd.f32 %v1438, %v1598
        %v1600 = vpop.f32.mrb[0].mxu0
        %1601 = vmatprep.mubr.bf16.mxu0 %v565
        %1602 = vmatmul.mubr.bf16.gmra.mrb[0].mxu0 %v351
        %v1603 = vpop.f32.mrb[0].mxu0
        %v1604 = vadd.f32 %v1443, %v1603
        %v1605 = vpop.f32.mrb[0].mxu0
        %v1606 = vpop.f32.mrb[0].mxu0
        %v1607 = vadd.f32 %v1446, %v1606
        %v1608 = vpop.f32.mrb[0].mxu0
        %1609 = vmatprep.mubr.bf16.mxu0 %v568
        %1610 = vmatmul.mubr.bf16.gmra.mrb[0].mxu0 %v363
        %v1611 = vpop.f32.mrb[0].mxu0
        %v1612 = vadd.f32 %v1451, %v1611
        %v1613 = vpop.f32.mrb[0].mxu0
        %v1614 = vpop.f32.mrb[0].mxu0
        %v1615 = vadd.f32 %v1454, %v1614
        %v1616 = vpop.f32.mrb[0].mxu0
        %1617 = vmatprep.mubr.bf16.mxu0 %v571
        %1618 = vmatmul.mubr.bf16.gmra.mrb[0].mxu0 %v375
        %v1619 = vpop.f32.mrb[0].mxu0
        %v1620 = vadd.f32 %v1459, %v1619
        %v1621 = vpop.f32.mrb[0].mxu0
        %v1622 = vpop.f32.mrb[0].mxu0
        %v1623 = vadd.f32 %v1462, %v1622
        %v1624 = vpop.f32.mrb[0].mxu0
        %1625 = vmatprep.mubr.bf16.mxu0 %v574
        %1626 = vmatmul.mubr.bf16.gmra.mrb[0].mxu0 %v387
        %v1627 = vpop.f32.mrb[0].mxu0
        %v1628 = vadd.f32 %v1467, %v1627
        %v1629 = vpop.f32.mrb[0].mxu0
        %v1630 = vpop.f32.mrb[0].mxu0
        %v1631 = vadd.f32 %v1470, %v1630
        %v1632 = vpop.f32.mrb[0].mxu0
        %1633 = vmatprep.mubr.bf16.mxu0 %v577
        %1634 = vmatmul.mubr.bf16.gmra.mrb[0].mxu0 %v399
        %v1635 = vpop.f32.mrb[0].mxu0
        %v1636 = vadd.f32 %v1475, %v1635
        %v1637 = vpop.f32.mrb[0].mxu0
        %v1638 = vpop.f32.mrb[0].mxu0
        %v1639 = vadd.f32 %v1478, %v1638
        %v1640 = vpop.f32.mrb[0].mxu0
        %1641 = vmatprep.mubr.bf16.mxu0 %v580
        %1642 = vmatmul.mubr.bf16.gmra.mrb[0].mxu0 %v411
        %v1643 = vpop.f32.mrb[0].mxu0
        %v1644 = vadd.f32 %v1483, %v1643
        %v1645 = vpop.f32.mrb[0].mxu0
        %v1646 = vpop.f32.mrb[0].mxu0
        %v1647 = vadd.f32 %v1486, %v1646
        %v1648 = vpop.f32.mrb[0].mxu0
        %1649 = vmatprep.mubr.bf16.mxu0 %v583
        %1650 = vmatmul.mubr.bf16.gmra.mrb[0].mxu0 %v423
        %v1651 = vpop.f32.mrb[0].mxu0
        %v1652 = vadd.f32 %v1491, %v1651
        %v1653 = vpop.f32.mrb[0].mxu0
        %v1654 = vpop.f32.mrb[0].mxu0
        %v1655 = vadd.f32 %v1494, %v1654
        %v1656 = vpop.f32.mrb[0].mxu0
        %1657 = vmatprep.mubr.bf16.mxu0 %v586
        %1658 = vmatmul.mubr.bf16.gmra.mrb[0].mxu0 %v435
        %v1659 = vpop.f32.mrb[0].mxu0
        %v1660 = vadd.f32 %v1499, %v1659
        %v1661 = vpop.f32.mrb[0].mxu0
        %v1662 = vpop.f32.mrb[0].mxu0
        %v1663 = vadd.f32 %v1502, %v1662
        %v1664 = vpop.f32.mrb[0].mxu0
        %1665 = vmatprep.mubr.bf16.mxu0 %v589
        %1666 = vmatmul.mubr.bf16.gmra.mrb[0].mxu0 %v447
        %v1667 = vpop.f32.mrb[0].mxu0
        %v1668 = vadd.f32 %v1507, %v1667
        %v1669 = vpop.f32.mrb[0].mxu0
        %v1670 = vpop.f32.mrb[0].mxu0
        %v1671 = vadd.f32 %v1510, %v1670
        %v1672 = vpop.f32.mrb[0].mxu0
        %1673 = vmatprep.mubr.bf16.mxu0 %v592
        %1674 = vmatmul.mubr.bf16.gmra.mrb[0].mxu0 %v459
        %v1675 = vpop.f32.mrb[0].mxu0
        %v1676 = vadd.f32 %v1515, %v1675
        %v1677 = vpop.f32.mrb[0].mxu0
        %v1678 = vpop.f32.mrb[0].mxu0
        %v1679 = vadd.f32 %v1518, %v1678
        %v1680 = vpop.f32.mrb[0].mxu0
        %1681 = vmatprep.mubr.bf16.mxu0 %v595
        %1682 = vmatmul.mubr.bf16.gmra.mrb[0].mxu0 %v471
        %v1683 = vpop.f32.mrb[0].mxu0
        %v1684 = vadd.f32 %v1523, %v1683
        %v1685 = vpop.f32.mrb[0].mxu0
        %v1686 = vpop.f32.mrb[0].mxu0
        %v1687 = vadd.f32 %v1526, %v1686
        %v1688 = vpop.f32.mrb[0].mxu0
        %1689 = vmatprep.mubr.bf16.mxu0 %v598
        %1690 = vmatmul.mubr.bf16.gmra.mrb[0].mxu0 %v483
        %v1691 = vpop.f32.mrb[0].mxu0
        %v1692 = vadd.f32 %v1531, %v1691
        %v1693 = vpop.f32.mrb[0].mxu0
        %v1694 = vpop.f32.mrb[0].mxu0
        %v1695 = vadd.f32 %v1534, %v1694
        %v1696 = vpop.f32.mrb[0].mxu0
        %1697 = vmatprep.mubr.bf16.mxu0 %v601
        %1698 = vmatmul.mubr.bf16.gmra.mrb[0].mxu0 %v495
        %v1699 = vpop.f32.mrb[0].mxu0
        %v1700 = vadd.f32 %v1539, %v1699
        %v1701 = vpop.f32.mrb[0].mxu0
        %v1702 = vpop.f32.mrb[0].mxu0
        %v1703 = vadd.f32 %v1542, %v1702
        %v1704 = vpop.f32.mrb[0].mxu0
        %1705 = vmatprep.mubr.bf16.mxu0 %v604
        %1706 = vmatmul.mubr.bf16.gmra.mrb[0].mxu0 %v507
        %v1707 = vpop.f32.mrb[0].mxu0
        %v1708 = vadd.f32 %v1547, %v1707
        %v1709 = vpop.f32.mrb[0].mxu0
        %v1710 = vpop.f32.mrb[0].mxu0
        %v1711 = vadd.f32 %v1550, %v1710
        %v1712 = vpop.f32.mrb[0].mxu0
        %1713 = vmatprep.mubr.bf16.mxu0 %v638
        %1714 = vmatmul.mubr.bf16.gmra.mrb[0].mxu0 %v632
        %v1715 = vpop.f32.mrb[0].mxu0
        %v1716 = vadd.f32 %v1555, %v1715
        %v1717 = vpop.f32.mrb[0].mxu0
        %v1718 = vpop.f32.mrb[0].mxu0
        %v1719 = vadd.f32 %v1558, %v1718
        %v1720 = vpop.f32.mrb[0].mxu0
        %1721 = vdwg.mxu0
        %1722 = vmatprep.subr.bf16.mxu0 0
        %1723 = vmatpush1.bf16.msra.mxu0 %v1143
        %1724 = vmatprep.subr.bf16.mxu0 0
        %1725 = vmatpush1.bf16.msra.mxu0 %v1144
        %1726 = vmatprep.subr.bf16.mxu0 0
        %1727 = vmatpush1.bf16.msra.mxu0 %v1145
        %1728 = vmatprep.subr.bf16.mxu0 0
        %1729 = vmatpush1.bf16.msra.mxu0 %v1146
        %1730 = vmatprep.subr.bf16.mxu0 0
        %1731 = vmatpush1.bf16.msra.mxu0 %v1147
        %1732 = vmatprep.subr.bf16.mxu0 0
        %1733 = vmatpush1.bf16.msra.mxu0 %v1148
        %1734 = vmatprep.subr.bf16.mxu0 0
        %1735 = vmatpush1.bf16.msra.mxu0 %v1149
        %1736 = vmatprep.subr.bf16.mxu0 0
        %1737 = vmatpush1.bf16.msra.mxu0 %v1150
        %1738 = vmatprep.subr.bf16.mxu0 0
        %1739 = vmatpush1.bf16.msra.mxu0 %v1151
        %1740 = vmatprep.subr.bf16.mxu0 0
        %1741 = vmatpush1.bf16.msra.mxu0 %v1152
        %1742 = vmatprep.subr.bf16.mxu0 0
        %1743 = vmatpush1.bf16.msra.mxu0 %v1153
        %1744 = vmatprep.subr.bf16.mxu0 0
        %1745 = vmatpush1.bf16.msra.mxu0 %v1154
        %1746 = vmatprep.subr.bf16.mxu0 0
        %1747 = vmatpush1.bf16.msra.mxu0 %v1155
        %1748 = vmatprep.subr.bf16.mxu0 0
        %1749 = vmatpush1.bf16.msra.mxu0 %v1156
        %1750 = vmatprep.subr.bf16.mxu0 0
        %1751 = vmatpush1.bf16.msra.mxu0 %v1157
        %1752 = vmatprep.subr.bf16.mxu0 0
        %1753 = vmatpush1.bf16.msra.mxu0 %v1158
        %1754 = vmatprep.mubr.bf16.mxu0 %v351
        %1755 = vmatmul.mubr.bf16.gmra.mrb[0].mxu0 %v281
        %v1756 = vpop.f32.mrb[0].mxu0
        %v1757 = vadd.f32 %v1596, %v1756
        %v1758 = vpop.f32.mrb[0].mxu0
        %v1759 = vpop.f32.mrb[0].mxu0
        %v1760 = vadd.f32 %v1599, %v1759
        %v1761 = vpop.f32.mrb[0].mxu0
        %1762 = vmatprep.mubr.bf16.mxu0 %v363
        %1763 = vmatmul.mubr.bf16.gmra.mrb[0].mxu0 %v282
        %v1764 = vpop.f32.mrb[0].mxu0
        %v1765 = vadd.f32 %v1604, %v1764
        %v1766 = vpop.f32.mrb[0].mxu0
        %v1767 = vpop.f32.mrb[0].mxu0
        %v1768 = vadd.f32 %v1607, %v1767
        %v1769 = vpop.f32.mrb[0].mxu0
        %1770 = vmatprep.mubr.bf16.mxu0 %v375
        %1771 = vmatmul.mubr.bf16.gmra.mrb[0].mxu0 %v283
        %v1772 = vpop.f32.mrb[0].mxu0
        %v1773 = vadd.f32 %v1612, %v1772
        %v1774 = vpop.f32.mrb[0].mxu0
        %v1775 = vpop.f32.mrb[0].mxu0
        %v1776 = vadd.f32 %v1615, %v1775
        %v1777 = vpop.f32.mrb[0].mxu0
        %1778 = vmatprep.mubr.bf16.mxu0 %v387
        %1779 = vmatmul.mubr.bf16.gmra.mrb[0].mxu0 %v284
        %v1780 = vpop.f32.mrb[0].mxu0
        %v1781 = vadd.f32 %v1620, %v1780
        %v1782 = vpop.f32.mrb[0].mxu0
        %v1783 = vpop.f32.mrb[0].mxu0
        %v1784 = vadd.f32 %v1623, %v1783
        %v1785 = vpop.f32.mrb[0].mxu0
        %1786 = vmatprep.mubr.bf16.mxu0 %v399
        %1787 = vmatmul.mubr.bf16.gmra.mrb[0].mxu0 %v285
        %v1788 = vpop.f32.mrb[0].mxu0
        %v1789 = vadd.f32 %v1628, %v1788
        %v1790 = vpop.f32.mrb[0].mxu0
        %v1791 = vpop.f32.mrb[0].mxu0
        %v1792 = vadd.f32 %v1631, %v1791
        %v1793 = vpop.f32.mrb[0].mxu0
        %1794 = vmatprep.mubr.bf16.mxu0 %v411
        %1795 = vmatmul.mubr.bf16.gmra.mrb[0].mxu0 %v286
        %v1796 = vpop.f32.mrb[0].mxu0
        %v1797 = vadd.f32 %v1636, %v1796
        %v1798 = vpop.f32.mrb[0].mxu0
        %v1799 = vpop.f32.mrb[0].mxu0
        %v1800 = vadd.f32 %v1639, %v1799
        %v1801 = vpop.f32.mrb[0].mxu0
        %1802 = vmatprep.mubr.bf16.mxu0 %v423
        %1803 = vmatmul.mubr.bf16.gmra.mrb[0].mxu0 %v287
        %v1804 = vpop.f32.mrb[0].mxu0
        %v1805 = vadd.f32 %v1644, %v1804
        %v1806 = vpop.f32.mrb[0].mxu0
        %v1807 = vpop.f32.mrb[0].mxu0
        %v1808 = vadd.f32 %v1647, %v1807
        %v1809 = vpop.f32.mrb[0].mxu0
        %1810 = vmatprep.mubr.bf16.mxu0 %v435
        %1811 = vmatmul.mubr.bf16.gmra.mrb[0].mxu0 %v288
        %v1812 = vpop.f32.mrb[0].mxu0
        %v1813 = vadd.f32 %v1652, %v1812
        %v1814 = vpop.f32.mrb[0].mxu0
        %v1815 = vpop.f32.mrb[0].mxu0
        %v1816 = vadd.f32 %v1655, %v1815
        %v1817 = vpop.f32.mrb[0].mxu0
        %1818 = vmatprep.mubr.bf16.mxu0 %v447
        %1819 = vmatmul.mubr.bf16.gmra.mrb[0].mxu0 %v289
        %v1820 = vpop.f32.mrb[0].mxu0
        %v1821 = vadd.f32 %v1660, %v1820
        %v1822 = vpop.f32.mrb[0].mxu0
        %v1823 = vpop.f32.mrb[0].mxu0
        %v1824 = vadd.f32 %v1663, %v1823
        %v1825 = vpop.f32.mrb[0].mxu0
        %1826 = vmatprep.mubr.bf16.mxu0 %v459
        %1827 = vmatmul.mubr.bf16.gmra.mrb[0].mxu0 %v290
        %v1828 = vpop.f32.mrb[0].mxu0
        %v1829 = vadd.f32 %v1668, %v1828
        %v1830 = vpop.f32.mrb[0].mxu0
        %v1831 = vpop.f32.mrb[0].mxu0
        %v1832 = vadd.f32 %v1671, %v1831
        %v1833 = vpop.f32.mrb[0].mxu0
        %1834 = vmatprep.mubr.bf16.mxu0 %v471
        %1835 = vmatmul.mubr.bf16.gmra.mrb[0].mxu0 %v291
        %v1836 = vpop.f32.mrb[0].mxu0
        %v1837 = vadd.f32 %v1676, %v1836
        %v1838 = vpop.f32.mrb[0].mxu0
        %v1839 = vpop.f32.mrb[0].mxu0
        %v1840 = vadd.f32 %v1679, %v1839
        %v1841 = vpop.f32.mrb[0].mxu0
        %1842 = vmatprep.mubr.bf16.mxu0 %v483
        %1843 = vmatmul.mubr.bf16.gmra.mrb[0].mxu0 %v292
        %v1844 = vpop.f32.mrb[0].mxu0
        %v1845 = vadd.f32 %v1684, %v1844
        %v1846 = vpop.f32.mrb[0].mxu0
        %v1847 = vpop.f32.mrb[0].mxu0
        %v1848 = vadd.f32 %v1687, %v1847
        %v1849 = vpop.f32.mrb[0].mxu0
        %1850 = vmatprep.mubr.bf16.mxu0 %v495
        %1851 = vmatmul.mubr.bf16.gmra.mrb[0].mxu0 %v293
        %v1852 = vpop.f32.mrb[0].mxu0
        %v1853 = vadd.f32 %v1692, %v1852
        %v1854 = vpop.f32.mrb[0].mxu0
        %v1855 = vpop.f32.mrb[0].mxu0
        %v1856 = vadd.f32 %v1695, %v1855
        %v1857 = vpop.f32.mrb[0].mxu0
        %1858 = vmatprep.mubr.bf16.mxu0 %v507
        %1859 = vmatmul.mubr.bf16.gmra.mrb[0].mxu0 %v294
        %v1860 = vpop.f32.mrb[0].mxu0
        %v1861 = vadd.f32 %v1700, %v1860
        %v1862 = vpop.f32.mrb[0].mxu0
        %v1863 = vpop.f32.mrb[0].mxu0
        %v1864 = vadd.f32 %v1703, %v1863
        %v1865 = vpop.f32.mrb[0].mxu0
        %1866 = vmatprep.mubr.bf16.mxu0 %v632
        %1867 = vmatmul.mubr.bf16.gmra.mrb[0].mxu0 %v295
        %v1868 = vpop.f32.mrb[0].mxu0
        %v1869 = vadd.f32 %v1708, %v1868
        %v1870 = vpop.f32.mrb[0].mxu0
        %v1871 = vpop.f32.mrb[0].mxu0
        %v1872 = vadd.f32 %v1711, %v1871
        %v1873 = vpop.f32.mrb[0].mxu0
        %1874 = vmatprep.mubr.bf16.mxu0 %v651
        %1875 = vmatmul.mubr.bf16.gmra.mrb[0].mxu0 %v296
        %v1876 = vpop.f32.mrb[0].mxu0
        %v1877 = vadd.f32 %v1716, %v1876
        %v1878 = vpop.f32.mrb[0].mxu0
        %v1879 = vpop.f32.mrb[0].mxu0
        %v1880 = vadd.f32 %v1719, %v1879
        %v1881 = vpop.f32.mrb[0].mxu0
        %1882 = vdwg.mxu0
        %1883 = vmatprep.subr.bf16.mxu0 0
        %1884 = vmatpush1.bf16.msra.mxu0 %v1159
        %1885 = vmatprep.subr.bf16.mxu0 0
        %1886 = vmatpush1.bf16.msra.mxu0 %v1160
        %1887 = vmatprep.subr.bf16.mxu0 0
        %1888 = vmatpush1.bf16.msra.mxu0 %v1161
        %1889 = vmatprep.subr.bf16.mxu0 0
        %1890 = vmatpush1.bf16.msra.mxu0 %v1162
        %1891 = vmatprep.subr.bf16.mxu0 0
        %1892 = vmatpush1.bf16.msra.mxu0 %v1163
        %1893 = vmatprep.subr.bf16.mxu0 0
        %1894 = vmatpush1.bf16.msra.mxu0 %v1164
        %1895 = vmatprep.subr.bf16.mxu0 0
        %1896 = vmatpush1.bf16.msra.mxu0 %v1165
        %1897 = vmatprep.subr.bf16.mxu0 0
        %1898 = vmatpush1.bf16.msra.mxu0 %v1166
        %1899 = vmatprep.subr.bf16.mxu0 0
        %1900 = vmatpush1.bf16.msra.mxu0 0
        %1901 = vmatprep.subr.bf16.mxu0 0
        %1902 = vmatpush1.bf16.msra.mxu0 0
        %1903 = vmatprep.subr.bf16.mxu0 0
        %1904 = vmatpush1.bf16.msra.mxu0 0
        %1905 = vmatprep.subr.bf16.mxu0 0
        %1906 = vmatpush1.bf16.msra.mxu0 0
        %1907 = vmatprep.subr.bf16.mxu0 0
        %1908 = vmatpush1.bf16.msra.mxu0 0
        %1909 = vmatprep.subr.bf16.mxu0 0
        %1910 = vmatpush1.bf16.msra.mxu0 0
        %1911 = vmatprep.subr.bf16.mxu0 0
        %1912 = vmatpush1.bf16.msra.mxu0 0
        %1913 = vmatprep.subr.bf16.mxu0 0
        %1914 = vmatpush1.bf16.msra.mxu0 0
        %1915 = vmatprep.mubr.bf16.mxu0 0
        %1916 = vmatmul.mubr.bf16.gmra.mrb[0].mxu0 %v565
        %v1917 = vpop.f32.mrb[0].mxu0
        %v1918 = vadd.f32 %v1757, %v1917
        %v1919 = vpop.f32.mrb[0].mxu0
        %v1920 = vpop.f32.mrb[0].mxu0
        %v1921 = vadd.f32 %v1760, %v1920
        %v1922 = vpop.f32.mrb[0].mxu0
        %1923 = vmatprep.mubr.bf16.mxu0 0
        %1924 = vmatmul.mubr.bf16.gmra.mrb[0].mxu0 %v568
        %v1925 = vpop.f32.mrb[0].mxu0
        %v1926 = vadd.f32 %v1765, %v1925
        %v1927 = vpop.f32.mrb[0].mxu0
        %v1928 = vpop.f32.mrb[0].mxu0
        %v1929 = vadd.f32 %v1768, %v1928
        %v1930 = vpop.f32.mrb[0].mxu0
        %1931 = vmatprep.mubr.bf16.mxu0 0
        %1932 = vmatmul.mubr.bf16.gmra.mrb[0].mxu0 %v571
        %v1933 = vpop.f32.mrb[0].mxu0
        %v1934 = vadd.f32 %v1773, %v1933
        %v1935 = vpop.f32.mrb[0].mxu0
        %v1936 = vpop.f32.mrb[0].mxu0
        %v1937 = vadd.f32 %v1776, %v1936
        %v1938 = vpop.f32.mrb[0].mxu0
        %1939 = vmatprep.mubr.bf16.mxu0 0
        %1940 = vmatmul.mubr.bf16.gmra.mrb[0].mxu0 %v574
        %v1941 = vpop.f32.mrb[0].mxu0
        %v1942 = vadd.f32 %v1781, %v1941
        %v1943 = vpop.f32.mrb[0].mxu0
        %v1944 = vpop.f32.mrb[0].mxu0
        %v1945 = vadd.f32 %v1784, %v1944
        %v1946 = vpop.f32.mrb[0].mxu0
        %1947 = vmatprep.mubr.bf16.mxu0 0
        %1948 = vmatmul.mubr.bf16.gmra.mrb[0].mxu0 %v577
        %v1949 = vpop.f32.mrb[0].mxu0
        %v1950 = vadd.f32 %v1789, %v1949
        %v1951 = vpop.f32.mrb[0].mxu0
        %v1952 = vpop.f32.mrb[0].mxu0
        %v1953 = vadd.f32 %v1792, %v1952
        %v1954 = vpop.f32.mrb[0].mxu0
        %1955 = vmatprep.mubr.bf16.mxu0 0
        %1956 = vmatmul.mubr.bf16.gmra.mrb[0].mxu0 %v580
        %v1957 = vpop.f32.mrb[0].mxu0
        %v1958 = vadd.f32 %v1797, %v1957
        %v1959 = vpop.f32.mrb[0].mxu0
        %v1960 = vpop.f32.mrb[0].mxu0
        %v1961 = vadd.f32 %v1800, %v1960
        %v1962 = vpop.f32.mrb[0].mxu0
        %1963 = vmatprep.mubr.bf16.mxu0 0
        %1964 = vmatmul.mubr.bf16.gmra.mrb[0].mxu0 %v583
        %v1965 = vpop.f32.mrb[0].mxu0
        %v1966 = vadd.f32 %v1805, %v1965
        %v1967 = vpop.f32.mrb[0].mxu0
        %v1968 = vpop.f32.mrb[0].mxu0
        %v1969 = vadd.f32 %v1808, %v1968
        %v1970 = vpop.f32.mrb[0].mxu0
        %1971 = vmatprep.mubr.bf16.mxu0 0
        %1972 = vmatmul.mubr.bf16.gmra.mrb[0].mxu0 %v586
        %v1973 = vpop.f32.mrb[0].mxu0
        %v1974 = vadd.f32 %v1813, %v1973
        %v1975 = vpop.f32.mrb[0].mxu0
        %v1976 = vpop.f32.mrb[0].mxu0
        %v1977 = vadd.f32 %v1816, %v1976
        %v1978 = vpop.f32.mrb[0].mxu0
        %1979 = vmatprep.mubr.bf16.mxu0 0
        %1980 = vmatmul.mubr.bf16.gmra.mrb[0].mxu0 %v589
        %v1981 = vpop.f32.mrb[0].mxu0
        %v1982 = vadd.f32 %v1821, %v1981
        %v1983 = vpop.f32.mrb[0].mxu0
        %v1984 = vpop.f32.mrb[0].mxu0
        %v1985 = vadd.f32 %v1824, %v1984
        %v1986 = vpop.f32.mrb[0].mxu0
        %1987 = vmatprep.mubr.bf16.mxu0 0
        %1988 = vmatmul.mubr.bf16.gmra.mrb[0].mxu0 %v592
        %v1989 = vpop.f32.mrb[0].mxu0
        %v1990 = vadd.f32 %v1829, %v1989
        %v1991 = vpop.f32.mrb[0].mxu0
        %v1992 = vpop.f32.mrb[0].mxu0
        %v1993 = vadd.f32 %v1832, %v1992
        %v1994 = vpop.f32.mrb[0].mxu0
        %1995 = vmatprep.mubr.bf16.mxu0 0
        %1996 = vmatmul.mubr.bf16.gmra.mrb[0].mxu0 %v595
        %v1997 = vpop.f32.mrb[0].mxu0
        %v1998 = vadd.f32 %v1837, %v1997
        %v1999 = vpop.f32.mrb[0].mxu0
        %v2000 = vpop.f32.mrb[0].mxu0
        %v2001 = vadd.f32 %v1840, %v2000
        %v2002 = vpop.f32.mrb[0].mxu0
        %2003 = vmatprep.mubr.bf16.mxu0 0
        %2004 = vmatmul.mubr.bf16.gmra.mrb[0].mxu0 %v598
        %v2005 = vpop.f32.mrb[0].mxu0
        %v2006 = vadd.f32 %v1845, %v2005
        %v2007 = vpop.f32.mrb[0].mxu0
        %v2008 = vpop.f32.mrb[0].mxu0
        %v2009 = vadd.f32 %v1848, %v2008
        %v2010 = vpop.f32.mrb[0].mxu0
        %2011 = vmatprep.mubr.bf16.mxu0 0
        %2012 = vmatmul.mubr.bf16.gmra.mrb[0].mxu0 %v601
        %v2013 = vpop.f32.mrb[0].mxu0
        %v2014 = vadd.f32 %v1853, %v2013
        %v2015 = vpop.f32.mrb[0].mxu0
        %v2016 = vpop.f32.mrb[0].mxu0
        %v2017 = vadd.f32 %v1856, %v2016
        %v2018 = vpop.f32.mrb[0].mxu0
        %2019 = vmatprep.mubr.bf16.mxu0 0
        %2020 = vmatmul.mubr.bf16.gmra.mrb[0].mxu0 %v604
        %v2021 = vpop.f32.mrb[0].mxu0
        %v2022 = vadd.f32 %v1861, %v2021
        %v2023 = vpop.f32.mrb[0].mxu0
        %v2024 = vpop.f32.mrb[0].mxu0
        %v2025 = vadd.f32 %v1864, %v2024
        %v2026 = vpop.f32.mrb[0].mxu0
        %2027 = vmatprep.mubr.bf16.mxu0 0
        %2028 = vmatmul.mubr.bf16.gmra.mrb[0].mxu0 %v638
        %v2029 = vpop.f32.mrb[0].mxu0
        %v2030 = vadd.f32 %v1869, %v2029
        %v2031 = vpop.f32.mrb[0].mxu0
        %v2032 = vpop.f32.mrb[0].mxu0
        %v2033 = vadd.f32 %v1872, %v2032
        %v2034 = vpop.f32.mrb[0].mxu0
        %2035 = vmatprep.mubr.bf16.mxu0 0
        %2036 = vmatmul.mubr.bf16.gmra.mrb[0].mxu0 %v657
        %v2037 = vpop.f32.mrb[0].mxu0
        %v2038 = vadd.f32 %v1877, %v2037
        %v2039 = vpop.f32.mrb[0].mxu0
        %v2040 = vpop.f32.mrb[0].mxu0
        %v2041 = vadd.f32 %v1880, %v2040
        %v2042 = vpop.f32.mrb[0].mxu0
        %2043 = vdwg.mxu0
        %v2044 = vmul.f32 %v1918, 0.5
        %v2045 = vmul.f32 %v1921, 0.5
        %v2046 = vmul.f32 %v1926, 0.5
        %v2047 = vmul.f32 %v1929, 0.5
        %v2048 = vmul.f32 %v1934, 0.5
        %v2049 = vmul.f32 %v1937, 0.5
        %v2050 = vmul.f32 %v1942, 0.5
        %v2051 = vmul.f32 %v1945, 0.5
        %v2052 = vmul.f32 %v1950, 0.5
        %v2053 = vmul.f32 %v1953, 0.5
        %v2054 = vmul.f32 %v1958, 0.5
        %v2055 = vmul.f32 %v1961, 0.5
        %v2056 = vmul.f32 %v1966, 0.5
        %v2057 = vmul.f32 %v1969, 0.5
        %v2058 = vmul.f32 %v1974, 0.5
        %v2059 = vmul.f32 %v1977, 0.5
        %v2060 = vmul.f32 %v1982, 0.5
        %v2061 = vmul.f32 %v1985, 0.5
        %v2062 = vmul.f32 %v1990, 0.5
        %v2063 = vmul.f32 %v1993, 0.5
        %v2064 = vmul.f32 %v1998, 0.5
        %v2065 = vmul.f32 %v2001, 0.5
        %v2066 = vmul.f32 %v2006, 0.5
        %v2067 = vmul.f32 %v2009, 0.5
        %v2068 = vmul.f32 %v2014, 0.5
        %v2069 = vmul.f32 %v2017, 0.5
        %v2070 = vmul.f32 %v2022, 0.5
        %v2071 = vmul.f32 %v2025, 0.5
        %v2072 = vmul.f32 %v2030, 0.5
        %v2073 = vmul.f32 %v2033, 0.5
        %v2074 = vmul.f32 %v2038, 0.5
        %v2075 = vmul.f32 %v2041, 0.5
        %v2076 = vmul.f32 %v1918, 0.044715
        %v2077 = vmul.f32 %v1921, 0.044715
        %v2078 = vmul.f32 %v1926, 0.044715
        %v2079 = vmul.f32 %v1929, 0.044715
        %v2080 = vmul.f32 %v1934, 0.044715
        %v2081 = vmul.f32 %v1937, 0.044715
        %v2082 = vmul.f32 %v1942, 0.044715
        %v2083 = vmul.f32 %v1945, 0.044715
        %v2084 = vmul.f32 %v1950, 0.044715
        %v2085 = vmul.f32 %v1953, 0.044715
        %v2086 = vmul.f32 %v1958, 0.044715
        %v2087 = vmul.f32 %v1961, 0.044715
        %v2088 = vmul.f32 %v1966, 0.044715
        %v2089 = vmul.f32 %v1969, 0.044715
        %v2090 = vmul.f32 %v1974, 0.044715
        %v2091 = vmul.f32 %v1977, 0.044715
        %v2092 = vmul.f32 %v1982, 0.044715
        %v2093 = vmul.f32 %v1985, 0.044715
        %v2094 = vmul.f32 %v1990, 0.044715
        %v2095 = vmul.f32 %v1993, 0.044715
        %v2096 = vmul.f32 %v1998, 0.044715
        %v2097 = vmul.f32 %v2001, 0.044715
        %v2098 = vmul.f32 %v2006, 0.044715
        %v2099 = vmul.f32 %v2009, 0.044715
        %v2100 = vmul.f32 %v2014, 0.044715
        %v2101 = vmul.f32 %v2017, 0.044715
        %v2102 = vmul.f32 %v2022, 0.044715
        %v2103 = vmul.f32 %v2025, 0.044715
        %v2104 = vmul.f32 %v2030, 0.044715
        %v2105 = vmul.f32 %v2033, 0.044715
        %v2106 = vmul.f32 %v2038, 0.044715
        %v2107 = vmul.f32 %v2041, 0.044715
        %v2108 = vmul.f32 %v2076, %v1918
        %v2109 = vmul.f32 %v2077, %v1921
        %v2110 = vmul.f32 %v2078, %v1926
        %v2111 = vmul.f32 %v2079, %v1929
        %v2112 = vmul.f32 %v2080, %v1934
        %v2113 = vmul.f32 %v2081, %v1937
        %v2114 = vmul.f32 %v2082, %v1942
        %v2115 = vmul.f32 %v2083, %v1945
        %v2116 = vmul.f32 %v2084, %v1950
        %v2117 = vmul.f32 %v2085, %v1953
        %v2118 = vmul.f32 %v2086, %v1958
        %v2119 = vmul.f32 %v2087, %v1961
        %v2120 = vmul.f32 %v2088, %v1966
        %v2121 = vmul.f32 %v2089, %v1969
        %v2122 = vmul.f32 %v2090, %v1974
        %v2123 = vmul.f32 %v2091, %v1977
        %v2124 = vmul.f32 %v2092, %v1982
        %v2125 = vmul.f32 %v2093, %v1985
        %v2126 = vmul.f32 %v2094, %v1990
        %v2127 = vmul.f32 %v2095, %v1993
        %v2128 = vmul.f32 %v2096, %v1998
        %v2129 = vmul.f32 %v2097, %v2001
        %v2130 = vmul.f32 %v2098, %v2006
        %v2131 = vmul.f32 %v2099, %v2009
        %v2132 = vmul.f32 %v2100, %v2014
        %v2133 = vmul.f32 %v2101, %v2017
        %v2134 = vmul.f32 %v2102, %v2022
        %v2135 = vmul.f32 %v2103, %v2025
        %v2136 = vmul.f32 %v2104, %v2030
        %v2137 = vmul.f32 %v2105, %v2033
        %v2138 = vmul.f32 %v2106, %v2038
        %v2139 = vmul.f32 %v2107, %v2041
        %v2140 = vmul.f32 %v2108, %v1918
        %v2141 = vmul.f32 %v2109, %v1921
        %v2142 = vmul.f32 %v2110, %v1926
        %v2143 = vmul.f32 %v2111, %v1929
        %v2144 = vmul.f32 %v2112, %v1934
        %v2145 = vmul.f32 %v2113, %v1937
        %v2146 = vmul.f32 %v2114, %v1942
        %v2147 = vmul.f32 %v2115, %v1945
        %v2148 = vmul.f32 %v2116, %v1950
        %v2149 = vmul.f32 %v2117, %v1953
        %v2150 = vmul.f32 %v2118, %v1958
        %v2151 = vmul.f32 %v2119, %v1961
        %v2152 = vmul.f32 %v2120, %v1966
        %v2153 = vmul.f32 %v2121, %v1969
        %v2154 = vmul.f32 %v2122, %v1974
        %v2155 = vmul.f32 %v2123, %v1977
        %v2156 = vmul.f32 %v2124, %v1982
        %v2157 = vmul.f32 %v2125, %v1985
        %v2158 = vmul.f32 %v2126, %v1990
        %v2159 = vmul.f32 %v2127, %v1993
        %v2160 = vmul.f32 %v2128, %v1998
        %v2161 = vmul.f32 %v2129, %v2001
        %v2162 = vmul.f32 %v2130, %v2006
        %v2163 = vmul.f32 %v2131, %v2009
        %v2164 = vmul.f32 %v2132, %v2014
        %v2165 = vmul.f32 %v2133, %v2017
        %v2166 = vmul.f32 %v2134, %v2022
        %v2167 = vmul.f32 %v2135, %v2025
        %v2168 = vmul.f32 %v2136, %v2030
        %v2169 = vmul.f32 %v2137, %v2033
        %v2170 = vmul.f32 %v2138, %v2038
        %v2171 = vmul.f32 %v2139, %v2041
        %v2172 = vadd.f32 %v1918, %v2140
        %v2173 = vadd.f32 %v1921, %v2141
        %v2174 = vadd.f32 %v1926, %v2142
        %v2175 = vadd.f32 %v1929, %v2143
        %v2176 = vadd.f32 %v1934, %v2144
        %v2177 = vadd.f32 %v1937, %v2145
        %v2178 = vadd.f32 %v1942, %v2146
        %v2179 = vadd.f32 %v1945, %v2147
        %v2180 = vadd.f32 %v1950, %v2148
        %v2181 = vadd.f32 %v1953, %v2149
        %v2182 = vadd.f32 %v1958, %v2150
        %v2183 = vadd.f32 %v1961, %v2151
        %v2184 = vadd.f32 %v1966, %v2152
        %v2185 = vadd.f32 %v1969, %v2153
        %v2186 = vadd.f32 %v1974, %v2154
        %v2187 = vadd.f32 %v1977, %v2155
        %v2188 = vadd.f32 %v1982, %v2156
        %v2189 = vadd.f32 %v1985, %v2157
        %v2190 = vadd.f32 %v1990, %v2158
        %v2191 = vadd.f32 %v1993, %v2159
        %v2192 = vadd.f32 %v1998, %v2160
        %v2193 = vadd.f32 %v2001, %v2161
        %v2194 = vadd.f32 %v2006, %v2162
        %v2195 = vadd.f32 %v2009, %v2163
        %v2196 = vadd.f32 %v2014, %v2164
        %v2197 = vadd.f32 %v2017, %v2165
        %v2198 = vadd.f32 %v2022, %v2166
        %v2199 = vadd.f32 %v2025, %v2167
        %v2200 = vadd.f32 %v2030, %v2168
        %v2201 = vadd.f32 %v2033, %v2169
        %v2202 = vadd.f32 %v2038, %v2170
        %v2203 = vadd.f32 %v2041, %v2171
        %v2204 = vmul.f32 %v2172, 0.7978846
        %v2205 = vmul.f32 %v2173, 0.7978846
        %v2206 = vmul.f32 %v2174, 0.7978846
        %v2207 = vmul.f32 %v2175, 0.7978846
        %v2208 = vmul.f32 %v2176, 0.7978846
        %v2209 = vmul.f32 %v2177, 0.7978846
        %v2210 = vmul.f32 %v2178, 0.7978846
        %v2211 = vmul.f32 %v2179, 0.7978846
        %v2212 = vmul.f32 %v2180, 0.7978846
        %v2213 = vmul.f32 %v2181, 0.7978846
        %v2214 = vmul.f32 %v2182, 0.7978846
        %v2215 = vmul.f32 %v2183, 0.7978846
        %v2216 = vmul.f32 %v2184, 0.7978846
        %v2217 = vmul.f32 %v2185, 0.7978846
        %v2218 = vmul.f32 %v2186, 0.7978846
        %v2219 = vmul.f32 %v2187, 0.7978846
        %v2220 = vmul.f32 %v2188, 0.7978846
        %v2221 = vmul.f32 %v2189, 0.7978846
        %v2222 = vmul.f32 %v2190, 0.7978846
        %v2223 = vmul.f32 %v2191, 0.7978846
        %v2224 = vmul.f32 %v2192, 0.7978846
        %v2225 = vmul.f32 %v2193, 0.7978846
        %v2226 = vmul.f32 %v2194, 0.7978846
        %v2227 = vmul.f32 %v2195, 0.7978846
        %v2228 = vmul.f32 %v2196, 0.7978846
        %v2229 = vmul.f32 %v2197, 0.7978846
        %v2230 = vmul.f32 %v2198, 0.7978846
        %v2231 = vmul.f32 %v2199, 0.7978846
        %v2232 = vmul.f32 %v2200, 0.7978846
        %v2233 = vmul.f32 %v2201, 0.7978846
        %v2234 = vmul.f32 %v2202, 0.7978846
        %v2235 = vmul.f32 %v2203, 0.7978846
        %v2236 = vtanh.pop %v2204
        %v2237 = vtanh.pop %v2205
        %v2238 = vtanh.pop %v2206
        %v2239 = vtanh.pop %v2207
        %v2240 = vtanh.pop %v2208
        %v2241 = vtanh.pop %v2209
        %v2242 = vtanh.pop %v2210
        %v2243 = vtanh.pop %v2211
        %v2244 = vtanh.pop %v2212
        %v2245 = vtanh.pop %v2213
        %v2246 = vtanh.pop %v2214
        %v2247 = vtanh.pop %v2215
        %v2248 = vtanh.pop %v2216
        %v2249 = vtanh.pop %v2217
        %v2250 = vtanh.pop %v2218
        %v2251 = vtanh.pop %v2219
        %v2252 = vtanh.pop %v2220
        %v2253 = vtanh.pop %v2221
        %v2254 = vtanh.pop %v2222
        %v2255 = vtanh.pop %v2223
        %v2256 = vtanh.pop %v2224
        %v2257 = vtanh.pop %v2225
        %v2258 = vtanh.pop %v2226
        %v2259 = vtanh.pop %v2227
        %v2260 = vtanh.pop %v2228
        %v2261 = vtanh.pop %v2229
        %v2262 = vtanh.pop %v2230
        %v2263 = vtanh.pop %v2231
        %v2264 = vtanh.pop %v2232
        %v2265 = vtanh.pop %v2233
        %v2266 = vtanh.pop %v2234
        %v2267 = vtanh.pop %v2235
        %v2268 = vadd.f32 %v2236, 1.0
        %v2269 = vadd.f32 %v2237, 1.0
        %v2270 = vadd.f32 %v2238, 1.0
        %v2271 = vadd.f32 %v2239, 1.0
        %v2272 = vadd.f32 %v2240, 1.0
        %v2273 = vadd.f32 %v2241, 1.0
        %v2274 = vadd.f32 %v2242, 1.0
        %v2275 = vadd.f32 %v2243, 1.0
        %v2276 = vadd.f32 %v2244, 1.0
        %v2277 = vadd.f32 %v2245, 1.0
        %v2278 = vadd.f32 %v2246, 1.0
        %v2279 = vadd.f32 %v2247, 1.0
        %v2280 = vadd.f32 %v2248, 1.0
        %v2281 = vadd.f32 %v2249, 1.0
        %v2282 = vadd.f32 %v2250, 1.0
        %v2283 = vadd.f32 %v2251, 1.0
        %v2284 = vadd.f32 %v2252, 1.0
        %v2285 = vadd.f32 %v2253, 1.0
        %v2286 = vadd.f32 %v2254, 1.0
        %v2287 = vadd.f32 %v2255, 1.0
        %v2288 = vadd.f32 %v2256, 1.0
        %v2289 = vadd.f32 %v2257, 1.0
        %v2290 = vadd.f32 %v2258, 1.0
        %v2291 = vadd.f32 %v2259, 1.0
        %v2292 = vadd.f32 %v2260, 1.0
        %v2293 = vadd.f32 %v2261, 1.0
        %v2294 = vadd.f32 %v2262, 1.0
        %v2295 = vadd.f32 %v2263, 1.0
        %v2296 = vadd.f32 %v2264, 1.0
        %v2297 = vadd.f32 %v2265, 1.0
        %v2298 = vadd.f32 %v2266, 1.0
        %v2299 = vadd.f32 %v2267, 1.0
        %v2300 = vmul.f32 %v2044, %v2268
        %v2301 = vmul.f32 %v2045, %v2269
        %v2302 = vmul.f32 %v2046, %v2270
        %v2303 = vmul.f32 %v2047, %v2271
        %v2304 = vmul.f32 %v2048, %v2272
        %v2305 = vmul.f32 %v2049, %v2273
        %v2306 = vmul.f32 %v2050, %v2274
        %v2307 = vmul.f32 %v2051, %v2275
        %v2308 = vmul.f32 %v2052, %v2276
        %v2309 = vmul.f32 %v2053, %v2277
        %v2310 = vmul.f32 %v2054, %v2278
        %v2311 = vmul.f32 %v2055, %v2279
        %v2312 = vmul.f32 %v2056, %v2280
        %v2313 = vmul.f32 %v2057, %v2281
        %v2314 = vmul.f32 %v2058, %v2282
        %v2315 = vmul.f32 %v2059, %v2283
        %v2316 = vmul.f32 %v2060, %v2284
        %v2317 = vmul.f32 %v2061, %v2285
        %v2318 = vmul.f32 %v2062, %v2286
        %v2319 = vmul.f32 %v2063, %v2287
        %v2320 = vmul.f32 %v2064, %v2288
        %v2321 = vmul.f32 %v2065, %v2289
        %v2322 = vmul.f32 %v2066, %v2290
        %v2323 = vmul.f32 %v2067, %v2291
        %v2324 = vmul.f32 %v2068, %v2292
        %v2325 = vmul.f32 %v2069, %v2293
        %v2326 = vmul.f32 %v2070, %v2294
        %v2327 = vmul.f32 %v2071, %v2295
        %v2328 = vmul.f32 %v2072, %v2296
        %v2329 = vmul.f32 %v2073, %v2297
        %v2330 = vmul.f32 %v2074, %v2298
        %v2331 = vmul.f32 %v2075, %v2299
        %2332 = vst [vmem:[#allocation2] sm:$0xf] 0
        %2333 = vst [vmem:[#allocation2 + $0x4] sm:$0xf] 0
        %2334 = vst [vmem:[#allocation2 + $0x8] sm:$0x1] 0
        %s2335 = scalar_lea.vmem [#allocation2], 204
        %2336 = vst [vmem:[%s2335] sm:$0xf] 0
        %2337 = vst [vmem:[%s2335 + $0x4] sm:$0xf] 0
        %2338 = vst [vmem:[%s2335 + $0x8] sm:$0x1] 0
        %vm2339 = vcmask 1040384
        %vm2340 = vsmask.f32 256
        %vm2341 = vmand %vm2339, %vm2340
        %v2342 = vld [vmem:[#allocation2] sm:$0x1]
        %v2343 = vsel %vm2341, 0, %v2342
        %2344 = vst [vmem:[#allocation2] sm:$0x1] %v2343
        %v2345 = vld [vmem:[#allocation2 + $0xc] sm:$0x1]
        %v2346 = vsel %vm2341, 0, %v2345
        %2347 = vst [vmem:[#allocation2 + $0xc] sm:$0x1] %v2346
        %v2348 = vld [vmem:[#allocation2 + $0x18] sm:$0x1]
        %v2349 = vsel %vm2341, 0, %v2348
        %2350 = vst [vmem:[#allocation2 + $0x18] sm:$0x1] %v2349
        %v2351 = vld [vmem:[#allocation2 + $0x24] sm:$0x1]
        %v2352 = vsel %vm2341, 0, %v2351
        %2353 = vst [vmem:[#allocation2 + $0x24] sm:$0x1] %v2352
        %v2354 = vld [vmem:[#allocation2 + $0x30] sm:$0x1]
        %v2355 = vsel %vm2341, 0, %v2354
        %2356 = vst [vmem:[#allocation2 + $0x30] sm:$0x1] %v2355
        %v2357 = vld [vmem:[#allocation2 + $0x3c] sm:$0x1]
        %v2358 = vsel %vm2341, 0, %v2357
        %2359 = vst [vmem:[#allocation2 + $0x3c] sm:$0x1] %v2358
        %v2360 = vld [vmem:[#allocation2 + $0x48] sm:$0x1]
        %v2361 = vsel %vm2341, 0, %v2360
        %2362 = vst [vmem:[#allocation2 + $0x48] sm:$0x1] %v2361
        %v2363 = vld [vmem:[#allocation2 + $0x54] sm:$0x1]
        %v2364 = vsel %vm2341, 0, %v2363
        %2365 = vst [vmem:[#allocation2 + $0x54] sm:$0x1] %v2364
        %v2366 = vld [vmem:[#allocation2 + $0x60] sm:$0x1]
        %v2367 = vsel %vm2341, 0, %v2366
        %2368 = vst [vmem:[#allocation2 + $0x60] sm:$0x1] %v2367
        %v2369 = vld [vmem:[#allocation2 + $0x6c] sm:$0x1]
        %v2370 = vsel %vm2341, 0, %v2369
        %2371 = vst [vmem:[#allocation2 + $0x6c] sm:$0x1] %v2370
        %v2372 = vld [vmem:[#allocation2 + $0x78] sm:$0x1]
        %v2373 = vsel %vm2341, 0, %v2372
        %2374 = vst [vmem:[#allocation2 + $0x78] sm:$0x1] %v2373
        %v2375 = vld [vmem:[#allocation2 + $0x84] sm:$0x1]
        %v2376 = vsel %vm2341, 0, %v2375
        %2377 = vst [vmem:[#allocation2 + $0x84] sm:$0x1] %v2376
        %v2378 = vld [vmem:[#allocation2 + $0x90] sm:$0x1]
        %v2379 = vsel %vm2341, 0, %v2378
        %2380 = vst [vmem:[#allocation2 + $0x90] sm:$0x1] %v2379
        %v2381 = vld [vmem:[#allocation2 + $0x9c] sm:$0x1]
        %v2382 = vsel %vm2341, 0, %v2381
        %2383 = vst [vmem:[#allocation2 + $0x9c] sm:$0x1] %v2382
        %v2384 = vld [vmem:[#allocation2 + $0xa8] sm:$0x1]
        %v2385 = vsel %vm2341, 0, %v2384
        %2386 = vst [vmem:[#allocation2 + $0xa8] sm:$0x1] %v2385
        %v2387 = vld [vmem:[#allocation2 + $0xb4] sm:$0x1]
        %v2388 = vsel %vm2341, 0, %v2387
        %2389 = vst [vmem:[#allocation2 + $0xb4] sm:$0x1] %v2388
        %v2390 = vld [vmem:[#allocation2 + $0xc0] sm:$0x1]
        %v2391 = vsel %vm2341, 0, %v2390
        %2392 = vst [vmem:[#allocation2 + $0xc0] sm:$0x1] %v2391
        %v2393 = vld [vmem:[#allocation2 + $0xcc] sm:$0x1]
        %v2394 = vsel %vm2341, 0, %v2393
        %2395 = vst [vmem:[#allocation2 + $0xcc] sm:$0x1] %v2394
        %vm2396 = vsmask.f32 7938
        %vm2397 = vmand %vm2339, %vm2396
        %v2398 = vld [vmem:[#allocation2 + $0x8] sm:$0x1]
        %v2399 = vsel %vm2397, 0, %v2398
        %2400 = vst [vmem:[#allocation2 + $0x8] sm:$0x1] %v2399
        %v2401 = vld [vmem:[#allocation2 + $0x14] sm:$0x1]
        %v2402 = vsel %vm2397, 0, %v2401
        %2403 = vst [vmem:[#allocation2 + $0x14] sm:$0x1] %v2402
        %v2404 = vld [vmem:[#allocation2 + $0x20] sm:$0x1]
        %v2405 = vsel %vm2397, 0, %v2404
        %2406 = vst [vmem:[#allocation2 + $0x20] sm:$0x1] %v2405
        %v2407 = vld [vmem:[#allocation2 + $0x2c] sm:$0x1]
        %v2408 = vsel %vm2397, 0, %v2407
        %2409 = vst [vmem:[#allocation2 + $0x2c] sm:$0x1] %v2408
        %v2410 = vld [vmem:[#allocation2 + $0x38] sm:$0x1]
        %v2411 = vsel %vm2397, 0, %v2410
        %2412 = vst [vmem:[#allocation2 + $0x38] sm:$0x1] %v2411
        %v2413 = vld [vmem:[#allocation2 + $0x44] sm:$0x1]
        %v2414 = vsel %vm2397, 0, %v2413
        %2415 = vst [vmem:[#allocation2 + $0x44] sm:$0x1] %v2414
        %v2416 = vld [vmem:[#allocation2 + $0x50] sm:$0x1]
        %v2417 = vsel %vm2397, 0, %v2416
        %2418 = vst [vmem:[#allocation2 + $0x50] sm:$0x1] %v2417
        %v2419 = vld [vmem:[#allocation2 + $0x5c] sm:$0x1]
        %v2420 = vsel %vm2397, 0, %v2419
        %2421 = vst [vmem:[#allocation2 + $0x5c] sm:$0x1] %v2420
        %v2422 = vld [vmem:[#allocation2 + $0x68] sm:$0x1]
        %v2423 = vsel %vm2397, 0, %v2422
        %2424 = vst [vmem:[#allocation2 + $0x68] sm:$0x1] %v2423
        %v2425 = vld [vmem:[#allocation2 + $0x74] sm:$0x1]
        %v2426 = vsel %vm2397, 0, %v2425
        %2427 = vst [vmem:[#allocation2 + $0x74] sm:$0x1] %v2426
        %v2428 = vld [vmem:[#allocation2 + $0x80] sm:$0x1]
        %v2429 = vsel %vm2397, 0, %v2428
        %2430 = vst [vmem:[#allocation2 + $0x80] sm:$0x1] %v2429
        %v2431 = vld [vmem:[#allocation2 + $0x8c] sm:$0x1]
        %v2432 = vsel %vm2397, 0, %v2431
        %2433 = vst [vmem:[#allocation2 + $0x8c] sm:$0x1] %v2432
        %v2434 = vld [vmem:[#allocation2 + $0x98] sm:$0x1]
        %v2435 = vsel %vm2397, 0, %v2434
        %2436 = vst [vmem:[#allocation2 + $0x98] sm:$0x1] %v2435
        %v2437 = vld [vmem:[#allocation2 + $0xa4] sm:$0x1]
        %v2438 = vsel %vm2397, 0, %v2437
        %2439 = vst [vmem:[#allocation2 + $0xa4] sm:$0x1] %v2438
        %v2440 = vld [vmem:[#allocation2 + $0xb0] sm:$0x1]
        %v2441 = vsel %vm2397, 0, %v2440
        %2442 = vst [vmem:[#allocation2 + $0xb0] sm:$0x1] %v2441
        %v2443 = vld [vmem:[#allocation2 + $0xbc] sm:$0x1]
        %v2444 = vsel %vm2397, 0, %v2443
        %2445 = vst [vmem:[#allocation2 + $0xbc] sm:$0x1] %v2444
        %v2446 = vld [vmem:[#allocation2 + $0xc8] sm:$0x1]
        %v2447 = vsel %vm2397, 0, %v2446
        %2448 = vst [vmem:[#allocation2 + $0xc8] sm:$0x1] %v2447
        %v2449 = vld [vmem:[#allocation2 + $0xd4] sm:$0x1]
        %v2450 = vsel %vm2397, 0, %v2449
        %2451 = vst [vmem:[#allocation2 + $0xd4] sm:$0x1] %v2450
        %v2452 = vpack.c.bf16 %v2301, %v2300
        %v2453 = vpack.c.bf16 %v2303, %v2302
        %v2454 = vpack.c.bf16 %v2305, %v2304
        %v2455 = vpack.c.bf16 %v2307, %v2306
        %v2456 = vpack.c.bf16 %v2309, %v2308
        %v2457 = vpack.c.bf16 %v2311, %v2310
        %v2458 = vpack.c.bf16 %v2313, %v2312
        %v2459 = vpack.c.bf16 %v2315, %v2314
        %v2460 = vpack.c.bf16 %v2317, %v2316
        %v2461 = vpack.c.bf16 %v2319, %v2318
        %v2462 = vpack.c.bf16 %v2321, %v2320
        %v2463 = vpack.c.bf16 %v2323, %v2322
        %v2464 = vpack.c.bf16 %v2325, %v2324
        %v2465 = vpack.c.bf16 %v2327, %v2326
        %v2466 = vpack.c.bf16 %v2329, %v2328
        %v2467 = vpack.c.bf16 %v2331, %v2330
        %v2484 = vunpack.c.l.b16 %v2452
        %v2485 = vunpack.c.h.b16 %v2452
        %v2486 = vunpack.c.l.b16 %v2453
        %v2487 = vunpack.c.h.b16 %v2453
        %v2488 = vunpack.c.l.b16 %v2454
        %v2489 = vunpack.c.h.b16 %v2454
        %v2490 = vunpack.c.l.b16 %v2455
        %v2491 = vunpack.c.h.b16 %v2455
        %v2492 = vunpack.c.l.b16 %v2456
        %v2493 = vunpack.c.h.b16 %v2456
        %v2494 = vunpack.c.l.b16 %v2457
        %v2495 = vunpack.c.h.b16 %v2457
        %v2496 = vunpack.c.l.b16 %v2458
        %v2497 = vunpack.c.h.b16 %v2458
        %v2498 = vunpack.c.l.b16 %v2459
        %v2499 = vunpack.c.h.b16 %v2459
        %v2500 = vunpack.c.l.b16 %v2460
        %v2501 = vunpack.c.h.b16 %v2460
        %v2502 = vunpack.c.l.b16 %v2461
        %v2503 = vunpack.c.h.b16 %v2461
        %v2504 = vunpack.c.l.b16 %v2462
        %v2505 = vunpack.c.h.b16 %v2462
        %v2506 = vunpack.c.l.b16 %v2463
        %v2507 = vunpack.c.h.b16 %v2463
        %v2508 = vunpack.c.l.b16 %v2464
        %v2509 = vunpack.c.h.b16 %v2464
        %v2510 = vunpack.c.l.b16 %v2465
        %v2511 = vunpack.c.h.b16 %v2465
        %v2512 = vunpack.c.l.b16 %v2466
        %v2513 = vunpack.c.h.b16 %v2466
        %v2514 = vunpack.c.l.b16 %v2467
        %v2515 = vunpack.c.h.b16 %v2467
        %v2516 = vpack.c.b16 %v2484, %v2484
        %v2517 = vpack.c.b16 %v2485, %v2485
        %v2518 = vpack.c.b16 %v2486, %v2486
        %v2519 = vpack.c.b16 %v2487, %v2487
        %v2520 = vpack.c.b16 %v2488, %v2488
        %v2521 = vpack.c.b16 %v2489, %v2489
        %v2522 = vpack.c.b16 %v2490, %v2490
        %v2523 = vpack.c.b16 %v2491, %v2491
        %v2524 = vpack.c.b16 %v2492, %v2492
        %v2525 = vpack.c.b16 %v2493, %v2493
        %v2526 = vpack.c.b16 %v2494, %v2494
        %v2527 = vpack.c.b16 %v2495, %v2495
        %v2528 = vpack.c.b16 %v2496, %v2496
        %v2529 = vpack.c.b16 %v2497, %v2497
        %v2530 = vpack.c.b16 %v2498, %v2498
        %v2531 = vpack.c.b16 %v2499, %v2499
        %v2532 = vpack.c.b16 %v2500, %v2500
        %v2533 = vpack.c.b16 %v2501, %v2501
        %v2534 = vpack.c.b16 %v2502, %v2502
        %v2535 = vpack.c.b16 %v2503, %v2503
        %v2536 = vpack.c.b16 %v2504, %v2504
        %v2537 = vpack.c.b16 %v2505, %v2505
        %v2538 = vpack.c.b16 %v2506, %v2506
        %v2539 = vpack.c.b16 %v2507, %v2507
        %v2540 = vpack.c.b16 %v2508, %v2508
        %v2541 = vpack.c.b16 %v2509, %v2509
        %v2542 = vpack.c.b16 %v2510, %v2510
        %v2543 = vpack.c.b16 %v2511, %v2511
        %v2544 = vpack.c.b16 %v2512, %v2512
        %v2545 = vpack.c.b16 %v2513, %v2513
        %v2546 = vpack.c.b16 %v2514, %v2514
        %v2547 = vpack.c.b16 %v2515, %v2515
        %vm2548 = vsmask.f32 4368
        %vm2549 = vmor %vm2340, %vm2548
        %v2551 = vshrl.u32 %v2516, 16
        %v2553 = vrot.slane %v2551, 7
        %v2554 = vshll.u32 %v2516, 16
        %v2556 = vor.u32 %v2553, %v2554
        %v2557 = vrot.slane %v2553, 4
        %v2559 = vshrl.u32 %v2517, 16
        %v2561 = vrot.slane %v2559, 7
        %v2562 = vshll.u32 %v2517, 16
        %v2564 = vor.u32 %v2561, %v2562
        %v2565 = vsel %vm2549, %v2557, %v2564
        %v2566 = vrot.slane %v2561, 4
        %v2568 = vshrl.u32 %v2518, 16
        %v2570 = vrot.slane %v2568, 7
        %v2571 = vshll.u32 %v2518, 16
        %v2573 = vor.u32 %v2570, %v2571
        %v2574 = vrot.slane %v2570, 4
        %v2576 = vshrl.u32 %v2519, 16
        %v2578 = vrot.slane %v2576, 7
        %v2579 = vshll.u32 %v2519, 16
        %v2581 = vor.u32 %v2578, %v2579
        %v2582 = vsel %vm2549, %v2574, %v2581
        %v2583 = vrot.slane %v2578, 4
        %v2585 = vshrl.u32 %v2520, 16
        %v2587 = vrot.slane %v2585, 7
        %v2588 = vshll.u32 %v2520, 16
        %v2590 = vor.u32 %v2587, %v2588
        %v2591 = vrot.slane %v2587, 4
        %v2593 = vshrl.u32 %v2521, 16
        %v2595 = vrot.slane %v2593, 7
        %v2596 = vshll.u32 %v2521, 16
        %v2598 = vor.u32 %v2595, %v2596
        %v2599 = vsel %vm2549, %v2591, %v2598
        %v2600 = vrot.slane %v2595, 4
        %v2602 = vshrl.u32 %v2522, 16
        %v2604 = vrot.slane %v2602, 7
        %v2605 = vshll.u32 %v2522, 16
        %v2607 = vor.u32 %v2604, %v2605
        %v2608 = vrot.slane %v2604, 4
        %v2610 = vshrl.u32 %v2523, 16
        %v2612 = vrot.slane %v2610, 7
        %v2613 = vshll.u32 %v2523, 16
        %v2615 = vor.u32 %v2612, %v2613
        %v2616 = vsel %vm2549, %v2608, %v2615
        %v2617 = vrot.slane %v2612, 4
        %v2619 = vshrl.u32 %v2524, 16
        %v2621 = vrot.slane %v2619, 7
        %v2622 = vshll.u32 %v2524, 16
        %v2624 = vor.u32 %v2621, %v2622
        %v2625 = vrot.slane %v2621, 4
        %v2627 = vshrl.u32 %v2525, 16
        %v2629 = vrot.slane %v2627, 7
        %v2630 = vshll.u32 %v2525, 16
        %v2632 = vor.u32 %v2629, %v2630
        %v2633 = vsel %vm2549, %v2625, %v2632
        %v2634 = vrot.slane %v2629, 4
        %v2636 = vshrl.u32 %v2526, 16
        %v2638 = vrot.slane %v2636, 7
        %v2639 = vshll.u32 %v2526, 16
        %v2641 = vor.u32 %v2638, %v2639
        %v2642 = vrot.slane %v2638, 4
        %v2644 = vshrl.u32 %v2527, 16
        %v2646 = vrot.slane %v2644, 7
        %v2647 = vshll.u32 %v2527, 16
        %v2649 = vor.u32 %v2646, %v2647
        %v2650 = vsel %vm2549, %v2642, %v2649
        %v2651 = vrot.slane %v2646, 4
        %v2653 = vshrl.u32 %v2528, 16
        %v2655 = vrot.slane %v2653, 7
        %v2656 = vshll.u32 %v2528, 16
        %v2658 = vor.u32 %v2655, %v2656
        %v2659 = vrot.slane %v2655, 4
        %v2661 = vshrl.u32 %v2529, 16
        %v2663 = vrot.slane %v2661, 7
        %v2664 = vshll.u32 %v2529, 16
        %v2666 = vor.u32 %v2663, %v2664
        %v2667 = vsel %vm2549, %v2659, %v2666
        %v2668 = vrot.slane %v2663, 4
        %v2670 = vshrl.u32 %v2530, 16
        %v2672 = vrot.slane %v2670, 7
        %v2673 = vshll.u32 %v2530, 16
        %v2675 = vor.u32 %v2672, %v2673
        %v2676 = vrot.slane %v2672, 4
        %v2678 = vshrl.u32 %v2531, 16
        %v2680 = vrot.slane %v2678, 7
        %v2681 = vshll.u32 %v2531, 16
        %v2683 = vor.u32 %v2680, %v2681
        %v2684 = vsel %vm2549, %v2676, %v2683
        %v2685 = vrot.slane %v2680, 4
        %v2687 = vshrl.u32 %v2532, 16
        %v2689 = vrot.slane %v2687, 7
        %v2690 = vshll.u32 %v2532, 16
        %v2692 = vor.u32 %v2689, %v2690
        %v2693 = vrot.slane %v2689, 4
        %v2695 = vshrl.u32 %v2533, 16
        %v2697 = vrot.slane %v2695, 7
        %v2698 = vshll.u32 %v2533, 16
        %v2700 = vor.u32 %v2697, %v2698
        %v2701 = vsel %vm2549, %v2693, %v2700
        %v2702 = vrot.slane %v2697, 4
        %v2704 = vshrl.u32 %v2534, 16
        %v2706 = vrot.slane %v2704, 7
        %v2707 = vshll.u32 %v2534, 16
        %v2709 = vor.u32 %v2706, %v2707
        %v2710 = vrot.slane %v2706, 4
        %v2712 = vshrl.u32 %v2535, 16
        %v2714 = vrot.slane %v2712, 7
        %v2715 = vshll.u32 %v2535, 16
        %v2717 = vor.u32 %v2714, %v2715
        %v2718 = vsel %vm2549, %v2710, %v2717
        %v2719 = vrot.slane %v2714, 4
        %v2721 = vshrl.u32 %v2536, 16
        %v2723 = vrot.slane %v2721, 7
        %v2724 = vshll.u32 %v2536, 16
        %v2726 = vor.u32 %v2723, %v2724
        %v2727 = vrot.slane %v2723, 4
        %v2729 = vshrl.u32 %v2537, 16
        %v2731 = vrot.slane %v2729, 7
        %v2732 = vshll.u32 %v2537, 16
        %v2734 = vor.u32 %v2731, %v2732
        %v2735 = vsel %vm2549, %v2727, %v2734
        %v2736 = vrot.slane %v2731, 4
        %v2738 = vshrl.u32 %v2538, 16
        %v2740 = vrot.slane %v2738, 7
        %v2741 = vshll.u32 %v2538, 16
        %v2743 = vor.u32 %v2740, %v2741
        %v2744 = vrot.slane %v2740, 4
        %v2746 = vshrl.u32 %v2539, 16
        %v2748 = vrot.slane %v2746, 7
        %v2749 = vshll.u32 %v2539, 16
        %v2751 = vor.u32 %v2748, %v2749
        %v2752 = vsel %vm2549, %v2744, %v2751
        %v2753 = vrot.slane %v2748, 4
        %v2755 = vshrl.u32 %v2540, 16
        %v2757 = vrot.slane %v2755, 7
        %v2758 = vshll.u32 %v2540, 16
        %v2760 = vor.u32 %v2757, %v2758
        %v2761 = vrot.slane %v2757, 4
        %v2763 = vshrl.u32 %v2541, 16
        %v2765 = vrot.slane %v2763, 7
        %v2766 = vshll.u32 %v2541, 16
        %v2768 = vor.u32 %v2765, %v2766
        %v2769 = vsel %vm2549, %v2761, %v2768
        %v2770 = vrot.slane %v2765, 4
        %v2772 = vshrl.u32 %v2542, 16
        %v2774 = vrot.slane %v2772, 7
        %v2775 = vshll.u32 %v2542, 16
        %v2777 = vor.u32 %v2774, %v2775
        %v2778 = vrot.slane %v2774, 4
        %v2780 = vshrl.u32 %v2543, 16
        %v2782 = vrot.slane %v2780, 7
        %v2783 = vshll.u32 %v2543, 16
        %v2785 = vor.u32 %v2782, %v2783
        %v2786 = vsel %vm2549, %v2778, %v2785
        %v2787 = vrot.slane %v2782, 4
        %v2789 = vshrl.u32 %v2544, 16
        %v2791 = vrot.slane %v2789, 7
        %v2792 = vshll.u32 %v2544, 16
        %v2794 = vor.u32 %v2791, %v2792
        %v2795 = vrot.slane %v2791, 4
        %v2797 = vshrl.u32 %v2545, 16
        %v2799 = vrot.slane %v2797, 7
        %v2800 = vshll.u32 %v2545, 16
        %v2802 = vor.u32 %v2799, %v2800
        %v2803 = vsel %vm2549, %v2795, %v2802
        %v2804 = vrot.slane %v2799, 4
        %v2806 = vshrl.u32 %v2546, 16
        %v2808 = vrot.slane %v2806, 7
        %v2809 = vshll.u32 %v2546, 16
        %v2811 = vor.u32 %v2808, %v2809
        %v2812 = vrot.slane %v2808, 4
        %v2814 = vshrl.u32 %v2547, 16
        %v2816 = vrot.slane %v2814, 7
        %v2817 = vshll.u32 %v2547, 16
        %v2819 = vor.u32 %v2816, %v2817
        %v2820 = vsel %vm2549, %v2812, %v2819
        %v2821 = vrot.slane %v2816, 4
        %s2870 = scalar_lea.vmem [#allocation2], 12
        %vm2871 = vcmask 1043456
        %vm2872 = vmand %vm2871, %vm2396
        %v2873 = vld [vmem:[%s2870] sm:$0xf]
        %v2874 = vsel %vm2872, %v2556, %v2873
        %2875 = vst [vmem:[%s2870] sm:$0xf] %v2874
        %2876 = vst [vmem:[%s2870 + $0x4] sm:$0xf] %v2565
        %v2877 = vld [vmem:[%s2870 + $0x8] sm:$0x1]
        %v2878 = vsel %vm2341, %v2566, %v2877
        %2879 = vst [vmem:[%s2870 + $0x8] sm:$0x1] %v2878
        %v2880 = vld [vmem:[%s2870 + $0xc] sm:$0xf]
        %v2881 = vsel %vm2872, %v2573, %v2880
        %2882 = vst [vmem:[%s2870 + $0xc] sm:$0xf] %v2881
        %2883 = vst [vmem:[%s2870 + $0x10] sm:$0xf] %v2582
        %v2884 = vld [vmem:[%s2870 + $0x14] sm:$0x1]
        %v2885 = vsel %vm2341, %v2583, %v2884
        %2886 = vst [vmem:[%s2870 + $0x14] sm:$0x1] %v2885
        %v2887 = vld [vmem:[%s2870 + $0x18] sm:$0xf]
        %v2888 = vsel %vm2872, %v2590, %v2887
        %2889 = vst [vmem:[%s2870 + $0x18] sm:$0xf] %v2888
        %2890 = vst [vmem:[%s2870 + $0x1c] sm:$0xf] %v2599
        %v2891 = vld [vmem:[%s2870 + $0x20] sm:$0x1]
        %v2892 = vsel %vm2341, %v2600, %v2891
        %2893 = vst [vmem:[%s2870 + $0x20] sm:$0x1] %v2892
        %v2894 = vld [vmem:[%s2870 + $0x24] sm:$0xf]
        %v2895 = vsel %vm2872, %v2607, %v2894
        %2896 = vst [vmem:[%s2870 + $0x24] sm:$0xf] %v2895
        %2897 = vst [vmem:[%s2870 + $0x28] sm:$0xf] %v2616
        %v2898 = vld [vmem:[%s2870 + $0x2c] sm:$0x1]
        %v2899 = vsel %vm2341, %v2617, %v2898
        %2900 = vst [vmem:[%s2870 + $0x2c] sm:$0x1] %v2899
        %v2901 = vld [vmem:[%s2870 + $0x30] sm:$0xf]
        %v2902 = vsel %vm2872, %v2624, %v2901
        %2903 = vst [vmem:[%s2870 + $0x30] sm:$0xf] %v2902
        %2904 = vst [vmem:[%s2870 + $0x34] sm:$0xf] %v2633
        %v2905 = vld [vmem:[%s2870 + $0x38] sm:$0x1]
        %v2906 = vsel %vm2341, %v2634, %v2905
        %2907 = vst [vmem:[%s2870 + $0x38] sm:$0x1] %v2906
        %v2908 = vld [vmem:[%s2870 + $0x3c] sm:$0xf]
        %v2909 = vsel %vm2872, %v2641, %v2908
        %2910 = vst [vmem:[%s2870 + $0x3c] sm:$0xf] %v2909
        %2911 = vst [vmem:[%s2870 + $0x40] sm:$0xf] %v2650
        %v2912 = vld [vmem:[%s2870 + $0x44] sm:$0x1]
        %v2913 = vsel %vm2341, %v2651, %v2912
        %2914 = vst [vmem:[%s2870 + $0x44] sm:$0x1] %v2913
        %v2915 = vld [vmem:[%s2870 + $0x48] sm:$0xf]
        %v2916 = vsel %vm2872, %v2658, %v2915
        %2917 = vst [vmem:[%s2870 + $0x48] sm:$0xf] %v2916
        %2918 = vst [vmem:[%s2870 + $0x4c] sm:$0xf] %v2667
        %v2919 = vld [vmem:[%s2870 + $0x50] sm:$0x1]
        %v2920 = vsel %vm2341, %v2668, %v2919
        %2921 = vst [vmem:[%s2870 + $0x50] sm:$0x1] %v2920
        %v2922 = vld [vmem:[%s2870 + $0x54] sm:$0xf]
        %v2923 = vsel %vm2872, %v2675, %v2922
        %2924 = vst [vmem:[%s2870 + $0x54] sm:$0xf] %v2923
        %2925 = vst [vmem:[%s2870 + $0x58] sm:$0xf] %v2684
        %v2926 = vld [vmem:[%s2870 + $0x5c] sm:$0x1]
        %v2927 = vsel %vm2341, %v2685, %v2926
        %2928 = vst [vmem:[%s2870 + $0x5c] sm:$0x1] %v2927
        %v2929 = vld [vmem:[%s2870 + $0x60] sm:$0xf]
        %v2930 = vsel %vm2872, %v2692, %v2929
        %2931 = vst [vmem:[%s2870 + $0x60] sm:$0xf] %v2930
        %2932 = vst [vmem:[%s2870 + $0x64] sm:$0xf] %v2701
        %v2933 = vld [vmem:[%s2870 + $0x68] sm:$0x1]
        %v2934 = vsel %vm2341, %v2702, %v2933
        %2935 = vst [vmem:[%s2870 + $0x68] sm:$0x1] %v2934
        %v2936 = vld [vmem:[%s2870 + $0x6c] sm:$0xf]
        %v2937 = vsel %vm2872, %v2709, %v2936
        %2938 = vst [vmem:[%s2870 + $0x6c] sm:$0xf] %v2937
        %2939 = vst [vmem:[%s2870 + $0x70] sm:$0xf] %v2718
        %v2940 = vld [vmem:[%s2870 + $0x74] sm:$0x1]
        %v2941 = vsel %vm2341, %v2719, %v2940
        %2942 = vst [vmem:[%s2870 + $0x74] sm:$0x1] %v2941
        %v2943 = vld [vmem:[%s2870 + $0x78] sm:$0xf]
        %v2944 = vsel %vm2872, %v2726, %v2943
        %2945 = vst [vmem:[%s2870 + $0x78] sm:$0xf] %v2944
        %2946 = vst [vmem:[%s2870 + $0x7c] sm:$0xf] %v2735
        %v2947 = vld [vmem:[%s2870 + $0x80] sm:$0x1]
        %v2948 = vsel %vm2341, %v2736, %v2947
        %2949 = vst [vmem:[%s2870 + $0x80] sm:$0x1] %v2948
        %v2950 = vld [vmem:[%s2870 + $0x84] sm:$0xf]
        %v2951 = vsel %vm2872, %v2743, %v2950
        %2952 = vst [vmem:[%s2870 + $0x84] sm:$0xf] %v2951
        %2953 = vst [vmem:[%s2870 + $0x88] sm:$0xf] %v2752
        %v2954 = vld [vmem:[%s2870 + $0x8c] sm:$0x1]
        %v2955 = vsel %vm2341, %v2753, %v2954
        %2956 = vst [vmem:[%s2870 + $0x8c] sm:$0x1] %v2955
        %v2957 = vld [vmem:[%s2870 + $0x90] sm:$0xf]
        %v2958 = vsel %vm2872, %v2760, %v2957
        %2959 = vst [vmem:[%s2870 + $0x90] sm:$0xf] %v2958
        %2960 = vst [vmem:[%s2870 + $0x94] sm:$0xf] %v2769
        %v2961 = vld [vmem:[%s2870 + $0x98] sm:$0x1]
        %v2962 = vsel %vm2341, %v2770, %v2961
        %2963 = vst [vmem:[%s2870 + $0x98] sm:$0x1] %v2962
        %v2964 = vld [vmem:[%s2870 + $0x9c] sm:$0xf]
        %v2965 = vsel %vm2872, %v2777, %v2964
        %2966 = vst [vmem:[%s2870 + $0x9c] sm:$0xf] %v2965
        %2967 = vst [vmem:[%s2870 + $0xa0] sm:$0xf] %v2786
        %v2968 = vld [vmem:[%s2870 + $0xa4] sm:$0x1]
        %v2969 = vsel %vm2341, %v2787, %v2968
        %2970 = vst [vmem:[%s2870 + $0xa4] sm:$0x1] %v2969
        %v2971 = vld [vmem:[%s2870 + $0xa8] sm:$0xf]
        %v2972 = vsel %vm2872, %v2794, %v2971
        %2973 = vst [vmem:[%s2870 + $0xa8] sm:$0xf] %v2972
        %2974 = vst [vmem:[%s2870 + $0xac] sm:$0xf] %v2803
        %v2975 = vld [vmem:[%s2870 + $0xb0] sm:$0x1]
        %v2976 = vsel %vm2341, %v2804, %v2975
        %2977 = vst [vmem:[%s2870 + $0xb0] sm:$0x1] %v2976
        %v2978 = vld [vmem:[%s2870 + $0xb4] sm:$0xf]
        %v2979 = vsel %vm2872, %v2811, %v2978
        %2980 = vst [vmem:[%s2870 + $0xb4] sm:$0xf] %v2979
        %2981 = vst [vmem:[%s2870 + $0xb8] sm:$0xf] %v2820
        %v2982 = vld [vmem:[%s2870 + $0xbc] sm:$0x1]
        %v2983 = vsel %vm2341, %v2821, %v2982
        %2984 = vst [vmem:[%s2870 + $0xbc] sm:$0x1] %v2983
        %v2985 = vld [vmem:[#allocation2] sm:$0xf]
        %v2986 = vld [vmem:[#allocation2 + $0x4] sm:$0xf]
        %v2987 = vld [vmem:[#allocation2 + $0xc] sm:$0xf]
        %v2988 = vld [vmem:[#allocation2 + $0x10] sm:$0xf]
        %v2989 = vld [vmem:[#allocation2 + $0x18] sm:$0xf]
        %v2990 = vld [vmem:[#allocation2 + $0x1c] sm:$0xf]
        %v2991 = vld [vmem:[#allocation2 + $0x24] sm:$0xf]
        %v2992 = vld [vmem:[#allocation2 + $0x28] sm:$0xf]
        %v2993 = vld [vmem:[#allocation2 + $0x30] sm:$0xf]
        %v2994 = vld [vmem:[#allocation2 + $0x34] sm:$0xf]
        %v2995 = vld [vmem:[#allocation2 + $0x3c] sm:$0xf]
        %v2996 = vld [vmem:[#allocation2 + $0x40] sm:$0xf]
        %v2997 = vld [vmem:[#allocation2 + $0x48] sm:$0xf]
        %v2998 = vld [vmem:[#allocation2 + $0x4c] sm:$0xf]
        %v2999 = vld [vmem:[#allocation2 + $0x54] sm:$0xf]
        %v3000 = vld [vmem:[#allocation2 + $0x58] sm:$0xf]
        %v3001 = vld [vmem:[#allocation2 + $0x60] sm:$0xf]
        %v3002 = vld [vmem:[#allocation2 + $0x64] sm:$0xf]
        %v3003 = vld [vmem:[#allocation2 + $0x6c] sm:$0xf]
        %v3004 = vld [vmem:[#allocation2 + $0x70] sm:$0xf]
        %v3005 = vld [vmem:[#allocation2 + $0x78] sm:$0xf]
        %v3006 = vld [vmem:[#allocation2 + $0x7c] sm:$0xf]
        %v3007 = vld [vmem:[#allocation2 + $0x84] sm:$0xf]
        %v3008 = vld [vmem:[#allocation2 + $0x88] sm:$0xf]
        %v3009 = vld [vmem:[#allocation2 + $0x90] sm:$0xf]
        %v3010 = vld [vmem:[#allocation2 + $0x94] sm:$0xf]
        %v3011 = vld [vmem:[#allocation2 + $0x9c] sm:$0xf]
        %v3012 = vld [vmem:[#allocation2 + $0xa0] sm:$0xf]
        %v3013 = vld [vmem:[#allocation2 + $0xa8] sm:$0xf]
        %v3014 = vld [vmem:[#allocation2 + $0xac] sm:$0xf]
        %v3015 = vld [vmem:[#allocation2 + $0xb4] sm:$0xf]
        %v3016 = vld [vmem:[#allocation2 + $0xb8] sm:$0xf]
        %v3017 = vld [vmem:[#allocation2 + $0xc0] sm:$0xf]
        %v3018 = vld [vmem:[#allocation2 + $0xc4] sm:$0xf]
        %v3019 = vld [vmem:[#allocation2 + $0xcc] sm:$0xf]
        %v3020 = vld [vmem:[#allocation2 + $0xd0] sm:$0xf]
        %v3021 = vld [vmem:[#allocation2 + $0x8] sm:$0x1]
        %v3022 = vld [vmem:[#allocation2 + $0x14] sm:$0x1]
        %v3023 = vld [vmem:[#allocation2 + $0x20] sm:$0x1]
        %v3024 = vld [vmem:[#allocation2 + $0x2c] sm:$0x1]
        %v3025 = vld [vmem:[#allocation2 + $0x38] sm:$0x1]
        %v3026 = vld [vmem:[#allocation2 + $0x44] sm:$0x1]
        %v3027 = vld [vmem:[#allocation2 + $0x50] sm:$0x1]
        %v3028 = vld [vmem:[#allocation2 + $0x5c] sm:$0x1]
        %v3029 = vld [vmem:[#allocation2 + $0x68] sm:$0x1]
        %v3030 = vld [vmem:[#allocation2 + $0x74] sm:$0x1]
        %v3031 = vld [vmem:[#allocation2 + $0x80] sm:$0x1]
        %v3032 = vld [vmem:[#allocation2 + $0x8c] sm:$0x1]
        %v3033 = vld [vmem:[#allocation2 + $0x98] sm:$0x1]
        %v3034 = vld [vmem:[#allocation2 + $0xa4] sm:$0x1]
        %v3035 = vld [vmem:[#allocation2 + $0xb0] sm:$0x1]
        %v3036 = vld [vmem:[#allocation2 + $0xbc] sm:$0x1]
        %v3037 = vld [vmem:[#allocation2 + $0xc8] sm:$0x1]
        %v3038 = vld [vmem:[#allocation2 + $0xd4] sm:$0x1]
        %v3039 = vld [vmem:[#allocation2] sm:$0xe]
        %v3040 = vld [vmem:[#allocation2 + $0xc] sm:$0xe]
        %v3041 = vld [vmem:[#allocation2 + $0x18] sm:$0xe]
        %v3042 = vld [vmem:[#allocation2 + $0x24] sm:$0xe]
        %v3043 = vld [vmem:[#allocation2 + $0x30] sm:$0xe]
        %v3044 = vld [vmem:[#allocation2 + $0x3c] sm:$0xe]
        %v3045 = vld [vmem:[#allocation2 + $0x48] sm:$0xe]
        %v3046 = vld [vmem:[#allocation2 + $0x54] sm:$0xe]
        %v3047 = vld [vmem:[#allocation2 + $0x60] sm:$0xe]
        %v3048 = vld [vmem:[#allocation2 + $0x6c] sm:$0xe]
        %v3049 = vld [vmem:[#allocation2 + $0x78] sm:$0xe]
        %v3050 = vld [vmem:[#allocation2 + $0x84] sm:$0xe]
        %v3051 = vld [vmem:[#allocation2 + $0x90] sm:$0xe]
        %v3052 = vld [vmem:[#allocation2 + $0x9c] sm:$0xe]
        %v3053 = vld [vmem:[#allocation2 + $0xa8] sm:$0xe]
        %v3054 = vld [vmem:[#allocation2 + $0xb4] sm:$0xe]
        %v3055 = vld [vmem:[#allocation2 + $0xc0] sm:$0xe]
        %v3056 = vld [vmem:[#allocation2 + $0xcc] sm:$0xe]
        %vm3057 = vsmask.f32 3328
        %vm3058 = vsmask.f32 7440
        %vm3059 = vmor %vm3057, %vm3058
        %v3061 = vshrl.u32 %v2985, 16
        %v3063 = vrot.slane %v3061, 4
        %v3064 = vshll.u32 %v2985, 16
        %v3066 = vrot.slane %v3064, 5
        %v3067 = vor.u32 %v3063, %v3066
        %v3068 = vrot.slane %v3067, 4
        %v3070 = vshll.u32 %v2986, 16
        %v3072 = vrot.slane %v3070, 5
        %v3073 = vsel %vm3059, %v3068, %v3072
        %v3074 = vshrl.u32 %v2986, 16
        %v3076 = vrot.slane %v3074, 4
        %v3077 = vor.u32 %v3076, %v3072
        %v3078 = vrot.slane %v3077, 4
        %v3080 = vshll.u32 %v3021, 16
        %v3082 = vrot.slane %v3080, 5
        %v3083 = vsel %vm3059, %v3078, %v3082
        %v3085 = vshrl.u32 %v2987, 16
        %v3087 = vrot.slane %v3085, 4
        %v3088 = vshll.u32 %v2987, 16
        %v3090 = vrot.slane %v3088, 5
        %v3091 = vor.u32 %v3087, %v3090
        %v3092 = vrot.slane %v3091, 4
        %v3094 = vshll.u32 %v2988, 16
        %v3096 = vrot.slane %v3094, 5
        %v3097 = vsel %vm3059, %v3092, %v3096
        %v3098 = vshrl.u32 %v2988, 16
        %v3100 = vrot.slane %v3098, 4
        %v3101 = vor.u32 %v3100, %v3096
        %v3102 = vrot.slane %v3101, 4
        %v3104 = vshll.u32 %v3022, 16
        %v3106 = vrot.slane %v3104, 5
        %v3107 = vsel %vm3059, %v3102, %v3106
        %v3109 = vshrl.u32 %v2989, 16
        %v3111 = vrot.slane %v3109, 4
        %v3112 = vshll.u32 %v2989, 16
        %v3114 = vrot.slane %v3112, 5
        %v3115 = vor.u32 %v3111, %v3114
        %v3116 = vrot.slane %v3115, 4
        %v3118 = vshll.u32 %v2990, 16
        %v3120 = vrot.slane %v3118, 5
        %v3121 = vsel %vm3059, %v3116, %v3120
        %v3122 = vshrl.u32 %v2990, 16
        %v3124 = vrot.slane %v3122, 4
        %v3125 = vor.u32 %v3124, %v3120
        %v3126 = vrot.slane %v3125, 4
        %v3128 = vshll.u32 %v3023, 16
        %v3130 = vrot.slane %v3128, 5
        %v3131 = vsel %vm3059, %v3126, %v3130
        %v3133 = vshrl.u32 %v2991, 16
        %v3135 = vrot.slane %v3133, 4
        %v3136 = vshll.u32 %v2991, 16
        %v3138 = vrot.slane %v3136, 5
        %v3139 = vor.u32 %v3135, %v3138
        %v3140 = vrot.slane %v3139, 4
        %v3142 = vshll.u32 %v2992, 16
        %v3144 = vrot.slane %v3142, 5
        %v3145 = vsel %vm3059, %v3140, %v3144
        %v3146 = vshrl.u32 %v2992, 16
        %v3148 = vrot.slane %v3146, 4
        %v3149 = vor.u32 %v3148, %v3144
        %v3150 = vrot.slane %v3149, 4
        %v3152 = vshll.u32 %v3024, 16
        %v3154 = vrot.slane %v3152, 5
        %v3155 = vsel %vm3059, %v3150, %v3154
        %v3157 = vshrl.u32 %v2993, 16
        %v3159 = vrot.slane %v3157, 4
        %v3160 = vshll.u32 %v2993, 16
        %v3162 = vrot.slane %v3160, 5
        %v3163 = vor.u32 %v3159, %v3162
        %v3164 = vrot.slane %v3163, 4
        %v3166 = vshll.u32 %v2994, 16
        %v3168 = vrot.slane %v3166, 5
        %v3169 = vsel %vm3059, %v3164, %v3168
        %v3170 = vshrl.u32 %v2994, 16
        %v3172 = vrot.slane %v3170, 4
        %v3173 = vor.u32 %v3172, %v3168
        %v3174 = vrot.slane %v3173, 4
        %v3176 = vshll.u32 %v3025, 16
        %v3178 = vrot.slane %v3176, 5
        %v3179 = vsel %vm3059, %v3174, %v3178
        %v3181 = vshrl.u32 %v2995, 16
        %v3183 = vrot.slane %v3181, 4
        %v3184 = vshll.u32 %v2995, 16
        %v3186 = vrot.slane %v3184, 5
        %v3187 = vor.u32 %v3183, %v3186
        %v3188 = vrot.slane %v3187, 4
        %v3190 = vshll.u32 %v2996, 16
        %v3192 = vrot.slane %v3190, 5
        %v3193 = vsel %vm3059, %v3188, %v3192
        %v3194 = vshrl.u32 %v2996, 16
        %v3196 = vrot.slane %v3194, 4
        %v3197 = vor.u32 %v3196, %v3192
        %v3198 = vrot.slane %v3197, 4
        %v3200 = vshll.u32 %v3026, 16
        %v3202 = vrot.slane %v3200, 5
        %v3203 = vsel %vm3059, %v3198, %v3202
        %v3205 = vshrl.u32 %v2997, 16
        %v3207 = vrot.slane %v3205, 4
        %v3208 = vshll.u32 %v2997, 16
        %v3210 = vrot.slane %v3208, 5
        %v3211 = vor.u32 %v3207, %v3210
        %v3212 = vrot.slane %v3211, 4
        %v3214 = vshll.u32 %v2998, 16
        %v3216 = vrot.slane %v3214, 5
        %v3217 = vsel %vm3059, %v3212, %v3216
        %v3218 = vshrl.u32 %v2998, 16
        %v3220 = vrot.slane %v3218, 4
        %v3221 = vor.u32 %v3220, %v3216
        %v3222 = vrot.slane %v3221, 4
        %v3224 = vshll.u32 %v3027, 16
        %v3226 = vrot.slane %v3224, 5
        %v3227 = vsel %vm3059, %v3222, %v3226
        %v3229 = vshrl.u32 %v2999, 16
        %v3231 = vrot.slane %v3229, 4
        %v3232 = vshll.u32 %v2999, 16
        %v3234 = vrot.slane %v3232, 5
        %v3235 = vor.u32 %v3231, %v3234
        %v3236 = vrot.slane %v3235, 4
        %v3238 = vshll.u32 %v3000, 16
        %v3240 = vrot.slane %v3238, 5
        %v3241 = vsel %vm3059, %v3236, %v3240
        %v3242 = vshrl.u32 %v3000, 16
        %v3244 = vrot.slane %v3242, 4
        %v3245 = vor.u32 %v3244, %v3240
        %v3246 = vrot.slane %v3245, 4
        %v3248 = vshll.u32 %v3028, 16
        %v3250 = vrot.slane %v3248, 5
        %v3251 = vsel %vm3059, %v3246, %v3250
        %v3253 = vshrl.u32 %v3001, 16
        %v3255 = vrot.slane %v3253, 4
        %v3256 = vshll.u32 %v3001, 16
        %v3258 = vrot.slane %v3256, 5
        %v3259 = vor.u32 %v3255, %v3258
        %v3260 = vrot.slane %v3259, 4
        %v3262 = vshll.u32 %v3002, 16
        %v3264 = vrot.slane %v3262, 5
        %v3265 = vsel %vm3059, %v3260, %v3264
        %v3266 = vshrl.u32 %v3002, 16
        %v3268 = vrot.slane %v3266, 4
        %v3269 = vor.u32 %v3268, %v3264
        %v3270 = vrot.slane %v3269, 4
        %v3272 = vshll.u32 %v3029, 16
        %v3274 = vrot.slane %v3272, 5
        %v3275 = vsel %vm3059, %v3270, %v3274
        %v3277 = vshrl.u32 %v3003, 16
        %v3279 = vrot.slane %v3277, 4
        %v3280 = vshll.u32 %v3003, 16
        %v3282 = vrot.slane %v3280, 5
        %v3283 = vor.u32 %v3279, %v3282
        %v3284 = vrot.slane %v3283, 4
        %v3286 = vshll.u32 %v3004, 16
        %v3288 = vrot.slane %v3286, 5
        %v3289 = vsel %vm3059, %v3284, %v3288
        %v3290 = vshrl.u32 %v3004, 16
        %v3292 = vrot.slane %v3290, 4
        %v3293 = vor.u32 %v3292, %v3288
        %v3294 = vrot.slane %v3293, 4
        %v3296 = vshll.u32 %v3030, 16
        %v3298 = vrot.slane %v3296, 5
        %v3299 = vsel %vm3059, %v3294, %v3298
        %v3301 = vshrl.u32 %v3005, 16
        %v3303 = vrot.slane %v3301, 4
        %v3304 = vshll.u32 %v3005, 16
        %v3306 = vrot.slane %v3304, 5
        %v3307 = vor.u32 %v3303, %v3306
        %v3308 = vrot.slane %v3307, 4
        %v3310 = vshll.u32 %v3006, 16
        %v3312 = vrot.slane %v3310, 5
        %v3313 = vsel %vm3059, %v3308, %v3312
        %v3314 = vshrl.u32 %v3006, 16
        %v3316 = vrot.slane %v3314, 4
        %v3317 = vor.u32 %v3316, %v3312
        %v3318 = vrot.slane %v3317, 4
        %v3320 = vshll.u32 %v3031, 16
        %v3322 = vrot.slane %v3320, 5
        %v3323 = vsel %vm3059, %v3318, %v3322
        %v3325 = vshrl.u32 %v3007, 16
        %v3327 = vrot.slane %v3325, 4
        %v3328 = vshll.u32 %v3007, 16
        %v3330 = vrot.slane %v3328, 5
        %v3331 = vor.u32 %v3327, %v3330
        %v3332 = vrot.slane %v3331, 4
        %v3334 = vshll.u32 %v3008, 16
        %v3336 = vrot.slane %v3334, 5
        %v3337 = vsel %vm3059, %v3332, %v3336
        %v3338 = vshrl.u32 %v3008, 16
        %v3340 = vrot.slane %v3338, 4
        %v3341 = vor.u32 %v3340, %v3336
        %v3342 = vrot.slane %v3341, 4
        %v3344 = vshll.u32 %v3032, 16
        %v3346 = vrot.slane %v3344, 5
        %v3347 = vsel %vm3059, %v3342, %v3346
        %v3349 = vshrl.u32 %v3009, 16
        %v3351 = vrot.slane %v3349, 4
        %v3352 = vshll.u32 %v3009, 16
        %v3354 = vrot.slane %v3352, 5
        %v3355 = vor.u32 %v3351, %v3354
        %v3356 = vrot.slane %v3355, 4
        %v3358 = vshll.u32 %v3010, 16
        %v3360 = vrot.slane %v3358, 5
        %v3361 = vsel %vm3059, %v3356, %v3360
        %v3362 = vshrl.u32 %v3010, 16
        %v3364 = vrot.slane %v3362, 4
        %v3365 = vor.u32 %v3364, %v3360
        %v3366 = vrot.slane %v3365, 4
        %v3368 = vshll.u32 %v3033, 16
        %v3370 = vrot.slane %v3368, 5
        %v3371 = vsel %vm3059, %v3366, %v3370
        %v3373 = vshrl.u32 %v3011, 16
        %v3375 = vrot.slane %v3373, 4
        %v3376 = vshll.u32 %v3011, 16
        %v3378 = vrot.slane %v3376, 5
        %v3379 = vor.u32 %v3375, %v3378
        %v3380 = vrot.slane %v3379, 4
        %v3382 = vshll.u32 %v3012, 16
        %v3384 = vrot.slane %v3382, 5
        %v3385 = vsel %vm3059, %v3380, %v3384
        %v3386 = vshrl.u32 %v3012, 16
        %v3388 = vrot.slane %v3386, 4
        %v3389 = vor.u32 %v3388, %v3384
        %v3390 = vrot.slane %v3389, 4
        %v3392 = vshll.u32 %v3034, 16
        %v3394 = vrot.slane %v3392, 5
        %v3395 = vsel %vm3059, %v3390, %v3394
        %v3397 = vshrl.u32 %v3013, 16
        %v3399 = vrot.slane %v3397, 4
        %v3400 = vshll.u32 %v3013, 16
        %v3402 = vrot.slane %v3400, 5
        %v3403 = vor.u32 %v3399, %v3402
        %v3404 = vrot.slane %v3403, 4
        %v3406 = vshll.u32 %v3014, 16
        %v3408 = vrot.slane %v3406, 5
        %v3409 = vsel %vm3059, %v3404, %v3408
        %v3410 = vshrl.u32 %v3014, 16
        %v3412 = vrot.slane %v3410, 4
        %v3413 = vor.u32 %v3412, %v3408
        %v3414 = vrot.slane %v3413, 4
        %v3416 = vshll.u32 %v3035, 16
        %v3418 = vrot.slane %v3416, 5
        %v3419 = vsel %vm3059, %v3414, %v3418
        %v3421 = vshrl.u32 %v3015, 16
        %v3423 = vrot.slane %v3421, 4
        %v3424 = vshll.u32 %v3015, 16
        %v3426 = vrot.slane %v3424, 5
        %v3427 = vor.u32 %v3423, %v3426
        %v3428 = vrot.slane %v3427, 4
        %v3430 = vshll.u32 %v3016, 16
        %v3432 = vrot.slane %v3430, 5
        %v3433 = vsel %vm3059, %v3428, %v3432
        %v3434 = vshrl.u32 %v3016, 16
        %v3436 = vrot.slane %v3434, 4
        %v3437 = vor.u32 %v3436, %v3432
        %v3438 = vrot.slane %v3437, 4
        %v3440 = vshll.u32 %v3036, 16
        %v3442 = vrot.slane %v3440, 5
        %v3443 = vsel %vm3059, %v3438, %v3442
        %vm3492 = vcmask 1042432
        %vm3493 = vcmask 1046532
        %vm3494 = vmor %vm3492, %vm3493
        %v3495 = vrot.slane %v3039, 5
        %v3496 = vrot.slane %v3495, 4
        %v3497 = vrot.slane %v2986, 5
        %v3498 = vsel %vm3494, %v3496, %v3497
        %v3499 = vrot.slane %v3497, 4
        %v3500 = vrot.slane %v3021, 5
        %v3501 = vsel %vm3494, %v3499, %v3500
        %v3502 = vrot.slane %v3040, 5
        %v3503 = vrot.slane %v3502, 4
        %v3504 = vrot.slane %v2988, 5
        %v3505 = vsel %vm3494, %v3503, %v3504
        %v3506 = vrot.slane %v3504, 4
        %v3507 = vrot.slane %v3022, 5
        %v3508 = vsel %vm3494, %v3506, %v3507
        %v3509 = vrot.slane %v3041, 5
        %v3510 = vrot.slane %v3509, 4
        %v3511 = vrot.slane %v2990, 5
        %v3512 = vsel %vm3494, %v3510, %v3511
        %v3513 = vrot.slane %v3511, 4
        %v3514 = vrot.slane %v3023, 5
        %v3515 = vsel %vm3494, %v3513, %v3514
        %v3516 = vrot.slane %v3042, 5
        %v3517 = vrot.slane %v3516, 4
        %v3518 = vrot.slane %v2992, 5
        %v3519 = vsel %vm3494, %v3517, %v3518
        %v3520 = vrot.slane %v3518, 4
        %v3521 = vrot.slane %v3024, 5
        %v3522 = vsel %vm3494, %v3520, %v3521
        %v3523 = vrot.slane %v3043, 5
        %v3524 = vrot.slane %v3523, 4
        %v3525 = vrot.slane %v2994, 5
        %v3526 = vsel %vm3494, %v3524, %v3525
        %v3527 = vrot.slane %v3525, 4
        %v3528 = vrot.slane %v3025, 5
        %v3529 = vsel %vm3494, %v3527, %v3528
        %v3530 = vrot.slane %v3044, 5
        %v3531 = vrot.slane %v3530, 4
        %v3532 = vrot.slane %v2996, 5
        %v3533 = vsel %vm3494, %v3531, %v3532
        %v3534 = vrot.slane %v3532, 4
        %v3535 = vrot.slane %v3026, 5
        %v3536 = vsel %vm3494, %v3534, %v3535
        %v3537 = vrot.slane %v3045, 5
        %v3538 = vrot.slane %v3537, 4
        %v3539 = vrot.slane %v2998, 5
        %v3540 = vsel %vm3494, %v3538, %v3539
        %v3541 = vrot.slane %v3539, 4
        %v3542 = vrot.slane %v3027, 5
        %v3543 = vsel %vm3494, %v3541, %v3542
        %v3544 = vrot.slane %v3046, 5
        %v3545 = vrot.slane %v3544, 4
        %v3546 = vrot.slane %v3000, 5
        %v3547 = vsel %vm3494, %v3545, %v3546
        %v3548 = vrot.slane %v3546, 4
        %v3549 = vrot.slane %v3028, 5
        %v3550 = vsel %vm3494, %v3548, %v3549
        %v3551 = vrot.slane %v3047, 5
        %v3552 = vrot.slane %v3551, 4
        %v3553 = vrot.slane %v3002, 5
        %v3554 = vsel %vm3494, %v3552, %v3553
        %v3555 = vrot.slane %v3553, 4
        %v3556 = vrot.slane %v3029, 5
        %v3557 = vsel %vm3494, %v3555, %v3556
        %v3558 = vrot.slane %v3048, 5
        %v3559 = vrot.slane %v3558, 4
        %v3560 = vrot.slane %v3004, 5
        %v3561 = vsel %vm3494, %v3559, %v3560
        %v3562 = vrot.slane %v3560, 4
        %v3563 = vrot.slane %v3030, 5
        %v3564 = vsel %vm3494, %v3562, %v3563
        %v3565 = vrot.slane %v3049, 5
        %v3566 = vrot.slane %v3565, 4
        %v3567 = vrot.slane %v3006, 5
        %v3568 = vsel %vm3494, %v3566, %v3567
        %v3569 = vrot.slane %v3567, 4
        %v3570 = vrot.slane %v3031, 5
        %v3571 = vsel %vm3494, %v3569, %v3570
        %v3572 = vrot.slane %v3050, 5
        %v3573 = vrot.slane %v3572, 4
        %v3574 = vrot.slane %v3008, 5
        %v3575 = vsel %vm3494, %v3573, %v3574
        %v3576 = vrot.slane %v3574, 4
        %v3577 = vrot.slane %v3032, 5
        %v3578 = vsel %vm3494, %v3576, %v3577
        %v3579 = vrot.slane %v3051, 5
        %v3580 = vrot.slane %v3579, 4
        %v3581 = vrot.slane %v3010, 5
        %v3582 = vsel %vm3494, %v3580, %v3581
        %v3583 = vrot.slane %v3581, 4
        %v3584 = vrot.slane %v3033, 5
        %v3585 = vsel %vm3494, %v3583, %v3584
        %v3586 = vrot.slane %v3052, 5
        %v3587 = vrot.slane %v3586, 4
        %v3588 = vrot.slane %v3012, 5
        %v3589 = vsel %vm3494, %v3587, %v3588
        %v3590 = vrot.slane %v3588, 4
        %v3591 = vrot.slane %v3034, 5
        %v3592 = vsel %vm3494, %v3590, %v3591
        %v3593 = vrot.slane %v3053, 5
        %v3594 = vrot.slane %v3593, 4
        %v3595 = vrot.slane %v3014, 5
        %v3596 = vsel %vm3494, %v3594, %v3595
        %v3597 = vrot.slane %v3595, 4
        %v3598 = vrot.slane %v3035, 5
        %v3599 = vsel %vm3494, %v3597, %v3598
        %v3600 = vrot.slane %v3054, 5
        %v3601 = vrot.slane %v3600, 4
        %v3602 = vrot.slane %v3016, 5
        %v3603 = vsel %vm3494, %v3601, %v3602
        %v3604 = vrot.slane %v3602, 4
        %v3605 = vrot.slane %v3036, 5
        %v3606 = vsel %vm3494, %v3604, %v3605
        %v3608 = vshrl.u32 %v3017, 16
        %v3610 = vrot.slane %v3608, 4
        %v3611 = vshll.u32 %v3017, 16
        %v3613 = vrot.slane %v3611, 5
        %v3614 = vor.u32 %v3610, %v3613
        %v3615 = vrot.slane %v3614, 4
        %v3617 = vshll.u32 %v3018, 16
        %v3619 = vrot.slane %v3617, 5
        %v3620 = vsel %vm3059, %v3615, %v3619
        %v3621 = vshrl.u32 %v3018, 16
        %v3623 = vrot.slane %v3621, 4
        %v3624 = vor.u32 %v3623, %v3619
        %v3625 = vrot.slane %v3624, 4
        %v3627 = vshll.u32 %v3037, 16
        %v3629 = vrot.slane %v3627, 5
        %v3630 = vsel %vm3059, %v3625, %v3629
        %v3634 = vrot.slane %v3055, 5
        %v3635 = vrot.slane %v3634, 4
        %v3636 = vrot.slane %v3018, 5
        %v3637 = vsel %vm3494, %v3635, %v3636
        %v3638 = vrot.slane %v3636, 4
        %v3639 = vrot.slane %v3037, 5
        %v3640 = vsel %vm3494, %v3638, %v3639
        %v3642 = vshrl.u32 %v3019, 16
        %v3644 = vrot.slane %v3642, 4
        %v3645 = vshll.u32 %v3019, 16
        %v3647 = vrot.slane %v3645, 5
        %v3648 = vor.u32 %v3644, %v3647
        %v3649 = vrot.slane %v3648, 4
        %v3651 = vshll.u32 %v3020, 16
        %v3653 = vrot.slane %v3651, 5
        %v3654 = vsel %vm3059, %v3649, %v3653
        %v3655 = vshrl.u32 %v3020, 16
        %v3657 = vrot.slane %v3655, 4
        %v3658 = vor.u32 %v3657, %v3653
        %v3659 = vrot.slane %v3658, 4
        %v3661 = vshll.u32 %v3038, 16
        %v3663 = vrot.slane %v3661, 5
        %v3664 = vsel %vm3059, %v3659, %v3663
        %v3668 = vrot.slane %v3056, 5
        %v3669 = vrot.slane %v3668, 4
        %v3670 = vrot.slane %v3020, 5
        %v3671 = vsel %vm3494, %v3669, %v3670
        %v3672 = vrot.slane %v3670, 4
        %v3673 = vrot.slane %v3038, 5
        %v3674 = vsel %vm3494, %v3672, %v3673
        %v3691 = vunpack.c.l.b16 %v2985
        %v3692 = vunpack.c.l.b16 %v2986
        %v3693 = vunpack.c.l.b16 %v2987
        %v3694 = vunpack.c.l.b16 %v2988
        %v3695 = vunpack.c.l.b16 %v2989
        %v3696 = vunpack.c.l.b16 %v2990
        %v3697 = vunpack.c.l.b16 %v2991
        %v3698 = vunpack.c.l.b16 %v2992
        %v3699 = vunpack.c.l.b16 %v2993
        %v3700 = vunpack.c.l.b16 %v2994
        %v3701 = vunpack.c.l.b16 %v2995
        %v3702 = vunpack.c.l.b16 %v2996
        %v3703 = vunpack.c.l.b16 %v2997
        %v3704 = vunpack.c.l.b16 %v2998
        %v3705 = vunpack.c.l.b16 %v2999
        %v3706 = vunpack.c.l.b16 %v3000
        %v3707 = vunpack.c.l.b16 %v3001
        %v3708 = vunpack.c.l.b16 %v3002
        %v3709 = vunpack.c.l.b16 %v3003
        %v3710 = vunpack.c.l.b16 %v3004
        %v3711 = vunpack.c.l.b16 %v3005
        %v3712 = vunpack.c.l.b16 %v3006
        %v3713 = vunpack.c.l.b16 %v3007
        %v3714 = vunpack.c.l.b16 %v3008
        %v3715 = vunpack.c.l.b16 %v3009
        %v3716 = vunpack.c.l.b16 %v3010
        %v3717 = vunpack.c.l.b16 %v3011
        %v3718 = vunpack.c.l.b16 %v3012
        %v3719 = vunpack.c.l.b16 %v3013
        %v3720 = vunpack.c.l.b16 %v3014
        %v3721 = vunpack.c.l.b16 %v3015
        %v3722 = vunpack.c.l.b16 %v3016
        %v3723 = vpack.c.b16 %v3692, %v3691
        %v3724 = vpack.c.b16 %v3694, %v3693
        %v3725 = vpack.c.b16 %v3696, %v3695
        %v3726 = vpack.c.b16 %v3698, %v3697
        %v3727 = vpack.c.b16 %v3700, %v3699
        %v3728 = vpack.c.b16 %v3702, %v3701
        %v3729 = vpack.c.b16 %v3704, %v3703
        %v3730 = vpack.c.b16 %v3706, %v3705
        %v3731 = vpack.c.b16 %v3708, %v3707
        %v3732 = vpack.c.b16 %v3710, %v3709
        %v3733 = vpack.c.b16 %v3712, %v3711
        %v3734 = vpack.c.b16 %v3714, %v3713
        %v3735 = vpack.c.b16 %v3716, %v3715
        %v3736 = vpack.c.b16 %v3718, %v3717
        %v3737 = vpack.c.b16 %v3720, %v3719
        %v3738 = vpack.c.b16 %v3722, %v3721
        %v3755 = vunpack.c.l.b16 %v3073
        %v3756 = vunpack.c.l.b16 %v3083
        %v3757 = vunpack.c.l.b16 %v3097
        %v3758 = vunpack.c.l.b16 %v3107
        %v3759 = vunpack.c.l.b16 %v3121
        %v3760 = vunpack.c.l.b16 %v3131
        %v3761 = vunpack.c.l.b16 %v3145
        %v3762 = vunpack.c.l.b16 %v3155
        %v3763 = vunpack.c.l.b16 %v3169
        %v3764 = vunpack.c.l.b16 %v3179
        %v3765 = vunpack.c.l.b16 %v3193
        %v3766 = vunpack.c.l.b16 %v3203
        %v3767 = vunpack.c.l.b16 %v3217
        %v3768 = vunpack.c.l.b16 %v3227
        %v3769 = vunpack.c.l.b16 %v3241
        %v3770 = vunpack.c.l.b16 %v3251
        %v3771 = vunpack.c.l.b16 %v3265
        %v3772 = vunpack.c.l.b16 %v3275
        %v3773 = vunpack.c.l.b16 %v3289
        %v3774 = vunpack.c.l.b16 %v3299
        %v3775 = vunpack.c.l.b16 %v3313
        %v3776 = vunpack.c.l.b16 %v3323
        %v3777 = vunpack.c.l.b16 %v3337
        %v3778 = vunpack.c.l.b16 %v3347
        %v3779 = vunpack.c.l.b16 %v3361
        %v3780 = vunpack.c.l.b16 %v3371
        %v3781 = vunpack.c.l.b16 %v3385
        %v3782 = vunpack.c.l.b16 %v3395
        %v3783 = vunpack.c.l.b16 %v3409
        %v3784 = vunpack.c.l.b16 %v3419
        %v3785 = vunpack.c.l.b16 %v3433
        %v3786 = vunpack.c.l.b16 %v3443
        %v3787 = vpack.c.b16 %v3756, %v3755
        %v3788 = vpack.c.b16 %v3758, %v3757
        %v3789 = vpack.c.b16 %v3760, %v3759
        %v3790 = vpack.c.b16 %v3762, %v3761
        %v3791 = vpack.c.b16 %v3764, %v3763
        %v3792 = vpack.c.b16 %v3766, %v3765
        %v3793 = vpack.c.b16 %v3768, %v3767
        %v3794 = vpack.c.b16 %v3770, %v3769
        %v3795 = vpack.c.b16 %v3772, %v3771
        %v3796 = vpack.c.b16 %v3774, %v3773
        %v3797 = vpack.c.b16 %v3776, %v3775
        %v3798 = vpack.c.b16 %v3778, %v3777
        %v3799 = vpack.c.b16 %v3780, %v3779
        %v3800 = vpack.c.b16 %v3782, %v3781
        %v3801 = vpack.c.b16 %v3784, %v3783
        %v3802 = vpack.c.b16 %v3786, %v3785
        %v3819 = vunpack.c.l.b16 %v3498
        %v3820 = vunpack.c.l.b16 %v3501
        %v3821 = vunpack.c.l.b16 %v3505
        %v3822 = vunpack.c.l.b16 %v3508
        %v3823 = vunpack.c.l.b16 %v3512
        %v3824 = vunpack.c.l.b16 %v3515
        %v3825 = vunpack.c.l.b16 %v3519
        %v3826 = vunpack.c.l.b16 %v3522
        %v3827 = vunpack.c.l.b16 %v3526
        %v3828 = vunpack.c.l.b16 %v3529
        %v3829 = vunpack.c.l.b16 %v3533
        %v3830 = vunpack.c.l.b16 %v3536
        %v3831 = vunpack.c.l.b16 %v3540
        %v3832 = vunpack.c.l.b16 %v3543
        %v3833 = vunpack.c.l.b16 %v3547
        %v3834 = vunpack.c.l.b16 %v3550
        %v3835 = vunpack.c.l.b16 %v3554
        %v3836 = vunpack.c.l.b16 %v3557
        %v3837 = vunpack.c.l.b16 %v3561
        %v3838 = vunpack.c.l.b16 %v3564
        %v3839 = vunpack.c.l.b16 %v3568
        %v3840 = vunpack.c.l.b16 %v3571
        %v3841 = vunpack.c.l.b16 %v3575
        %v3842 = vunpack.c.l.b16 %v3578
        %v3843 = vunpack.c.l.b16 %v3582
        %v3844 = vunpack.c.l.b16 %v3585
        %v3845 = vunpack.c.l.b16 %v3589
        %v3846 = vunpack.c.l.b16 %v3592
        %v3847 = vunpack.c.l.b16 %v3596
        %v3848 = vunpack.c.l.b16 %v3599
        %v3849 = vunpack.c.l.b16 %v3603
        %v3850 = vunpack.c.l.b16 %v3606
        %v3851 = vpack.c.b16 %v3820, %v3819
        %v3852 = vpack.c.b16 %v3822, %v3821
        %v3853 = vpack.c.b16 %v3824, %v3823
        %v3854 = vpack.c.b16 %v3826, %v3825
        %v3855 = vpack.c.b16 %v3828, %v3827
        %v3856 = vpack.c.b16 %v3830, %v3829
        %v3857 = vpack.c.b16 %v3832, %v3831
        %v3858 = vpack.c.b16 %v3834, %v3833
        %v3859 = vpack.c.b16 %v3836, %v3835
        %v3860 = vpack.c.b16 %v3838, %v3837
        %v3861 = vpack.c.b16 %v3840, %v3839
        %v3862 = vpack.c.b16 %v3842, %v3841
        %v3863 = vpack.c.b16 %v3844, %v3843
        %v3864 = vpack.c.b16 %v3846, %v3845
        %v3865 = vpack.c.b16 %v3848, %v3847
        %v3866 = vpack.c.b16 %v3850, %v3849
        %v3884 = vunpack.c.l.b16 %v3017
        %v3885 = vunpack.c.l.b16 %v3018
        %v3886 = vpack.c.b16 %v3885, %v3884
        %v3888 = vunpack.c.l.b16 %v3620
        %v3889 = vunpack.c.l.b16 %v3630
        %v3890 = vpack.c.b16 %v3889, %v3888
        %v3892 = vunpack.c.l.b16 %v3637
        %v3893 = vunpack.c.l.b16 %v3640
        %v3894 = vpack.c.b16 %v3893, %v3892
        %v3897 = vunpack.c.l.b16 %v3019
        %v3898 = vunpack.c.l.b16 %v3020
        %v3899 = vpack.c.b16 %v3898, %v3897
        %v3901 = vunpack.c.l.b16 %v3654
        %v3902 = vunpack.c.l.b16 %v3664
        %v3903 = vpack.c.b16 %v3902, %v3901
        %v3905 = vunpack.c.l.b16 %v3671
        %v3906 = vunpack.c.l.b16 %v3674
        %v3907 = vpack.c.b16 %v3906, %v3905
        %v3909 = vld [vmem:[%s2] sm:$0xf]
        %v3910 = vld [vmem:[%s2 + $0x4] sm:$0xf]
        %v3911 = vld [vmem:[%s2 + $0x8] sm:$0xf]
        %v3912 = vld [vmem:[%s2 + $0xc] sm:$0xf]
        %v3913 = vld [vmem:[%s2 + $0x10] sm:$0xf]
        %v3914 = vld [vmem:[%s2 + $0x14] sm:$0xf]
        %v3915 = vld [vmem:[%s2 + $0x18] sm:$0xf]
        %v3916 = vld [vmem:[%s2 + $0x1c] sm:$0xf]
        %v3917 = vld [vmem:[%s2 + $0x20] sm:$0xf]
        %v3918 = vld [vmem:[%s2 + $0x24] sm:$0xf]
        %v3919 = vld [vmem:[%s2 + $0x28] sm:$0xf]
        %v3920 = vld [vmem:[%s2 + $0x2c] sm:$0xf]
        %v3921 = vld [vmem:[%s2 + $0x30] sm:$0xf]
        %v3922 = vld [vmem:[%s2 + $0x34] sm:$0xf]
        %v3923 = vld [vmem:[%s2 + $0x38] sm:$0xf]
        %v3924 = vld [vmem:[%s2 + $0x3c] sm:$0xf]
        %v3925 = vld [vmem:[%s2 + $0x40] sm:$0xf]
        %v3926 = vld [vmem:[%s2 + $0x44] sm:$0xf]
        %v3927 = vld [vmem:[%s2 + $0x48] sm:$0xf]
        %v3928 = vld [vmem:[%s2 + $0x4c] sm:$0xf]
        %v3929 = vld [vmem:[%s2 + $0x50] sm:$0xf]
        %v3930 = vld [vmem:[%s2 + $0x54] sm:$0xf]
        %v3931 = vld [vmem:[%s2 + $0x58] sm:$0xf]
        %v3932 = vld [vmem:[%s2 + $0x5c] sm:$0xf]
        %v3933 = vld [vmem:[%s2 + $0x60] sm:$0xf]
        %v3934 = vld [vmem:[%s2 + $0x64] sm:$0xf]
        %v3935 = vld [vmem:[%s2 + $0x68] sm:$0xf]
        %v3936 = vld [vmem:[%s2 + $0x6c] sm:$0xf]
        %v3937 = vld [vmem:[%s2 + $0x70] sm:$0xf]
        %v3938 = vld [vmem:[%s2 + $0x74] sm:$0xf]
        %v3939 = vld [vmem:[%s2 + $0x78] sm:$0xf]
        %v3940 = vld [vmem:[%s2 + $0x7c] sm:$0xf]
        %v3941 = vld [vmem:[%s2 + $0x80] sm:$0xf]
        %v3942 = vld [vmem:[%s2 + $0x84] sm:$0xf]
        %v3943 = vld [vmem:[%s2 + $0x88] sm:$0xf]
        %v3944 = vld [vmem:[%s2 + $0x8c] sm:$0xf]
        %v3945 = vld [vmem:[%s2 + $0x90] sm:$0xf]
        %v3946 = vld [vmem:[%s2 + $0x94] sm:$0xf]
        %v3947 = vld [vmem:[%s2 + $0x98] sm:$0xf]
        %v3948 = vld [vmem:[%s2 + $0x9c] sm:$0xf]
        %v3949 = vld [vmem:[%s2 + $0xa0] sm:$0xf]
        %v3950 = vld [vmem:[%s2 + $0xa4] sm:$0xf]
        %v3951 = vld [vmem:[%s2 + $0xa8] sm:$0xf]
        %v3952 = vld [vmem:[%s2 + $0xac] sm:$0xf]
        %v3953 = vld [vmem:[%s2 + $0xb0] sm:$0xf]
        %v3954 = vld [vmem:[%s2 + $0xb4] sm:$0xf]
        %v3955 = vld [vmem:[%s2 + $0xb8] sm:$0xf]
        %v3956 = vld [vmem:[%s2 + $0xbc] sm:$0xf]
        %v3957 = vld [vmem:[%s2 + $0xc0] sm:$0xf]
        %v3958 = vld [vmem:[%s2 + $0xc4] sm:$0xf]
        %v3959 = vld [vmem:[%s2 + $0xc8] sm:$0xf]
        %v3960 = vld [vmem:[%s2 + $0xcc] sm:$0xf]
        %v3961 = vld [vmem:[%s2 + $0xd0] sm:$0xf]
        %v3962 = vld [vmem:[%s2 + $0xd4] sm:$0xf]
        %v3963 = vld [vmem:[%s2 + $0xd8] sm:$0xf]
        %v3964 = vld [vmem:[%s2 + $0xdc] sm:$0xf]
        %v3965 = vld [vmem:[%s2 + $0xe0] sm:$0xf]
        %v3966 = vld [vmem:[%s2 + $0xe4] sm:$0xf]
        %v3967 = vld [vmem:[%s2 + $0xe8] sm:$0xf]
        %v3968 = vld [vmem:[%s2 + $0xec] sm:$0xf]
        %v3969 = vld [vmem:[%s2 + $0xf0] sm:$0xf]
        %v3970 = vld [vmem:[%s2 + $0xf4] sm:$0xf]
        %v3971 = vld [vmem:[%s2 + $0xf8] sm:$0xf]
        %v3972 = vld [vmem:[%s2 + $0xfc] sm:$0xf]
        %v3973 = vld [vmem:[%s2 + $0x100] sm:$0xf]
        %v3974 = vld [vmem:[%s2 + $0x104] sm:$0xf]
        %v3975 = vld [vmem:[%s2 + $0x108] sm:$0xf]
        %v3976 = vld [vmem:[%s2 + $0x10c] sm:$0xf]
        %v3977 = vld [vmem:[%s2 + $0x110] sm:$0xf]
        %v3978 = vld [vmem:[%s2 + $0x114] sm:$0xf]
        %v3979 = vld [vmem:[%s2 + $0x118] sm:$0xf]
        %v3980 = vld [vmem:[%s2 + $0x11c] sm:$0xf]
        %v3981 = vld [vmem:[%s2 + $0x120] sm:$0xf]
        %v3982 = vld [vmem:[%s2 + $0x124] sm:$0xf]
        %v3983 = vld [vmem:[%s2 + $0x128] sm:$0xf]
        %v3984 = vld [vmem:[%s2 + $0x12c] sm:$0xf]
        %v3985 = vld [vmem:[%s2 + $0x130] sm:$0xf]
        %v3986 = vld [vmem:[%s2 + $0x134] sm:$0xf]
        %v3987 = vld [vmem:[%s2 + $0x138] sm:$0xf]
        %v3988 = vld [vmem:[%s2 + $0x13c] sm:$0xf]
        %v3989 = vld [vmem:[%s2 + $0x140] sm:$0xf]
        %v3990 = vld [vmem:[%s2 + $0x144] sm:$0xf]
        %v3991 = vld [vmem:[%s2 + $0x148] sm:$0xf]
        %v3992 = vld [vmem:[%s2 + $0x14c] sm:$0xf]
        %v3993 = vld [vmem:[%s2 + $0x150] sm:$0xf]
        %v3994 = vld [vmem:[%s2 + $0x154] sm:$0xf]
        %v3995 = vld [vmem:[%s2 + $0x158] sm:$0xf]
        %v3996 = vld [vmem:[%s2 + $0x15c] sm:$0xf]
        %v3997 = vld [vmem:[%s2 + $0x160] sm:$0xf]
        %v3998 = vld [vmem:[%s2 + $0x164] sm:$0xf]
        %v3999 = vld [vmem:[%s2 + $0x168] sm:$0xf]
        %v4000 = vld [vmem:[%s2 + $0x16c] sm:$0xf]
        %v4001 = vld [vmem:[%s2 + $0x170] sm:$0xf]
        %v4002 = vld [vmem:[%s2 + $0x174] sm:$0xf]
        %v4003 = vld [vmem:[%s2 + $0x178] sm:$0xf]
        %v4004 = vld [vmem:[%s2 + $0x17c] sm:$0xf]
        %v4005 = vld [vmem:[%s2 + $0x180] sm:$0xf]
        %v4006 = vld [vmem:[%s2 + $0x184] sm:$0xf]
        %v4007 = vld [vmem:[%s2 + $0x188] sm:$0xf]
        %v4008 = vld [vmem:[%s2 + $0x18c] sm:$0xf]
        %v4009 = vld [vmem:[%s2 + $0x190] sm:$0xf]
        %v4010 = vld [vmem:[%s2 + $0x194] sm:$0xf]
        %v4011 = vld [vmem:[%s2 + $0x198] sm:$0xf]
        %v4012 = vld [vmem:[%s2 + $0x19c] sm:$0xf]
        %v4013 = vld [vmem:[%s2 + $0x1a0] sm:$0xf]
        %v4014 = vld [vmem:[%s2 + $0x1a4] sm:$0xf]
        %v4015 = vld [vmem:[%s2 + $0x1a8] sm:$0xf]
        %v4016 = vld [vmem:[%s2 + $0x1ac] sm:$0xf]
        %v4017 = vld [vmem:[%s2 + $0x1b0] sm:$0xf]
        %v4018 = vld [vmem:[%s2 + $0x1b4] sm:$0xf]
        %v4019 = vld [vmem:[%s2 + $0x1b8] sm:$0xf]
        %v4020 = vld [vmem:[%s2 + $0x1bc] sm:$0xf]
        %v4021 = vld [vmem:[%s2 + $0x1c0] sm:$0xf]
        %v4022 = vld [vmem:[%s2 + $0x1c4] sm:$0xf]
        %v4023 = vld [vmem:[%s2 + $0x1c8] sm:$0xf]
        %v4024 = vld [vmem:[%s2 + $0x1cc] sm:$0xf]
        %v4025 = vld [vmem:[%s2 + $0x1d0] sm:$0xf]
        %v4026 = vld [vmem:[%s2 + $0x1d4] sm:$0xf]
        %v4027 = vld [vmem:[%s2 + $0x1d8] sm:$0xf]
        %v4028 = vld [vmem:[%s2 + $0x1dc] sm:$0xf]
        %v4029 = vld [vmem:[%s2 + $0x1e0] sm:$0xf]
        %v4030 = vld [vmem:[%s2 + $0x1e4] sm:$0xf]
        %v4031 = vld [vmem:[%s2 + $0x1e8] sm:$0xf]
        %v4032 = vld [vmem:[%s2 + $0x1ec] sm:$0xf]
        %v4033 = vld [vmem:[%s2 + $0x1f0] sm:$0xf]
        %v4034 = vld [vmem:[%s2 + $0x1f4] sm:$0xf]
        %v4035 = vld [vmem:[%s2 + $0x1f8] sm:$0xf]
        %v4036 = vld [vmem:[%s2 + $0x1fc] sm:$0xf]
        %v4037 = vld [vmem:[%s2 + $0x200] sm:$0xf]
        %v4038 = vld [vmem:[%s2 + $0x204] sm:$0xf]
        %v4039 = vld [vmem:[%s2 + $0x208] sm:$0xf]
        %v4040 = vld [vmem:[%s2 + $0x20c] sm:$0xf]
        %v4041 = vld [vmem:[%s2 + $0x210] sm:$0xf]
        %v4042 = vld [vmem:[%s2 + $0x214] sm:$0xf]
        %v4043 = vld [vmem:[%s2 + $0x218] sm:$0xf]
        %v4044 = vld [vmem:[%s2 + $0x21c] sm:$0xf]
        %v4045 = vld [vmem:[%s2 + $0x220] sm:$0xf]
        %v4046 = vld [vmem:[%s2 + $0x224] sm:$0xf]
        %v4047 = vld [vmem:[%s2 + $0x228] sm:$0xf]
        %v4048 = vld [vmem:[%s2 + $0x22c] sm:$0xf]
        %v4049 = vld [vmem:[%s2 + $0x230] sm:$0xf]
        %v4050 = vld [vmem:[%s2 + $0x234] sm:$0xf]
        %v4051 = vld [vmem:[%s2 + $0x238] sm:$0xf]
        %v4052 = vld [vmem:[%s2 + $0x23c] sm:$0xf]
        %v4053 = vlaneseq
        %v4054 = vshrl.u32 %v4053, 7
        %v4055 = vsub.s32 1, %v4054
        %v4056 = vrot.slane %v278, %v4055
        %v4201 = vunpack.c.l.b16 %v3909
        %v4202 = vunpack.c.l.b16 %v3910
        %v4203 = vunpack.c.l.b16 %v3911
        %v4204 = vunpack.c.l.b16 %v3912
        %v4205 = vunpack.c.l.b16 %v3913
        %v4206 = vunpack.c.l.b16 %v3914
        %v4207 = vunpack.c.l.b16 %v3915
        %v4208 = vunpack.c.l.b16 %v3916
        %v4209 = vunpack.c.l.b16 %v3917
        %v4210 = vunpack.c.l.b16 %v3918
        %v4211 = vunpack.c.l.b16 %v3919
        %v4212 = vunpack.c.l.b16 %v3920
        %v4213 = vunpack.c.l.b16 %v3921
        %v4214 = vunpack.c.l.b16 %v3922
        %v4215 = vunpack.c.l.b16 %v3923
        %v4216 = vunpack.c.l.b16 %v3924
        %v4217 = vunpack.c.l.b16 %v3925
        %v4218 = vunpack.c.l.b16 %v3926
        %v4219 = vunpack.c.l.b16 %v3927
        %v4220 = vunpack.c.l.b16 %v3928
        %v4221 = vunpack.c.l.b16 %v3929
        %v4222 = vunpack.c.l.b16 %v3930
        %v4223 = vunpack.c.l.b16 %v3931
        %v4224 = vunpack.c.l.b16 %v3932
        %v4225 = vunpack.c.l.b16 %v3933
        %v4226 = vunpack.c.l.b16 %v3934
        %v4227 = vunpack.c.l.b16 %v3935
        %v4228 = vunpack.c.l.b16 %v3936
        %v4229 = vunpack.c.l.b16 %v3937
        %v4230 = vunpack.c.l.b16 %v3938
        %v4231 = vunpack.c.l.b16 %v3939
        %v4232 = vunpack.c.l.b16 %v3940
        %v4233 = vunpack.c.l.b16 %v3941
        %v4234 = vunpack.c.l.b16 %v3942
        %v4235 = vunpack.c.l.b16 %v3943
        %v4236 = vunpack.c.l.b16 %v3944
        %v4237 = vunpack.c.l.b16 %v3945
        %v4238 = vunpack.c.l.b16 %v3946
        %v4239 = vunpack.c.l.b16 %v3947
        %v4240 = vunpack.c.l.b16 %v3948
        %v4241 = vunpack.c.l.b16 %v3949
        %v4242 = vunpack.c.l.b16 %v3950
        %v4243 = vunpack.c.l.b16 %v3951
        %v4244 = vunpack.c.l.b16 %v3952
        %v4245 = vunpack.c.l.b16 %v3953
        %v4246 = vunpack.c.l.b16 %v3954
        %v4247 = vunpack.c.l.b16 %v3955
        %v4248 = vunpack.c.l.b16 %v3956
        %v4249 = vunpack.c.l.b16 %v3957
        %v4250 = vunpack.c.l.b16 %v3958
        %v4251 = vunpack.c.l.b16 %v3959
        %v4252 = vunpack.c.l.b16 %v3960
        %v4253 = vunpack.c.l.b16 %v3961
        %v4254 = vunpack.c.l.b16 %v3962
        %v4255 = vunpack.c.l.b16 %v3963
        %v4256 = vunpack.c.l.b16 %v3964
        %v4257 = vunpack.c.l.b16 %v3965
        %v4258 = vunpack.c.l.b16 %v3966
        %v4259 = vunpack.c.l.b16 %v3967
        %v4260 = vunpack.c.l.b16 %v3968
        %v4261 = vunpack.c.l.b16 %v3969
        %v4262 = vunpack.c.l.b16 %v3970
        %v4263 = vunpack.c.l.b16 %v3971
        %v4264 = vunpack.c.l.b16 %v3972
        %v4265 = vunpack.c.l.b16 %v3973
        %v4266 = vunpack.c.l.b16 %v3974
        %v4267 = vunpack.c.l.b16 %v3975
        %v4268 = vunpack.c.l.b16 %v3976
        %v4269 = vunpack.c.l.b16 %v3977
        %v4270 = vunpack.c.l.b16 %v3978
        %v4271 = vunpack.c.l.b16 %v3979
        %v4272 = vunpack.c.l.b16 %v3980
        %v4273 = vunpack.c.l.b16 %v3981
        %v4274 = vunpack.c.l.b16 %v3982
        %v4275 = vunpack.c.l.b16 %v3983
        %v4276 = vunpack.c.l.b16 %v3984
        %v4277 = vunpack.c.l.b16 %v3985
        %v4278 = vunpack.c.l.b16 %v3986
        %v4279 = vunpack.c.l.b16 %v3987
        %v4280 = vunpack.c.l.b16 %v3988
        %v4281 = vunpack.c.l.b16 %v3989
        %v4282 = vunpack.c.l.b16 %v3990
        %v4283 = vunpack.c.l.b16 %v3991
        %v4284 = vunpack.c.l.b16 %v3992
        %v4285 = vunpack.c.l.b16 %v3993
        %v4286 = vunpack.c.l.b16 %v3994
        %v4287 = vunpack.c.l.b16 %v3995
        %v4288 = vunpack.c.l.b16 %v3996
        %v4289 = vunpack.c.l.b16 %v3997
        %v4290 = vunpack.c.l.b16 %v3998
        %v4291 = vunpack.c.l.b16 %v3999
        %v4292 = vunpack.c.l.b16 %v4000
        %v4293 = vunpack.c.l.b16 %v4001
        %v4294 = vunpack.c.l.b16 %v4002
        %v4295 = vunpack.c.l.b16 %v4003
        %v4296 = vunpack.c.l.b16 %v4004
        %v4297 = vunpack.c.l.b16 %v4005
        %v4298 = vunpack.c.l.b16 %v4006
        %v4299 = vunpack.c.l.b16 %v4007
        %v4300 = vunpack.c.l.b16 %v4008
        %v4301 = vunpack.c.l.b16 %v4009
        %v4302 = vunpack.c.l.b16 %v4010
        %v4303 = vunpack.c.l.b16 %v4011
        %v4304 = vunpack.c.l.b16 %v4012
        %v4305 = vunpack.c.l.b16 %v4013
        %v4306 = vunpack.c.l.b16 %v4014
        %v4307 = vunpack.c.l.b16 %v4015
        %v4308 = vunpack.c.l.b16 %v4016
        %v4309 = vunpack.c.l.b16 %v4017
        %v4310 = vunpack.c.l.b16 %v4018
        %v4311 = vunpack.c.l.b16 %v4019
        %v4312 = vunpack.c.l.b16 %v4020
        %v4313 = vunpack.c.l.b16 %v4021
        %v4314 = vunpack.c.l.b16 %v4022
        %v4315 = vunpack.c.l.b16 %v4023
        %v4316 = vunpack.c.l.b16 %v4024
        %v4317 = vunpack.c.l.b16 %v4025
        %v4318 = vunpack.c.l.b16 %v4026
        %v4319 = vunpack.c.l.b16 %v4027
        %v4320 = vunpack.c.l.b16 %v4028
        %v4321 = vunpack.c.l.b16 %v4029
        %v4322 = vunpack.c.l.b16 %v4030
        %v4323 = vunpack.c.l.b16 %v4031
        %v4324 = vunpack.c.l.b16 %v4032
        %v4325 = vunpack.c.l.b16 %v4033
        %v4326 = vunpack.c.l.b16 %v4034
        %v4327 = vunpack.c.l.b16 %v4035
        %v4328 = vunpack.c.l.b16 %v4036
        %v4329 = vunpack.c.l.b16 %v4037
        %v4330 = vunpack.c.l.b16 %v4038
        %v4331 = vunpack.c.l.b16 %v4039
        %v4332 = vunpack.c.l.b16 %v4040
        %v4333 = vunpack.c.l.b16 %v4041
        %v4334 = vunpack.c.l.b16 %v4042
        %v4335 = vunpack.c.l.b16 %v4043
        %v4336 = vunpack.c.l.b16 %v4044
        %v4337 = vunpack.c.l.b16 %v4045
        %v4338 = vunpack.c.l.b16 %v4046
        %v4339 = vunpack.c.l.b16 %v4047
        %v4340 = vunpack.c.l.b16 %v4048
        %v4341 = vunpack.c.l.b16 %v4049
        %v4342 = vunpack.c.l.b16 %v4050
        %v4343 = vunpack.c.l.b16 %v4051
        %v4344 = vunpack.c.l.b16 %v4052
        %v4345 = vpack.c.b16 %v4202, %v4201
        %v4346 = vpack.c.b16 %v4204, %v4203
        %v4347 = vpack.c.b16 %v4206, %v4205
        %v4348 = vpack.c.b16 %v4208, %v4207
        %v4349 = vpack.c.b16 %v4210, %v4209
        %v4350 = vpack.c.b16 %v4212, %v4211
        %v4351 = vpack.c.b16 %v4214, %v4213
        %v4352 = vpack.c.b16 %v4216, %v4215
        %v4353 = vpack.c.b16 %v4218, %v4217
        %v4354 = vpack.c.b16 %v4220, %v4219
        %v4355 = vpack.c.b16 %v4222, %v4221
        %v4356 = vpack.c.b16 %v4224, %v4223
        %v4357 = vpack.c.b16 %v4226, %v4225
        %v4358 = vpack.c.b16 %v4228, %v4227
        %v4359 = vpack.c.b16 %v4230, %v4229
        %v4360 = vpack.c.b16 %v4232, %v4231
        %v4361 = vpack.c.b16 %v4234, %v4233
        %v4362 = vpack.c.b16 %v4236, %v4235
        %v4363 = vpack.c.b16 %v4238, %v4237
        %v4364 = vpack.c.b16 %v4240, %v4239
        %v4365 = vpack.c.b16 %v4242, %v4241
        %v4366 = vpack.c.b16 %v4244, %v4243
        %v4367 = vpack.c.b16 %v4246, %v4245
        %v4368 = vpack.c.b16 %v4248, %v4247
        %v4369 = vpack.c.b16 %v4250, %v4249
        %v4370 = vpack.c.b16 %v4252, %v4251
        %v4371 = vpack.c.b16 %v4254, %v4253
        %v4372 = vpack.c.b16 %v4256, %v4255
        %v4373 = vpack.c.b16 %v4258, %v4257
        %v4374 = vpack.c.b16 %v4260, %v4259
        %v4375 = vpack.c.b16 %v4262, %v4261
        %v4376 = vpack.c.b16 %v4264, %v4263
        %v4377 = vpack.c.b16 %v4266, %v4265
        %v4378 = vpack.c.b16 %v4268, %v4267
        %v4379 = vpack.c.b16 %v4270, %v4269
        %v4380 = vpack.c.b16 %v4272, %v4271
        %v4381 = vpack.c.b16 %v4274, %v4273
        %v4382 = vpack.c.b16 %v4276, %v4275
        %v4383 = vpack.c.b16 %v4278, %v4277
        %v4384 = vpack.c.b16 %v4280, %v4279
        %v4385 = vpack.c.b16 %v4282, %v4281
        %v4386 = vpack.c.b16 %v4284, %v4283
        %v4387 = vpack.c.b16 %v4286, %v4285
        %v4388 = vpack.c.b16 %v4288, %v4287
        %v4389 = vpack.c.b16 %v4290, %v4289
        %v4390 = vpack.c.b16 %v4292, %v4291
        %v4391 = vpack.c.b16 %v4294, %v4293
        %v4392 = vpack.c.b16 %v4296, %v4295
        %v4393 = vpack.c.b16 %v4298, %v4297
        %v4394 = vpack.c.b16 %v4300, %v4299
        %v4395 = vpack.c.b16 %v4302, %v4301
        %v4396 = vpack.c.b16 %v4304, %v4303
        %v4397 = vpack.c.b16 %v4306, %v4305
        %v4398 = vpack.c.b16 %v4308, %v4307
        %v4399 = vpack.c.b16 %v4310, %v4309
        %v4400 = vpack.c.b16 %v4312, %v4311
        %v4401 = vpack.c.b16 %v4314, %v4313
        %v4402 = vpack.c.b16 %v4316, %v4315
        %v4403 = vpack.c.b16 %v4318, %v4317
        %v4404 = vpack.c.b16 %v4320, %v4319
        %v4405 = vpack.c.b16 %v4322, %v4321
        %v4406 = vpack.c.b16 %v4324, %v4323
        %v4407 = vpack.c.b16 %v4326, %v4325
        %v4408 = vpack.c.b16 %v4328, %v4327
        %v4409 = vpack.c.b16 %v4330, %v4329
        %v4410 = vpack.c.b16 %v4332, %v4331
        %v4411 = vpack.c.b16 %v4334, %v4333
        %v4412 = vpack.c.b16 %v4336, %v4335
        %v4413 = vpack.c.b16 %v4338, %v4337
        %v4414 = vpack.c.b16 %v4340, %v4339
        %v4415 = vpack.c.b16 %v4342, %v4341
        %v4416 = vpack.c.b16 %v4344, %v4343
        %4489 = vmatprep.subr.bf16.mxu0 0
        %4490 = vmatpush1.bf16.msra.mxu0 %v4345
        %4491 = vmatprep.subr.bf16.mxu0 0
        %4492 = vmatpush1.bf16.msra.mxu0 %v4346
        %4493 = vmatprep.subr.bf16.mxu0 0
        %4494 = vmatpush1.bf16.msra.mxu0 %v4347
        %4495 = vmatprep.subr.bf16.mxu0 0
        %4496 = vmatpush1.bf16.msra.mxu0 %v4348
        %4497 = vmatprep.subr.bf16.mxu0 0
        %4498 = vmatpush1.bf16.msra.mxu0 %v4349
        %4499 = vmatprep.subr.bf16.mxu0 0
        %4500 = vmatpush1.bf16.msra.mxu0 %v4350
        %4501 = vmatprep.subr.bf16.mxu0 0
        %4502 = vmatpush1.bf16.msra.mxu0 %v4351
        %4503 = vmatprep.subr.bf16.mxu0 0
        %4504 = vmatpush1.bf16.msra.mxu0 %v4352
        %4505 = vmatprep.subr.bf16.mxu0 0
        %4506 = vmatpush1.bf16.msra.mxu0 %v4353
        %4507 = vmatprep.subr.bf16.mxu0 0
        %4508 = vmatpush1.bf16.msra.mxu0 %v4354
        %4509 = vmatprep.subr.bf16.mxu0 0
        %4510 = vmatpush1.bf16.msra.mxu0 %v4355
        %4511 = vmatprep.subr.bf16.mxu0 0
        %4512 = vmatpush1.bf16.msra.mxu0 %v4356
        %4513 = vmatprep.subr.bf16.mxu0 0
        %4514 = vmatpush1.bf16.msra.mxu0 %v4357
        %4515 = vmatprep.subr.bf16.mxu0 0
        %4516 = vmatpush1.bf16.msra.mxu0 %v4358
        %4517 = vmatprep.subr.bf16.mxu0 0
        %4518 = vmatpush1.bf16.msra.mxu0 %v4359
        %4519 = vmatprep.subr.bf16.mxu0 0
        %4520 = vmatpush1.bf16.msra.mxu0 %v4360
        %4521 = vmatprep.mubr.bf16.mxu0 %v3787
        %4522 = vmatmul.mubr.bf16.gmra.mrb[0].mxu0 %v3723
        %v4523 = vpop.f32.mrb[0].mxu0
        %v4524 = vadd.f32 %v4056, %v4523
        %v4525 = vpop.f32.mrb[0].mxu0
        %v4526 = vpop.f32.mrb[0].mxu0
        %v4527 = vadd.f32 %v4056, %v4526
        %v4528 = vpop.f32.mrb[0].mxu0
        %4529 = vmatprep.mubr.bf16.mxu0 %v3788
        %4530 = vmatmul.mubr.bf16.gmra.mrb[0].mxu0 %v3724
        %v4531 = vpop.f32.mrb[0].mxu0
        %v4532 = vadd.f32 %v4056, %v4531
        %v4533 = vpop.f32.mrb[0].mxu0
        %v4534 = vpop.f32.mrb[0].mxu0
        %v4535 = vadd.f32 %v4056, %v4534
        %v4536 = vpop.f32.mrb[0].mxu0
        %4537 = vmatprep.mubr.bf16.mxu0 %v3789
        %4538 = vmatmul.mubr.bf16.gmra.mrb[0].mxu0 %v3725
        %v4539 = vpop.f32.mrb[0].mxu0
        %v4540 = vadd.f32 %v4056, %v4539
        %v4541 = vpop.f32.mrb[0].mxu0
        %v4542 = vpop.f32.mrb[0].mxu0
        %v4543 = vadd.f32 %v4056, %v4542
        %v4544 = vpop.f32.mrb[0].mxu0
        %4545 = vmatprep.mubr.bf16.mxu0 %v3790
        %4546 = vmatmul.mubr.bf16.gmra.mrb[0].mxu0 %v3726
        %v4547 = vpop.f32.mrb[0].mxu0
        %v4548 = vadd.f32 %v4056, %v4547
        %v4549 = vpop.f32.mrb[0].mxu0
        %v4550 = vpop.f32.mrb[0].mxu0
        %v4551 = vadd.f32 %v4056, %v4550
        %v4552 = vpop.f32.mrb[0].mxu0
        %4553 = vmatprep.mubr.bf16.mxu0 %v3791
        %4554 = vmatmul.mubr.bf16.gmra.mrb[0].mxu0 %v3727
        %v4555 = vpop.f32.mrb[0].mxu0
        %v4556 = vadd.f32 %v4056, %v4555
        %v4557 = vpop.f32.mrb[0].mxu0
        %v4558 = vpop.f32.mrb[0].mxu0
        %v4559 = vadd.f32 %v4056, %v4558
        %v4560 = vpop.f32.mrb[0].mxu0
        %4561 = vmatprep.mubr.bf16.mxu0 %v3792
        %4562 = vmatmul.mubr.bf16.gmra.mrb[0].mxu0 %v3728
        %v4563 = vpop.f32.mrb[0].mxu0
        %v4564 = vadd.f32 %v4056, %v4563
        %v4565 = vpop.f32.mrb[0].mxu0
        %v4566 = vpop.f32.mrb[0].mxu0
        %v4567 = vadd.f32 %v4056, %v4566
        %v4568 = vpop.f32.mrb[0].mxu0
        %4569 = vmatprep.mubr.bf16.mxu0 %v3793
        %4570 = vmatmul.mubr.bf16.gmra.mrb[0].mxu0 %v3729
        %v4571 = vpop.f32.mrb[0].mxu0
        %v4572 = vadd.f32 %v4056, %v4571
        %v4573 = vpop.f32.mrb[0].mxu0
        %v4574 = vpop.f32.mrb[0].mxu0
        %v4575 = vadd.f32 %v4056, %v4574
        %v4576 = vpop.f32.mrb[0].mxu0
        %4577 = vmatprep.mubr.bf16.mxu0 %v3794
        %4578 = vmatmul.mubr.bf16.gmra.mrb[0].mxu0 %v3730
        %v4579 = vpop.f32.mrb[0].mxu0
        %v4580 = vadd.f32 %v4056, %v4579
        %v4581 = vpop.f32.mrb[0].mxu0
        %v4582 = vpop.f32.mrb[0].mxu0
        %v4583 = vadd.f32 %v4056, %v4582
        %v4584 = vpop.f32.mrb[0].mxu0
        %4585 = vmatprep.mubr.bf16.mxu0 %v3795
        %4586 = vmatmul.mubr.bf16.gmra.mrb[0].mxu0 %v3731
        %v4587 = vpop.f32.mrb[0].mxu0
        %v4588 = vadd.f32 %v4056, %v4587
        %v4589 = vpop.f32.mrb[0].mxu0
        %v4590 = vpop.f32.mrb[0].mxu0
        %v4591 = vadd.f32 %v4056, %v4590
        %v4592 = vpop.f32.mrb[0].mxu0
        %4593 = vmatprep.mubr.bf16.mxu0 %v3796
        %4594 = vmatmul.mubr.bf16.gmra.mrb[0].mxu0 %v3732
        %v4595 = vpop.f32.mrb[0].mxu0
        %v4596 = vadd.f32 %v4056, %v4595
        %v4597 = vpop.f32.mrb[0].mxu0
        %v4598 = vpop.f32.mrb[0].mxu0
        %v4599 = vadd.f32 %v4056, %v4598
        %v4600 = vpop.f32.mrb[0].mxu0
        %4601 = vmatprep.mubr.bf16.mxu0 %v3797
        %4602 = vmatmul.mubr.bf16.gmra.mrb[0].mxu0 %v3733
        %v4603 = vpop.f32.mrb[0].mxu0
        %v4604 = vadd.f32 %v4056, %v4603
        %v4605 = vpop.f32.mrb[0].mxu0
        %v4606 = vpop.f32.mrb[0].mxu0
        %v4607 = vadd.f32 %v4056, %v4606
        %v4608 = vpop.f32.mrb[0].mxu0
        %4609 = vmatprep.mubr.bf16.mxu0 %v3798
        %4610 = vmatmul.mubr.bf16.gmra.mrb[0].mxu0 %v3734
        %v4611 = vpop.f32.mrb[0].mxu0
        %v4612 = vadd.f32 %v4056, %v4611
        %v4613 = vpop.f32.mrb[0].mxu0
        %v4614 = vpop.f32.mrb[0].mxu0
        %v4615 = vadd.f32 %v4056, %v4614
        %v4616 = vpop.f32.mrb[0].mxu0
        %4617 = vmatprep.mubr.bf16.mxu0 %v3799
        %4618 = vmatmul.mubr.bf16.gmra.mrb[0].mxu0 %v3735
        %v4619 = vpop.f32.mrb[0].mxu0
        %v4620 = vadd.f32 %v4056, %v4619
        %v4621 = vpop.f32.mrb[0].mxu0
        %v4622 = vpop.f32.mrb[0].mxu0
        %v4623 = vadd.f32 %v4056, %v4622
        %v4624 = vpop.f32.mrb[0].mxu0
        %4625 = vmatprep.mubr.bf16.mxu0 %v3800
        %4626 = vmatmul.mubr.bf16.gmra.mrb[0].mxu0 %v3736
        %v4627 = vpop.f32.mrb[0].mxu0
        %v4628 = vadd.f32 %v4056, %v4627
        %v4629 = vpop.f32.mrb[0].mxu0
        %v4630 = vpop.f32.mrb[0].mxu0
        %v4631 = vadd.f32 %v4056, %v4630
        %v4632 = vpop.f32.mrb[0].mxu0
        %4633 = vmatprep.mubr.bf16.mxu0 %v3801
        %4634 = vmatmul.mubr.bf16.gmra.mrb[0].mxu0 %v3737
        %v4635 = vpop.f32.mrb[0].mxu0
        %v4636 = vadd.f32 %v4056, %v4635
        %v4637 = vpop.f32.mrb[0].mxu0
        %v4638 = vpop.f32.mrb[0].mxu0
        %v4639 = vadd.f32 %v4056, %v4638
        %v4640 = vpop.f32.mrb[0].mxu0
        %4641 = vmatprep.mubr.bf16.mxu0 %v3802
        %4642 = vmatmul.mubr.bf16.gmra.mrb[0].mxu0 %v3738
        %v4643 = vpop.f32.mrb[0].mxu0
        %v4644 = vadd.f32 %v4056, %v4643
        %v4645 = vpop.f32.mrb[0].mxu0
        %v4646 = vpop.f32.mrb[0].mxu0
        %v4647 = vadd.f32 %v4056, %v4646
        %v4648 = vpop.f32.mrb[0].mxu0
        %4649 = vdwg.mxu0
        %4650 = vmatprep.subr.bf16.mxu0 0
        %4651 = vmatpush1.bf16.msra.mxu0 %v4361
        %4652 = vmatprep.subr.bf16.mxu0 0
        %4653 = vmatpush1.bf16.msra.mxu0 %v4362
        %4654 = vmatprep.subr.bf16.mxu0 0
        %4655 = vmatpush1.bf16.msra.mxu0 %v4363
        %4656 = vmatprep.subr.bf16.mxu0 0
        %4657 = vmatpush1.bf16.msra.mxu0 %v4364
        %4658 = vmatprep.subr.bf16.mxu0 0
        %4659 = vmatpush1.bf16.msra.mxu0 %v4365
        %4660 = vmatprep.subr.bf16.mxu0 0
        %4661 = vmatpush1.bf16.msra.mxu0 %v4366
        %4662 = vmatprep.subr.bf16.mxu0 0
        %4663 = vmatpush1.bf16.msra.mxu0 %v4367
        %4664 = vmatprep.subr.bf16.mxu0 0
        %4665 = vmatpush1.bf16.msra.mxu0 %v4368
        %4666 = vmatprep.subr.bf16.mxu0 0
        %4667 = vmatpush1.bf16.msra.mxu0 %v4369
        %4668 = vmatprep.subr.bf16.mxu0 0
        %4669 = vmatpush1.bf16.msra.mxu0 %v4370
        %4670 = vmatprep.subr.bf16.mxu0 0
        %4671 = vmatpush1.bf16.msra.mxu0 %v4371
        %4672 = vmatprep.subr.bf16.mxu0 0
        %4673 = vmatpush1.bf16.msra.mxu0 %v4372
        %4674 = vmatprep.subr.bf16.mxu0 0
        %4675 = vmatpush1.bf16.msra.mxu0 %v4373
        %4676 = vmatprep.subr.bf16.mxu0 0
        %4677 = vmatpush1.bf16.msra.mxu0 %v4374
        %4678 = vmatprep.subr.bf16.mxu0 0
        %4679 = vmatpush1.bf16.msra.mxu0 %v4375
        %4680 = vmatprep.subr.bf16.mxu0 0
        %4681 = vmatpush1.bf16.msra.mxu0 %v4376
        %4682 = vmatprep.mubr.bf16.mxu0 %v3724
        %4683 = vmatmul.mubr.bf16.gmra.mrb[0].mxu0 %v3851
        %v4684 = vpop.f32.mrb[0].mxu0
        %v4685 = vadd.f32 %v4524, %v4684
        %v4686 = vpop.f32.mrb[0].mxu0
        %v4687 = vpop.f32.mrb[0].mxu0
        %v4688 = vadd.f32 %v4527, %v4687
        %v4689 = vpop.f32.mrb[0].mxu0
        %4690 = vmatprep.mubr.bf16.mxu0 %v3725
        %4691 = vmatmul.mubr.bf16.gmra.mrb[0].mxu0 %v3852
        %v4692 = vpop.f32.mrb[0].mxu0
        %v4693 = vadd.f32 %v4532, %v4692
        %v4694 = vpop.f32.mrb[0].mxu0
        %v4695 = vpop.f32.mrb[0].mxu0
        %v4696 = vadd.f32 %v4535, %v4695
        %v4697 = vpop.f32.mrb[0].mxu0
        %4698 = vmatprep.mubr.bf16.mxu0 %v3726
        %4699 = vmatmul.mubr.bf16.gmra.mrb[0].mxu0 %v3853
        %v4700 = vpop.f32.mrb[0].mxu0
        %v4701 = vadd.f32 %v4540, %v4700
        %v4702 = vpop.f32.mrb[0].mxu0
        %v4703 = vpop.f32.mrb[0].mxu0
        %v4704 = vadd.f32 %v4543, %v4703
        %v4705 = vpop.f32.mrb[0].mxu0
        %4706 = vmatprep.mubr.bf16.mxu0 %v3727
        %4707 = vmatmul.mubr.bf16.gmra.mrb[0].mxu0 %v3854
        %v4708 = vpop.f32.mrb[0].mxu0
        %v4709 = vadd.f32 %v4548, %v4708
        %v4710 = vpop.f32.mrb[0].mxu0
        %v4711 = vpop.f32.mrb[0].mxu0
        %v4712 = vadd.f32 %v4551, %v4711
        %v4713 = vpop.f32.mrb[0].mxu0
        %4714 = vmatprep.mubr.bf16.mxu0 %v3728
        %4715 = vmatmul.mubr.bf16.gmra.mrb[0].mxu0 %v3855
        %v4716 = vpop.f32.mrb[0].mxu0
        %v4717 = vadd.f32 %v4556, %v4716
        %v4718 = vpop.f32.mrb[0].mxu0
        %v4719 = vpop.f32.mrb[0].mxu0
        %v4720 = vadd.f32 %v4559, %v4719
        %v4721 = vpop.f32.mrb[0].mxu0
        %4722 = vmatprep.mubr.bf16.mxu0 %v3729
        %4723 = vmatmul.mubr.bf16.gmra.mrb[0].mxu0 %v3856
        %v4724 = vpop.f32.mrb[0].mxu0
        %v4725 = vadd.f32 %v4564, %v4724
        %v4726 = vpop.f32.mrb[0].mxu0
        %v4727 = vpop.f32.mrb[0].mxu0
        %v4728 = vadd.f32 %v4567, %v4727
        %v4729 = vpop.f32.mrb[0].mxu0
        %4730 = vmatprep.mubr.bf16.mxu0 %v3730
        %4731 = vmatmul.mubr.bf16.gmra.mrb[0].mxu0 %v3857
        %v4732 = vpop.f32.mrb[0].mxu0
        %v4733 = vadd.f32 %v4572, %v4732
        %v4734 = vpop.f32.mrb[0].mxu0
        %v4735 = vpop.f32.mrb[0].mxu0
        %v4736 = vadd.f32 %v4575, %v4735
        %v4737 = vpop.f32.mrb[0].mxu0
        %4738 = vmatprep.mubr.bf16.mxu0 %v3731
        %4739 = vmatmul.mubr.bf16.gmra.mrb[0].mxu0 %v3858
        %v4740 = vpop.f32.mrb[0].mxu0
        %v4741 = vadd.f32 %v4580, %v4740
        %v4742 = vpop.f32.mrb[0].mxu0
        %v4743 = vpop.f32.mrb[0].mxu0
        %v4744 = vadd.f32 %v4583, %v4743
        %v4745 = vpop.f32.mrb[0].mxu0
        %4746 = vmatprep.mubr.bf16.mxu0 %v3732
        %4747 = vmatmul.mubr.bf16.gmra.mrb[0].mxu0 %v3859
        %v4748 = vpop.f32.mrb[0].mxu0
        %v4749 = vadd.f32 %v4588, %v4748
        %v4750 = vpop.f32.mrb[0].mxu0
        %v4751 = vpop.f32.mrb[0].mxu0
        %v4752 = vadd.f32 %v4591, %v4751
        %v4753 = vpop.f32.mrb[0].mxu0
        %4754 = vmatprep.mubr.bf16.mxu0 %v3733
        %4755 = vmatmul.mubr.bf16.gmra.mrb[0].mxu0 %v3860
        %v4756 = vpop.f32.mrb[0].mxu0
        %v4757 = vadd.f32 %v4596, %v4756
        %v4758 = vpop.f32.mrb[0].mxu0
        %v4759 = vpop.f32.mrb[0].mxu0
        %v4760 = vadd.f32 %v4599, %v4759
        %v4761 = vpop.f32.mrb[0].mxu0
        %4762 = vmatprep.mubr.bf16.mxu0 %v3734
        %4763 = vmatmul.mubr.bf16.gmra.mrb[0].mxu0 %v3861
        %v4764 = vpop.f32.mrb[0].mxu0
        %v4765 = vadd.f32 %v4604, %v4764
        %v4766 = vpop.f32.mrb[0].mxu0
        %v4767 = vpop.f32.mrb[0].mxu0
        %v4768 = vadd.f32 %v4607, %v4767
        %v4769 = vpop.f32.mrb[0].mxu0
        %4770 = vmatprep.mubr.bf16.mxu0 %v3735
        %4771 = vmatmul.mubr.bf16.gmra.mrb[0].mxu0 %v3862
        %v4772 = vpop.f32.mrb[0].mxu0
        %v4773 = vadd.f32 %v4612, %v4772
        %v4774 = vpop.f32.mrb[0].mxu0
        %v4775 = vpop.f32.mrb[0].mxu0
        %v4776 = vadd.f32 %v4615, %v4775
        %v4777 = vpop.f32.mrb[0].mxu0
        %4778 = vmatprep.mubr.bf16.mxu0 %v3736
        %4779 = vmatmul.mubr.bf16.gmra.mrb[0].mxu0 %v3863
        %v4780 = vpop.f32.mrb[0].mxu0
        %v4781 = vadd.f32 %v4620, %v4780
        %v4782 = vpop.f32.mrb[0].mxu0
        %v4783 = vpop.f32.mrb[0].mxu0
        %v4784 = vadd.f32 %v4623, %v4783
        %v4785 = vpop.f32.mrb[0].mxu0
        %4786 = vmatprep.mubr.bf16.mxu0 %v3737
        %4787 = vmatmul.mubr.bf16.gmra.mrb[0].mxu0 %v3864
        %v4788 = vpop.f32.mrb[0].mxu0
        %v4789 = vadd.f32 %v4628, %v4788
        %v4790 = vpop.f32.mrb[0].mxu0
        %v4791 = vpop.f32.mrb[0].mxu0
        %v4792 = vadd.f32 %v4631, %v4791
        %v4793 = vpop.f32.mrb[0].mxu0
        %4794 = vmatprep.mubr.bf16.mxu0 %v3738
        %4795 = vmatmul.mubr.bf16.gmra.mrb[0].mxu0 %v3865
        %v4796 = vpop.f32.mrb[0].mxu0
        %v4797 = vadd.f32 %v4636, %v4796
        %v4798 = vpop.f32.mrb[0].mxu0
        %v4799 = vpop.f32.mrb[0].mxu0
        %v4800 = vadd.f32 %v4639, %v4799
        %v4801 = vpop.f32.mrb[0].mxu0
        %4802 = vmatprep.mubr.bf16.mxu0 %v3886
        %4803 = vmatmul.mubr.bf16.gmra.mrb[0].mxu0 %v3866
        %v4804 = vpop.f32.mrb[0].mxu0
        %v4805 = vadd.f32 %v4644, %v4804
        %v4806 = vpop.f32.mrb[0].mxu0
        %v4807 = vpop.f32.mrb[0].mxu0
        %v4808 = vadd.f32 %v4647, %v4807
        %v4809 = vpop.f32.mrb[0].mxu0
        %4810 = vdwg.mxu0
        %4811 = vmatprep.subr.bf16.mxu0 0
        %4812 = vmatpush1.bf16.msra.mxu0 %v4377
        %4813 = vmatprep.subr.bf16.mxu0 0
        %4814 = vmatpush1.bf16.msra.mxu0 %v4378
        %4815 = vmatprep.subr.bf16.mxu0 0
        %4816 = vmatpush1.bf16.msra.mxu0 %v4379
        %4817 = vmatprep.subr.bf16.mxu0 0
        %4818 = vmatpush1.bf16.msra.mxu0 %v4380
        %4819 = vmatprep.subr.bf16.mxu0 0
        %4820 = vmatpush1.bf16.msra.mxu0 %v4381
        %4821 = vmatprep.subr.bf16.mxu0 0
        %4822 = vmatpush1.bf16.msra.mxu0 %v4382
        %4823 = vmatprep.subr.bf16.mxu0 0
        %4824 = vmatpush1.bf16.msra.mxu0 %v4383
        %4825 = vmatprep.subr.bf16.mxu0 0
        %4826 = vmatpush1.bf16.msra.mxu0 %v4384
        %4827 = vmatprep.subr.bf16.mxu0 0
        %4828 = vmatpush1.bf16.msra.mxu0 %v4385
        %4829 = vmatprep.subr.bf16.mxu0 0
        %4830 = vmatpush1.bf16.msra.mxu0 %v4386
        %4831 = vmatprep.subr.bf16.mxu0 0
        %4832 = vmatpush1.bf16.msra.mxu0 %v4387
        %4833 = vmatprep.subr.bf16.mxu0 0
        %4834 = vmatpush1.bf16.msra.mxu0 %v4388
        %4835 = vmatprep.subr.bf16.mxu0 0
        %4836 = vmatpush1.bf16.msra.mxu0 %v4389
        %4837 = vmatprep.subr.bf16.mxu0 0
        %4838 = vmatpush1.bf16.msra.mxu0 %v4390
        %4839 = vmatprep.subr.bf16.mxu0 0
        %4840 = vmatpush1.bf16.msra.mxu0 %v4391
        %4841 = vmatprep.subr.bf16.mxu0 0
        %4842 = vmatpush1.bf16.msra.mxu0 %v4392
        %4843 = vmatprep.mubr.bf16.mxu0 %v3852
        %4844 = vmatmul.mubr.bf16.gmra.mrb[0].mxu0 %v3788
        %v4845 = vpop.f32.mrb[0].mxu0
        %v4846 = vadd.f32 %v4685, %v4845
        %v4847 = vpop.f32.mrb[0].mxu0
        %v4848 = vpop.f32.mrb[0].mxu0
        %v4849 = vadd.f32 %v4688, %v4848
        %v4850 = vpop.f32.mrb[0].mxu0
        %4851 = vmatprep.mubr.bf16.mxu0 %v3853
        %4852 = vmatmul.mubr.bf16.gmra.mrb[0].mxu0 %v3789
        %v4853 = vpop.f32.mrb[0].mxu0
        %v4854 = vadd.f32 %v4693, %v4853
        %v4855 = vpop.f32.mrb[0].mxu0
        %v4856 = vpop.f32.mrb[0].mxu0
        %v4857 = vadd.f32 %v4696, %v4856
        %v4858 = vpop.f32.mrb[0].mxu0
        %4859 = vmatprep.mubr.bf16.mxu0 %v3854
        %4860 = vmatmul.mubr.bf16.gmra.mrb[0].mxu0 %v3790
        %v4861 = vpop.f32.mrb[0].mxu0
        %v4862 = vadd.f32 %v4701, %v4861
        %v4863 = vpop.f32.mrb[0].mxu0
        %v4864 = vpop.f32.mrb[0].mxu0
        %v4865 = vadd.f32 %v4704, %v4864
        %v4866 = vpop.f32.mrb[0].mxu0
        %4867 = vmatprep.mubr.bf16.mxu0 %v3855
        %4868 = vmatmul.mubr.bf16.gmra.mrb[0].mxu0 %v3791
        %v4869 = vpop.f32.mrb[0].mxu0
        %v4870 = vadd.f32 %v4709, %v4869
        %v4871 = vpop.f32.mrb[0].mxu0
        %v4872 = vpop.f32.mrb[0].mxu0
        %v4873 = vadd.f32 %v4712, %v4872
        %v4874 = vpop.f32.mrb[0].mxu0
        %4875 = vmatprep.mubr.bf16.mxu0 %v3856
        %4876 = vmatmul.mubr.bf16.gmra.mrb[0].mxu0 %v3792
        %v4877 = vpop.f32.mrb[0].mxu0
        %v4878 = vadd.f32 %v4717, %v4877
        %v4879 = vpop.f32.mrb[0].mxu0
        %v4880 = vpop.f32.mrb[0].mxu0
        %v4881 = vadd.f32 %v4720, %v4880
        %v4882 = vpop.f32.mrb[0].mxu0
        %4883 = vmatprep.mubr.bf16.mxu0 %v3857
        %4884 = vmatmul.mubr.bf16.gmra.mrb[0].mxu0 %v3793
        %v4885 = vpop.f32.mrb[0].mxu0
        %v4886 = vadd.f32 %v4725, %v4885
        %v4887 = vpop.f32.mrb[0].mxu0
        %v4888 = vpop.f32.mrb[0].mxu0
        %v4889 = vadd.f32 %v4728, %v4888
        %v4890 = vpop.f32.mrb[0].mxu0
        %4891 = vmatprep.mubr.bf16.mxu0 %v3858
        %4892 = vmatmul.mubr.bf16.gmra.mrb[0].mxu0 %v3794
        %v4893 = vpop.f32.mrb[0].mxu0
        %v4894 = vadd.f32 %v4733, %v4893
        %v4895 = vpop.f32.mrb[0].mxu0
        %v4896 = vpop.f32.mrb[0].mxu0
        %v4897 = vadd.f32 %v4736, %v4896
        %v4898 = vpop.f32.mrb[0].mxu0
        %4899 = vmatprep.mubr.bf16.mxu0 %v3859
        %4900 = vmatmul.mubr.bf16.gmra.mrb[0].mxu0 %v3795
        %v4901 = vpop.f32.mrb[0].mxu0
        %v4902 = vadd.f32 %v4741, %v4901
        %v4903 = vpop.f32.mrb[0].mxu0
        %v4904 = vpop.f32.mrb[0].mxu0
        %v4905 = vadd.f32 %v4744, %v4904
        %v4906 = vpop.f32.mrb[0].mxu0
        %4907 = vmatprep.mubr.bf16.mxu0 %v3860
        %4908 = vmatmul.mubr.bf16.gmra.mrb[0].mxu0 %v3796
        %v4909 = vpop.f32.mrb[0].mxu0
        %v4910 = vadd.f32 %v4749, %v4909
        %v4911 = vpop.f32.mrb[0].mxu0
        %v4912 = vpop.f32.mrb[0].mxu0
        %v4913 = vadd.f32 %v4752, %v4912
        %v4914 = vpop.f32.mrb[0].mxu0
        %4915 = vmatprep.mubr.bf16.mxu0 %v3861
        %4916 = vmatmul.mubr.bf16.gmra.mrb[0].mxu0 %v3797
        %v4917 = vpop.f32.mrb[0].mxu0
        %v4918 = vadd.f32 %v4757, %v4917
        %v4919 = vpop.f32.mrb[0].mxu0
        %v4920 = vpop.f32.mrb[0].mxu0
        %v4921 = vadd.f32 %v4760, %v4920
        %v4922 = vpop.f32.mrb[0].mxu0
        %4923 = vmatprep.mubr.bf16.mxu0 %v3862
        %4924 = vmatmul.mubr.bf16.gmra.mrb[0].mxu0 %v3798
        %v4925 = vpop.f32.mrb[0].mxu0
        %v4926 = vadd.f32 %v4765, %v4925
        %v4927 = vpop.f32.mrb[0].mxu0
        %v4928 = vpop.f32.mrb[0].mxu0
        %v4929 = vadd.f32 %v4768, %v4928
        %v4930 = vpop.f32.mrb[0].mxu0
        %4931 = vmatprep.mubr.bf16.mxu0 %v3863
        %4932 = vmatmul.mubr.bf16.gmra.mrb[0].mxu0 %v3799
        %v4933 = vpop.f32.mrb[0].mxu0
        %v4934 = vadd.f32 %v4773, %v4933
        %v4935 = vpop.f32.mrb[0].mxu0
        %v4936 = vpop.f32.mrb[0].mxu0
        %v4937 = vadd.f32 %v4776, %v4936
        %v4938 = vpop.f32.mrb[0].mxu0
        %4939 = vmatprep.mubr.bf16.mxu0 %v3864
        %4940 = vmatmul.mubr.bf16.gmra.mrb[0].mxu0 %v3800
        %v4941 = vpop.f32.mrb[0].mxu0
        %v4942 = vadd.f32 %v4781, %v4941
        %v4943 = vpop.f32.mrb[0].mxu0
        %v4944 = vpop.f32.mrb[0].mxu0
        %v4945 = vadd.f32 %v4784, %v4944
        %v4946 = vpop.f32.mrb[0].mxu0
        %4947 = vmatprep.mubr.bf16.mxu0 %v3865
        %4948 = vmatmul.mubr.bf16.gmra.mrb[0].mxu0 %v3801
        %v4949 = vpop.f32.mrb[0].mxu0
        %v4950 = vadd.f32 %v4789, %v4949
        %v4951 = vpop.f32.mrb[0].mxu0
        %v4952 = vpop.f32.mrb[0].mxu0
        %v4953 = vadd.f32 %v4792, %v4952
        %v4954 = vpop.f32.mrb[0].mxu0
        %4955 = vmatprep.mubr.bf16.mxu0 %v3866
        %4956 = vmatmul.mubr.bf16.gmra.mrb[0].mxu0 %v3802
        %v4957 = vpop.f32.mrb[0].mxu0
        %v4958 = vadd.f32 %v4797, %v4957
        %v4959 = vpop.f32.mrb[0].mxu0
        %v4960 = vpop.f32.mrb[0].mxu0
        %v4961 = vadd.f32 %v4800, %v4960
        %v4962 = vpop.f32.mrb[0].mxu0
        %4963 = vmatprep.mubr.bf16.mxu0 %v3894
        %4964 = vmatmul.mubr.bf16.gmra.mrb[0].mxu0 %v3890
        %v4965 = vpop.f32.mrb[0].mxu0
        %v4966 = vadd.f32 %v4805, %v4965
        %v4967 = vpop.f32.mrb[0].mxu0
        %v4968 = vpop.f32.mrb[0].mxu0
        %v4969 = vadd.f32 %v4808, %v4968
        %v4970 = vpop.f32.mrb[0].mxu0
        %4971 = vdwg.mxu0
        %4972 = vmatprep.subr.bf16.mxu0 0
        %4973 = vmatpush1.bf16.msra.mxu0 %v4393
        %4974 = vmatprep.subr.bf16.mxu0 0
        %4975 = vmatpush1.bf16.msra.mxu0 %v4394
        %4976 = vmatprep.subr.bf16.mxu0 0
        %4977 = vmatpush1.bf16.msra.mxu0 %v4395
        %4978 = vmatprep.subr.bf16.mxu0 0
        %4979 = vmatpush1.bf16.msra.mxu0 %v4396
        %4980 = vmatprep.subr.bf16.mxu0 0
        %4981 = vmatpush1.bf16.msra.mxu0 %v4397
        %4982 = vmatprep.subr.bf16.mxu0 0
        %4983 = vmatpush1.bf16.msra.mxu0 %v4398
        %4984 = vmatprep.subr.bf16.mxu0 0
        %4985 = vmatpush1.bf16.msra.mxu0 %v4399
        %4986 = vmatprep.subr.bf16.mxu0 0
        %4987 = vmatpush1.bf16.msra.mxu0 %v4400
        %4988 = vmatprep.subr.bf16.mxu0 0
        %4989 = vmatpush1.bf16.msra.mxu0 %v4401
        %4990 = vmatprep.subr.bf16.mxu0 0
        %4991 = vmatpush1.bf16.msra.mxu0 %v4402
        %4992 = vmatprep.subr.bf16.mxu0 0
        %4993 = vmatpush1.bf16.msra.mxu0 %v4403
        %4994 = vmatprep.subr.bf16.mxu0 0
        %4995 = vmatpush1.bf16.msra.mxu0 %v4404
        %4996 = vmatprep.subr.bf16.mxu0 0
        %4997 = vmatpush1.bf16.msra.mxu0 %v4405
        %4998 = vmatprep.subr.bf16.mxu0 0
        %4999 = vmatpush1.bf16.msra.mxu0 %v4406
        %5000 = vmatprep.subr.bf16.mxu0 0
        %5001 = vmatpush1.bf16.msra.mxu0 %v4407
        %5002 = vmatprep.subr.bf16.mxu0 0
        %5003 = vmatpush1.bf16.msra.mxu0 %v4408
        %5004 = vmatprep.mubr.bf16.mxu0 %v3789
        %5005 = vmatmul.mubr.bf16.gmra.mrb[0].mxu0 %v3725
        %v5006 = vpop.f32.mrb[0].mxu0
        %v5007 = vadd.f32 %v4846, %v5006
        %v5008 = vpop.f32.mrb[0].mxu0
        %v5009 = vpop.f32.mrb[0].mxu0
        %v5010 = vadd.f32 %v4849, %v5009
        %v5011 = vpop.f32.mrb[0].mxu0
        %5012 = vmatprep.mubr.bf16.mxu0 %v3790
        %5013 = vmatmul.mubr.bf16.gmra.mrb[0].mxu0 %v3726
        %v5014 = vpop.f32.mrb[0].mxu0
        %v5015 = vadd.f32 %v4854, %v5014
        %v5016 = vpop.f32.mrb[0].mxu0
        %v5017 = vpop.f32.mrb[0].mxu0
        %v5018 = vadd.f32 %v4857, %v5017
        %v5019 = vpop.f32.mrb[0].mxu0
        %5020 = vmatprep.mubr.bf16.mxu0 %v3791
        %5021 = vmatmul.mubr.bf16.gmra.mrb[0].mxu0 %v3727
        %v5022 = vpop.f32.mrb[0].mxu0
        %v5023 = vadd.f32 %v4862, %v5022
        %v5024 = vpop.f32.mrb[0].mxu0
        %v5025 = vpop.f32.mrb[0].mxu0
        %v5026 = vadd.f32 %v4865, %v5025
        %v5027 = vpop.f32.mrb[0].mxu0
        %5028 = vmatprep.mubr.bf16.mxu0 %v3792
        %5029 = vmatmul.mubr.bf16.gmra.mrb[0].mxu0 %v3728
        %v5030 = vpop.f32.mrb[0].mxu0
        %v5031 = vadd.f32 %v4870, %v5030
        %v5032 = vpop.f32.mrb[0].mxu0
        %v5033 = vpop.f32.mrb[0].mxu0
        %v5034 = vadd.f32 %v4873, %v5033
        %v5035 = vpop.f32.mrb[0].mxu0
        %5036 = vmatprep.mubr.bf16.mxu0 %v3793
        %5037 = vmatmul.mubr.bf16.gmra.mrb[0].mxu0 %v3729
        %v5038 = vpop.f32.mrb[0].mxu0
        %v5039 = vadd.f32 %v4878, %v5038
        %v5040 = vpop.f32.mrb[0].mxu0
        %v5041 = vpop.f32.mrb[0].mxu0
        %v5042 = vadd.f32 %v4881, %v5041
        %v5043 = vpop.f32.mrb[0].mxu0
        %5044 = vmatprep.mubr.bf16.mxu0 %v3794
        %5045 = vmatmul.mubr.bf16.gmra.mrb[0].mxu0 %v3730
        %v5046 = vpop.f32.mrb[0].mxu0
        %v5047 = vadd.f32 %v4886, %v5046
        %v5048 = vpop.f32.mrb[0].mxu0
        %v5049 = vpop.f32.mrb[0].mxu0
        %v5050 = vadd.f32 %v4889, %v5049
        %v5051 = vpop.f32.mrb[0].mxu0
        %5052 = vmatprep.mubr.bf16.mxu0 %v3795
        %5053 = vmatmul.mubr.bf16.gmra.mrb[0].mxu0 %v3731
        %v5054 = vpop.f32.mrb[0].mxu0
        %v5055 = vadd.f32 %v4894, %v5054
        %v5056 = vpop.f32.mrb[0].mxu0
        %v5057 = vpop.f32.mrb[0].mxu0
        %v5058 = vadd.f32 %v4897, %v5057
        %v5059 = vpop.f32.mrb[0].mxu0
        %5060 = vmatprep.mubr.bf16.mxu0 %v3796
        %5061 = vmatmul.mubr.bf16.gmra.mrb[0].mxu0 %v3732
        %v5062 = vpop.f32.mrb[0].mxu0
        %v5063 = vadd.f32 %v4902, %v5062
        %v5064 = vpop.f32.mrb[0].mxu0
        %v5065 = vpop.f32.mrb[0].mxu0
        %v5066 = vadd.f32 %v4905, %v5065
        %v5067 = vpop.f32.mrb[0].mxu0
        %5068 = vmatprep.mubr.bf16.mxu0 %v3797
        %5069 = vmatmul.mubr.bf16.gmra.mrb[0].mxu0 %v3733
        %v5070 = vpop.f32.mrb[0].mxu0
        %v5071 = vadd.f32 %v4910, %v5070
        %v5072 = vpop.f32.mrb[0].mxu0
        %v5073 = vpop.f32.mrb[0].mxu0
        %v5074 = vadd.f32 %v4913, %v5073
        %v5075 = vpop.f32.mrb[0].mxu0
        %5076 = vmatprep.mubr.bf16.mxu0 %v3798
        %5077 = vmatmul.mubr.bf16.gmra.mrb[0].mxu0 %v3734
        %v5078 = vpop.f32.mrb[0].mxu0
        %v5079 = vadd.f32 %v4918, %v5078
        %v5080 = vpop.f32.mrb[0].mxu0
        %v5081 = vpop.f32.mrb[0].mxu0
        %v5082 = vadd.f32 %v4921, %v5081
        %v5083 = vpop.f32.mrb[0].mxu0
        %5084 = vmatprep.mubr.bf16.mxu0 %v3799
        %5085 = vmatmul.mubr.bf16.gmra.mrb[0].mxu0 %v3735
        %v5086 = vpop.f32.mrb[0].mxu0
        %v5087 = vadd.f32 %v4926, %v5086
        %v5088 = vpop.f32.mrb[0].mxu0
        %v5089 = vpop.f32.mrb[0].mxu0
        %v5090 = vadd.f32 %v4929, %v5089
        %v5091 = vpop.f32.mrb[0].mxu0
        %5092 = vmatprep.mubr.bf16.mxu0 %v3800
        %5093 = vmatmul.mubr.bf16.gmra.mrb[0].mxu0 %v3736
        %v5094 = vpop.f32.mrb[0].mxu0
        %v5095 = vadd.f32 %v4934, %v5094
        %v5096 = vpop.f32.mrb[0].mxu0
        %v5097 = vpop.f32.mrb[0].mxu0
        %v5098 = vadd.f32 %v4937, %v5097
        %v5099 = vpop.f32.mrb[0].mxu0
        %5100 = vmatprep.mubr.bf16.mxu0 %v3801
        %5101 = vmatmul.mubr.bf16.gmra.mrb[0].mxu0 %v3737
        %v5102 = vpop.f32.mrb[0].mxu0
        %v5103 = vadd.f32 %v4942, %v5102
        %v5104 = vpop.f32.mrb[0].mxu0
        %v5105 = vpop.f32.mrb[0].mxu0
        %v5106 = vadd.f32 %v4945, %v5105
        %v5107 = vpop.f32.mrb[0].mxu0
        %5108 = vmatprep.mubr.bf16.mxu0 %v3802
        %5109 = vmatmul.mubr.bf16.gmra.mrb[0].mxu0 %v3738
        %v5110 = vpop.f32.mrb[0].mxu0
        %v5111 = vadd.f32 %v4950, %v5110
        %v5112 = vpop.f32.mrb[0].mxu0
        %v5113 = vpop.f32.mrb[0].mxu0
        %v5114 = vadd.f32 %v4953, %v5113
        %v5115 = vpop.f32.mrb[0].mxu0
        %5116 = vmatprep.mubr.bf16.mxu0 %v3890
        %5117 = vmatmul.mubr.bf16.gmra.mrb[0].mxu0 %v3886
        %v5118 = vpop.f32.mrb[0].mxu0
        %v5119 = vadd.f32 %v4958, %v5118
        %v5120 = vpop.f32.mrb[0].mxu0
        %v5121 = vpop.f32.mrb[0].mxu0
        %v5122 = vadd.f32 %v4961, %v5121
        %v5123 = vpop.f32.mrb[0].mxu0
        %5124 = vmatprep.mubr.bf16.mxu0 %v3903
        %5125 = vmatmul.mubr.bf16.gmra.mrb[0].mxu0 %v3899
        %v5126 = vpop.f32.mrb[0].mxu0
        %v5127 = vadd.f32 %v4966, %v5126
        %v5128 = vpop.f32.mrb[0].mxu0
        %v5129 = vpop.f32.mrb[0].mxu0
        %v5130 = vadd.f32 %v4969, %v5129
        %v5131 = vpop.f32.mrb[0].mxu0
        %5132 = vdwg.mxu0
        %5133 = vmatprep.subr.bf16.mxu0 0
        %5134 = vmatpush1.bf16.msra.mxu0 %v4409
        %5135 = vmatprep.subr.bf16.mxu0 0
        %5136 = vmatpush1.bf16.msra.mxu0 %v4410
        %5137 = vmatprep.subr.bf16.mxu0 0
        %5138 = vmatpush1.bf16.msra.mxu0 %v4411
        %5139 = vmatprep.subr.bf16.mxu0 0
        %5140 = vmatpush1.bf16.msra.mxu0 %v4412
        %5141 = vmatprep.subr.bf16.mxu0 0
        %5142 = vmatpush1.bf16.msra.mxu0 %v4413
        %5143 = vmatprep.subr.bf16.mxu0 0
        %5144 = vmatpush1.bf16.msra.mxu0 %v4414
        %5145 = vmatprep.subr.bf16.mxu0 0
        %5146 = vmatpush1.bf16.msra.mxu0 %v4415
        %5147 = vmatprep.subr.bf16.mxu0 0
        %5148 = vmatpush1.bf16.msra.mxu0 %v4416
        %5149 = vmatprep.subr.bf16.mxu0 0
        %5150 = vmatpush1.bf16.msra.mxu0 0
        %5151 = vmatprep.subr.bf16.mxu0 0
        %5152 = vmatpush1.bf16.msra.mxu0 0
        %5153 = vmatprep.subr.bf16.mxu0 0
        %5154 = vmatpush1.bf16.msra.mxu0 0
        %5155 = vmatprep.subr.bf16.mxu0 0
        %5156 = vmatpush1.bf16.msra.mxu0 0
        %5157 = vmatprep.subr.bf16.mxu0 0
        %5158 = vmatpush1.bf16.msra.mxu0 0
        %5159 = vmatprep.subr.bf16.mxu0 0
        %5160 = vmatpush1.bf16.msra.mxu0 0
        %5161 = vmatprep.subr.bf16.mxu0 0
        %5162 = vmatpush1.bf16.msra.mxu0 0
        %5163 = vmatprep.subr.bf16.mxu0 0
        %5164 = vmatpush1.bf16.msra.mxu0 0
        %5165 = vmatprep.mubr.bf16.mxu0 0
        %5166 = vmatmul.mubr.bf16.gmra.mrb[0].mxu0 %v3853
        %v5167 = vpop.f32.mrb[0].mxu0
        %v5168 = vadd.f32 %v5007, %v5167
        %v5169 = vpop.f32.mrb[0].mxu0
        %v5170 = vpop.f32.mrb[0].mxu0
        %v5171 = vadd.f32 %v5010, %v5170
        %v5172 = vpop.f32.mrb[0].mxu0
        %5173 = vmatprep.mubr.bf16.mxu0 0
        %5174 = vmatmul.mubr.bf16.gmra.mrb[0].mxu0 %v3854
        %v5175 = vpop.f32.mrb[0].mxu0
        %v5176 = vadd.f32 %v5015, %v5175
        %v5177 = vpop.f32.mrb[0].mxu0
        %v5178 = vpop.f32.mrb[0].mxu0
        %v5179 = vadd.f32 %v5018, %v5178
        %v5180 = vpop.f32.mrb[0].mxu0
        %5181 = vmatprep.mubr.bf16.mxu0 0
        %5182 = vmatmul.mubr.bf16.gmra.mrb[0].mxu0 %v3855
        %v5183 = vpop.f32.mrb[0].mxu0
        %v5184 = vadd.f32 %v5023, %v5183
        %v5185 = vpop.f32.mrb[0].mxu0
        %v5186 = vpop.f32.mrb[0].mxu0
        %v5187 = vadd.f32 %v5026, %v5186
        %v5188 = vpop.f32.mrb[0].mxu0
        %5189 = vmatprep.mubr.bf16.mxu0 0
        %5190 = vmatmul.mubr.bf16.gmra.mrb[0].mxu0 %v3856
        %v5191 = vpop.f32.mrb[0].mxu0
        %v5192 = vadd.f32 %v5031, %v5191
        %v5193 = vpop.f32.mrb[0].mxu0
        %v5194 = vpop.f32.mrb[0].mxu0
        %v5195 = vadd.f32 %v5034, %v5194
        %v5196 = vpop.f32.mrb[0].mxu0
        %5197 = vmatprep.mubr.bf16.mxu0 0
        %5198 = vmatmul.mubr.bf16.gmra.mrb[0].mxu0 %v3857
        %v5199 = vpop.f32.mrb[0].mxu0
        %v5200 = vadd.f32 %v5039, %v5199
        %v5201 = vpop.f32.mrb[0].mxu0
        %v5202 = vpop.f32.mrb[0].mxu0
        %v5203 = vadd.f32 %v5042, %v5202
        %v5204 = vpop.f32.mrb[0].mxu0
        %5205 = vmatprep.mubr.bf16.mxu0 0
        %5206 = vmatmul.mubr.bf16.gmra.mrb[0].mxu0 %v3858
        %v5207 = vpop.f32.mrb[0].mxu0
        %v5208 = vadd.f32 %v5047, %v5207
        %v5209 = vpop.f32.mrb[0].mxu0
        %v5210 = vpop.f32.mrb[0].mxu0
        %v5211 = vadd.f32 %v5050, %v5210
        %v5212 = vpop.f32.mrb[0].mxu0
        %5213 = vmatprep.mubr.bf16.mxu0 0
        %5214 = vmatmul.mubr.bf16.gmra.mrb[0].mxu0 %v3859
        %v5215 = vpop.f32.mrb[0].mxu0
        %v5216 = vadd.f32 %v5055, %v5215
        %v5217 = vpop.f32.mrb[0].mxu0
        %v5218 = vpop.f32.mrb[0].mxu0
        %v5219 = vadd.f32 %v5058, %v5218
        %v5220 = vpop.f32.mrb[0].mxu0
        %5221 = vmatprep.mubr.bf16.mxu0 0
        %5222 = vmatmul.mubr.bf16.gmra.mrb[0].mxu0 %v3860
        %v5223 = vpop.f32.mrb[0].mxu0
        %v5224 = vadd.f32 %v5063, %v5223
        %v5225 = vpop.f32.mrb[0].mxu0
        %v5226 = vpop.f32.mrb[0].mxu0
        %v5227 = vadd.f32 %v5066, %v5226
        %v5228 = vpop.f32.mrb[0].mxu0
        %5229 = vmatprep.mubr.bf16.mxu0 0
        %5230 = vmatmul.mubr.bf16.gmra.mrb[0].mxu0 %v3861
        %v5231 = vpop.f32.mrb[0].mxu0
        %v5232 = vadd.f32 %v5071, %v5231
        %v5233 = vpop.f32.mrb[0].mxu0
        %v5234 = vpop.f32.mrb[0].mxu0
        %v5235 = vadd.f32 %v5074, %v5234
        %v5236 = vpop.f32.mrb[0].mxu0
        %5237 = vmatprep.mubr.bf16.mxu0 0
        %5238 = vmatmul.mubr.bf16.gmra.mrb[0].mxu0 %v3862
        %v5239 = vpop.f32.mrb[0].mxu0
        %v5240 = vadd.f32 %v5079, %v5239
        %v5241 = vpop.f32.mrb[0].mxu0
        %v5242 = vpop.f32.mrb[0].mxu0
        %v5243 = vadd.f32 %v5082, %v5242
        %v5244 = vpop.f32.mrb[0].mxu0
        %5245 = vmatprep.mubr.bf16.mxu0 0
        %5246 = vmatmul.mubr.bf16.gmra.mrb[0].mxu0 %v3863
        %v5247 = vpop.f32.mrb[0].mxu0
        %v5248 = vadd.f32 %v5087, %v5247
        %v5249 = vpop.f32.mrb[0].mxu0
        %v5250 = vpop.f32.mrb[0].mxu0
        %v5251 = vadd.f32 %v5090, %v5250
        %v5252 = vpop.f32.mrb[0].mxu0
        %5253 = vmatprep.mubr.bf16.mxu0 0
        %5254 = vmatmul.mubr.bf16.gmra.mrb[0].mxu0 %v3864
        %v5255 = vpop.f32.mrb[0].mxu0
        %v5256 = vadd.f32 %v5095, %v5255
        %v5257 = vpop.f32.mrb[0].mxu0
        %v5258 = vpop.f32.mrb[0].mxu0
        %v5259 = vadd.f32 %v5098, %v5258
        %v5260 = vpop.f32.mrb[0].mxu0
        %5261 = vmatprep.mubr.bf16.mxu0 0
        %5262 = vmatmul.mubr.bf16.gmra.mrb[0].mxu0 %v3865
        %v5263 = vpop.f32.mrb[0].mxu0
        %v5264 = vadd.f32 %v5103, %v5263
        %v5265 = vpop.f32.mrb[0].mxu0
        %v5266 = vpop.f32.mrb[0].mxu0
        %v5267 = vadd.f32 %v5106, %v5266
        %v5268 = vpop.f32.mrb[0].mxu0
        %5269 = vmatprep.mubr.bf16.mxu0 0
        %5270 = vmatmul.mubr.bf16.gmra.mrb[0].mxu0 %v3866
        %v5271 = vpop.f32.mrb[0].mxu0
        %v5272 = vadd.f32 %v5111, %v5271
        %v5273 = vpop.f32.mrb[0].mxu0
        %v5274 = vpop.f32.mrb[0].mxu0
        %v5275 = vadd.f32 %v5114, %v5274
        %v5276 = vpop.f32.mrb[0].mxu0
        %5277 = vmatprep.mubr.bf16.mxu0 0
        %5278 = vmatmul.mubr.bf16.gmra.mrb[0].mxu0 %v3894
        %v5279 = vpop.f32.mrb[0].mxu0
        %v5280 = vadd.f32 %v5119, %v5279
        %v5281 = vpop.f32.mrb[0].mxu0
        %v5282 = vpop.f32.mrb[0].mxu0
        %v5283 = vadd.f32 %v5122, %v5282
        %v5284 = vpop.f32.mrb[0].mxu0
        %5285 = vmatprep.mubr.bf16.mxu0 0
        %5286 = vmatmul.mubr.bf16.gmra.mrb[0].mxu0 %v3907
        %v5287 = vpop.f32.mrb[0].mxu0
        %v5288 = vadd.f32 %v5127, %v5287
        %v5289 = vpop.f32.mrb[0].mxu0
        %v5290 = vpop.f32.mrb[0].mxu0
        %v5291 = vadd.f32 %v5130, %v5290
        %v5292 = vpop.f32.mrb[0].mxu0
        %5293 = vdwg.mxu0
        %vm5342 = vcmask 1046528
        %v5343 = vrot.slane %v227, 1
        %v5344 = vrot.slane %v228, 1
        %v5345 = vsel %vm5342, %v5343, %v5344
        %v5346 = vrot.slane %v229, 1
        %v5347 = vsel %vm5342, %v5344, %v5346
        %v5348 = vrot.slane %v230, 1
        %v5349 = vrot.slane %v231, 1
        %v5350 = vsel %vm5342, %v5348, %v5349
        %v5351 = vrot.slane %v232, 1
        %v5352 = vsel %vm5342, %v5349, %v5351
        %v5353 = vrot.slane %v233, 1
        %v5354 = vrot.slane %v234, 1
        %v5355 = vsel %vm5342, %v5353, %v5354
        %v5356 = vrot.slane %v235, 1
        %v5357 = vsel %vm5342, %v5354, %v5356
        %v5358 = vrot.slane %v236, 1
        %v5359 = vrot.slane %v237, 1
        %v5360 = vsel %vm5342, %v5358, %v5359
        %v5361 = vrot.slane %v238, 1
        %v5362 = vsel %vm5342, %v5359, %v5361
        %v5363 = vrot.slane %v239, 1
        %v5364 = vrot.slane %v240, 1
        %v5365 = vsel %vm5342, %v5363, %v5364
        %v5366 = vrot.slane %v241, 1
        %v5367 = vsel %vm5342, %v5364, %v5366
        %v5368 = vrot.slane %v242, 1
        %v5369 = vrot.slane %v243, 1
        %v5370 = vsel %vm5342, %v5368, %v5369
        %v5371 = vrot.slane %v244, 1
        %v5372 = vsel %vm5342, %v5369, %v5371
        %v5373 = vrot.slane %v245, 1
        %v5374 = vrot.slane %v246, 1
        %v5375 = vsel %vm5342, %v5373, %v5374
        %v5376 = vrot.slane %v247, 1
        %v5377 = vsel %vm5342, %v5374, %v5376
        %v5378 = vrot.slane %v248, 1
        %v5379 = vrot.slane %v249, 1
        %v5380 = vsel %vm5342, %v5378, %v5379
        %v5381 = vrot.slane %v250, 1
        %v5382 = vsel %vm5342, %v5379, %v5381
        %v5383 = vrot.slane %v251, 1
        %v5384 = vrot.slane %v252, 1
        %v5385 = vsel %vm5342, %v5383, %v5384
        %v5386 = vrot.slane %v253, 1
        %v5387 = vsel %vm5342, %v5384, %v5386
        %v5388 = vrot.slane %v254, 1
        %v5389 = vrot.slane %v255, 1
        %v5390 = vsel %vm5342, %v5388, %v5389
        %v5391 = vrot.slane %v256, 1
        %v5392 = vsel %vm5342, %v5389, %v5391
        %v5393 = vrot.slane %v257, 1
        %v5394 = vrot.slane %v258, 1
        %v5395 = vsel %vm5342, %v5393, %v5394
        %v5396 = vrot.slane %v259, 1
        %v5397 = vsel %vm5342, %v5394, %v5396
        %v5398 = vrot.slane %v260, 1
        %v5399 = vrot.slane %v261, 1
        %v5400 = vsel %vm5342, %v5398, %v5399
        %v5401 = vrot.slane %v262, 1
        %v5402 = vsel %vm5342, %v5399, %v5401
        %v5403 = vrot.slane %v263, 1
        %v5404 = vrot.slane %v264, 1
        %v5405 = vsel %vm5342, %v5403, %v5404
        %v5406 = vrot.slane %v265, 1
        %v5407 = vsel %vm5342, %v5404, %v5406
        %v5408 = vrot.slane %v266, 1
        %v5409 = vrot.slane %v267, 1
        %v5410 = vsel %vm5342, %v5408, %v5409
        %v5411 = vrot.slane %v268, 1
        %v5412 = vsel %vm5342, %v5409, %v5411
        %v5413 = vrot.slane %v269, 1
        %v5414 = vrot.slane %v270, 1
        %v5415 = vsel %vm5342, %v5413, %v5414
        %v5416 = vrot.slane %v271, 1
        %v5417 = vsel %vm5342, %v5414, %v5416
        %v5418 = vrot.slane %v272, 1
        %v5419 = vrot.slane %v273, 1
        %v5420 = vsel %vm5342, %v5418, %v5419
        %v5421 = vrot.slane %v274, 1
        %v5422 = vsel %vm5342, %v5419, %v5421
        %v5455 = vpack.c.bf16 %v5347, %v5345
        %v5456 = vpack.c.bf16 %v5352, %v5350
        %v5457 = vpack.c.bf16 %v5357, %v5355
        %v5458 = vpack.c.bf16 %v5362, %v5360
        %v5459 = vpack.c.bf16 %v5367, %v5365
        %v5460 = vpack.c.bf16 %v5372, %v5370
        %v5461 = vpack.c.bf16 %v5377, %v5375
        %v5462 = vpack.c.bf16 %v5382, %v5380
        %v5463 = vpack.c.bf16 %v5387, %v5385
        %v5464 = vpack.c.bf16 %v5392, %v5390
        %v5465 = vpack.c.bf16 %v5397, %v5395
        %v5466 = vpack.c.bf16 %v5402, %v5400
        %v5467 = vpack.c.bf16 %v5407, %v5405
        %v5468 = vpack.c.bf16 %v5412, %v5410
        %v5469 = vpack.c.bf16 %v5417, %v5415
        %v5470 = vpack.c.bf16 %v5422, %v5420
        %v5471 = vld [vmem:[%s4] sm:$0xf]
        %v5472 = vld [vmem:[%s4 + $0x4] sm:$0xf]
        %v5473 = vld [vmem:[%s4 + $0x8] sm:$0xf]
        %v5474 = vld [vmem:[%s4 + $0xc] sm:$0xf]
        %v5475 = vld [vmem:[%s4 + $0x10] sm:$0xf]
        %v5476 = vld [vmem:[%s4 + $0x14] sm:$0xf]
        %v5477 = vld [vmem:[%s4 + $0x18] sm:$0xf]
        %v5478 = vld [vmem:[%s4 + $0x1c] sm:$0xf]
        %v5479 = vld [vmem:[%s4 + $0x20] sm:$0xf]
        %v5480 = vld [vmem:[%s4 + $0x24] sm:$0xf]
        %v5481 = vld [vmem:[%s4 + $0x28] sm:$0xf]
        %v5482 = vld [vmem:[%s4 + $0x2c] sm:$0xf]
        %v5483 = vld [vmem:[%s4 + $0x30] sm:$0xf]
        %v5484 = vld [vmem:[%s4 + $0x34] sm:$0xf]
        %v5485 = vld [vmem:[%s4 + $0x38] sm:$0xf]
        %v5486 = vld [vmem:[%s4 + $0x3c] sm:$0xf]
        %v5487 = vlaneseq
        %v5488 = vshrl.u32 %v5487, 7
        %v5489 = vsub.s32 2, %v5488
        %v5490 = vrot.slane %v278, %v5489
        %v5507 = vunpack.c.l.b16 %v5471
        %v5508 = vunpack.c.l.b16 %v5472
        %v5509 = vunpack.c.l.b16 %v5473
        %v5510 = vunpack.c.l.b16 %v5474
        %v5511 = vunpack.c.l.b16 %v5475
        %v5512 = vunpack.c.l.b16 %v5476
        %v5513 = vunpack.c.l.b16 %v5477
        %v5514 = vunpack.c.l.b16 %v5478
        %v5515 = vunpack.c.l.b16 %v5479
        %v5516 = vunpack.c.l.b16 %v5480
        %v5517 = vunpack.c.l.b16 %v5481
        %v5518 = vunpack.c.l.b16 %v5482
        %v5519 = vunpack.c.l.b16 %v5483
        %v5520 = vunpack.c.l.b16 %v5484
        %v5521 = vunpack.c.l.b16 %v5485
        %v5522 = vunpack.c.l.b16 %v5486
        %v5523 = vpack.c.b16 %v5508, %v5507
        %v5524 = vpack.c.b16 %v5510, %v5509
        %v5525 = vpack.c.b16 %v5512, %v5511
        %v5526 = vpack.c.b16 %v5514, %v5513
        %v5527 = vpack.c.b16 %v5516, %v5515
        %v5528 = vpack.c.b16 %v5518, %v5517
        %v5529 = vpack.c.b16 %v5520, %v5519
        %v5530 = vpack.c.b16 %v5522, %v5521
        %5539 = vmatprep.subr.bf16.mxu0 0
        %5540 = vmatpush1.bf16.msra.mxu0 %v5523
        %5541 = vmatprep.subr.bf16.mxu0 0
        %5542 = vmatpush1.bf16.msra.mxu0 %v5524
        %5543 = vmatprep.subr.bf16.mxu0 0
        %5544 = vmatpush1.bf16.msra.mxu0 %v5525
        %5545 = vmatprep.subr.bf16.mxu0 0
        %5546 = vmatpush1.bf16.msra.mxu0 %v5526
        %5547 = vmatprep.subr.bf16.mxu0 0
        %5548 = vmatpush1.bf16.msra.mxu0 %v5527
        %5549 = vmatprep.subr.bf16.mxu0 0
        %5550 = vmatpush1.bf16.msra.mxu0 %v5528
        %5551 = vmatprep.subr.bf16.mxu0 0
        %5552 = vmatpush1.bf16.msra.mxu0 %v5529
        %5553 = vmatprep.subr.bf16.mxu0 0
        %5554 = vmatpush1.bf16.msra.mxu0 %v5530
        %5555 = vmatprep.subr.bf16.mxu0 0
        %5556 = vmatpush1.bf16.msra.mxu0 0
        %5557 = vmatprep.subr.bf16.mxu0 0
        %5558 = vmatpush1.bf16.msra.mxu0 0
        %5559 = vmatprep.subr.bf16.mxu0 0
        %5560 = vmatpush1.bf16.msra.mxu0 0
        %5561 = vmatprep.subr.bf16.mxu0 0
        %5562 = vmatpush1.bf16.msra.mxu0 0
        %5563 = vmatprep.subr.bf16.mxu0 0
        %5564 = vmatpush1.bf16.msra.mxu0 0
        %5565 = vmatprep.subr.bf16.mxu0 0
        %5566 = vmatpush1.bf16.msra.mxu0 0
        %5567 = vmatprep.subr.bf16.mxu0 0
        %5568 = vmatpush1.bf16.msra.mxu0 0
        %5569 = vmatprep.subr.bf16.mxu0 0
        %5570 = vmatpush1.bf16.msra.mxu0 0
        %5571 = vmatprep.mubr.bf16.mxu0 0
        %5572 = vmatmul.mubr.bf16.gmra.mrb[0].mxu0 %v5455
        %v5573 = vpop.f32.mrb[0].mxu0
        %v5574 = vadd.f32 %v5490, %v5573
        %v5575 = vpop.f32.mrb[0].mxu0
        %v5576 = vpop.f32.mrb[0].mxu0
        %v5577 = vadd.f32 %v5490, %v5576
        %v5578 = vpop.f32.mrb[0].mxu0
        %5579 = vmatprep.mubr.bf16.mxu0 0
        %5580 = vmatmul.mubr.bf16.gmra.mrb[0].mxu0 %v5456
        %v5581 = vpop.f32.mrb[0].mxu0
        %v5582 = vadd.f32 %v5490, %v5581
        %v5583 = vpop.f32.mrb[0].mxu0
        %v5584 = vpop.f32.mrb[0].mxu0
        %v5585 = vadd.f32 %v5490, %v5584
        %v5586 = vpop.f32.mrb[0].mxu0
        %5587 = vmatprep.mubr.bf16.mxu0 0
        %5588 = vmatmul.mubr.bf16.gmra.mrb[0].mxu0 %v5457
        %v5589 = vpop.f32.mrb[0].mxu0
        %v5590 = vadd.f32 %v5490, %v5589
        %v5591 = vpop.f32.mrb[0].mxu0
        %v5592 = vpop.f32.mrb[0].mxu0
        %v5593 = vadd.f32 %v5490, %v5592
        %v5594 = vpop.f32.mrb[0].mxu0
        %5595 = vmatprep.mubr.bf16.mxu0 0
        %5596 = vmatmul.mubr.bf16.gmra.mrb[0].mxu0 %v5458
        %v5597 = vpop.f32.mrb[0].mxu0
        %v5598 = vadd.f32 %v5490, %v5597
        %v5599 = vpop.f32.mrb[0].mxu0
        %v5600 = vpop.f32.mrb[0].mxu0
        %v5601 = vadd.f32 %v5490, %v5600
        %v5602 = vpop.f32.mrb[0].mxu0
        %5603 = vmatprep.mubr.bf16.mxu0 0
        %5604 = vmatmul.mubr.bf16.gmra.mrb[0].mxu0 %v5459
        %v5605 = vpop.f32.mrb[0].mxu0
        %v5606 = vadd.f32 %v5490, %v5605
        %v5607 = vpop.f32.mrb[0].mxu0
        %v5608 = vpop.f32.mrb[0].mxu0
        %v5609 = vadd.f32 %v5490, %v5608
        %v5610 = vpop.f32.mrb[0].mxu0
        %5611 = vmatprep.mubr.bf16.mxu0 0
        %5612 = vmatmul.mubr.bf16.gmra.mrb[0].mxu0 %v5460
        %v5613 = vpop.f32.mrb[0].mxu0
        %v5614 = vadd.f32 %v5490, %v5613
        %v5615 = vpop.f32.mrb[0].mxu0
        %v5616 = vpop.f32.mrb[0].mxu0
        %v5617 = vadd.f32 %v5490, %v5616
        %v5618 = vpop.f32.mrb[0].mxu0
        %5619 = vmatprep.mubr.bf16.mxu0 0
        %5620 = vmatmul.mubr.bf16.gmra.mrb[0].mxu0 %v5461
        %v5621 = vpop.f32.mrb[0].mxu0
        %v5622 = vadd.f32 %v5490, %v5621
        %v5623 = vpop.f32.mrb[0].mxu0
        %v5624 = vpop.f32.mrb[0].mxu0
        %v5625 = vadd.f32 %v5490, %v5624
        %v5626 = vpop.f32.mrb[0].mxu0
        %5627 = vmatprep.mubr.bf16.mxu0 0
        %5628 = vmatmul.mubr.bf16.gmra.mrb[0].mxu0 %v5462
        %v5629 = vpop.f32.mrb[0].mxu0
        %v5630 = vadd.f32 %v5490, %v5629
        %v5631 = vpop.f32.mrb[0].mxu0
        %v5632 = vpop.f32.mrb[0].mxu0
        %v5633 = vadd.f32 %v5490, %v5632
        %v5634 = vpop.f32.mrb[0].mxu0
        %5635 = vmatprep.mubr.bf16.mxu0 0
        %5636 = vmatmul.mubr.bf16.gmra.mrb[0].mxu0 %v5463
        %v5637 = vpop.f32.mrb[0].mxu0
        %v5638 = vadd.f32 %v5490, %v5637
        %v5639 = vpop.f32.mrb[0].mxu0
        %v5640 = vpop.f32.mrb[0].mxu0
        %v5641 = vadd.f32 %v5490, %v5640
        %v5642 = vpop.f32.mrb[0].mxu0
        %5643 = vmatprep.mubr.bf16.mxu0 0
        %5644 = vmatmul.mubr.bf16.gmra.mrb[0].mxu0 %v5464
        %v5645 = vpop.f32.mrb[0].mxu0
        %v5646 = vadd.f32 %v5490, %v5645
        %v5647 = vpop.f32.mrb[0].mxu0
        %v5648 = vpop.f32.mrb[0].mxu0
        %v5649 = vadd.f32 %v5490, %v5648
        %v5650 = vpop.f32.mrb[0].mxu0
        %5651 = vmatprep.mubr.bf16.mxu0 0
        %5652 = vmatmul.mubr.bf16.gmra.mrb[0].mxu0 %v5465
        %v5653 = vpop.f32.mrb[0].mxu0
        %v5654 = vadd.f32 %v5490, %v5653
        %v5655 = vpop.f32.mrb[0].mxu0
        %v5656 = vpop.f32.mrb[0].mxu0
        %v5657 = vadd.f32 %v5490, %v5656
        %v5658 = vpop.f32.mrb[0].mxu0
        %5659 = vmatprep.mubr.bf16.mxu0 0
        %5660 = vmatmul.mubr.bf16.gmra.mrb[0].mxu0 %v5466
        %v5661 = vpop.f32.mrb[0].mxu0
        %v5662 = vadd.f32 %v5490, %v5661
        %v5663 = vpop.f32.mrb[0].mxu0
        %v5664 = vpop.f32.mrb[0].mxu0
        %v5665 = vadd.f32 %v5490, %v5664
        %v5666 = vpop.f32.mrb[0].mxu0
        %5667 = vmatprep.mubr.bf16.mxu0 0
        %5668 = vmatmul.mubr.bf16.gmra.mrb[0].mxu0 %v5467
        %v5669 = vpop.f32.mrb[0].mxu0
        %v5670 = vadd.f32 %v5490, %v5669
        %v5671 = vpop.f32.mrb[0].mxu0
        %v5672 = vpop.f32.mrb[0].mxu0
        %v5673 = vadd.f32 %v5490, %v5672
        %v5674 = vpop.f32.mrb[0].mxu0
        %5675 = vmatprep.mubr.bf16.mxu0 0
        %5676 = vmatmul.mubr.bf16.gmra.mrb[0].mxu0 %v5468
        %v5677 = vpop.f32.mrb[0].mxu0
        %v5678 = vadd.f32 %v5490, %v5677
        %v5679 = vpop.f32.mrb[0].mxu0
        %v5680 = vpop.f32.mrb[0].mxu0
        %v5681 = vadd.f32 %v5490, %v5680
        %v5682 = vpop.f32.mrb[0].mxu0
        %5683 = vmatprep.mubr.bf16.mxu0 0
        %5684 = vmatmul.mubr.bf16.gmra.mrb[0].mxu0 %v5469
        %v5685 = vpop.f32.mrb[0].mxu0
        %v5686 = vadd.f32 %v5490, %v5685
        %v5687 = vpop.f32.mrb[0].mxu0
        %v5688 = vpop.f32.mrb[0].mxu0
        %v5689 = vadd.f32 %v5490, %v5688
        %v5690 = vpop.f32.mrb[0].mxu0
        %5691 = vmatprep.mubr.bf16.mxu0 0
        %5692 = vmatmul.mubr.bf16.gmra.mrb[0].mxu0 %v5470
        %v5693 = vpop.f32.mrb[0].mxu0
        %v5694 = vadd.f32 %v5490, %v5693
        %v5695 = vpop.f32.mrb[0].mxu0
        %v5696 = vpop.f32.mrb[0].mxu0
        %v5697 = vadd.f32 %v5490, %v5696
        %v5698 = vpop.f32.mrb[0].mxu0
        %5699 = vdwg.mxu0
        %v5700 = vadd.f32 %v5168, %v5574
        %v5701 = vadd.f32 %v5171, %v5577
        %v5702 = vadd.f32 %v5176, %v5582
        %v5703 = vadd.f32 %v5179, %v5585
        %v5704 = vadd.f32 %v5184, %v5590
        %v5705 = vadd.f32 %v5187, %v5593
        %v5706 = vadd.f32 %v5192, %v5598
        %v5707 = vadd.f32 %v5195, %v5601
        %v5708 = vadd.f32 %v5200, %v5606
        %v5709 = vadd.f32 %v5203, %v5609
        %v5710 = vadd.f32 %v5208, %v5614
        %v5711 = vadd.f32 %v5211, %v5617
        %v5712 = vadd.f32 %v5216, %v5622
        %v5713 = vadd.f32 %v5219, %v5625
        %v5714 = vadd.f32 %v5224, %v5630
        %v5715 = vadd.f32 %v5227, %v5633
        %v5716 = vadd.f32 %v5232, %v5638
        %v5717 = vadd.f32 %v5235, %v5641
        %v5718 = vadd.f32 %v5240, %v5646
        %v5719 = vadd.f32 %v5243, %v5649
        %v5720 = vadd.f32 %v5248, %v5654
        %v5721 = vadd.f32 %v5251, %v5657
        %v5722 = vadd.f32 %v5256, %v5662
        %v5723 = vadd.f32 %v5259, %v5665
        %v5724 = vadd.f32 %v5264, %v5670
        %v5725 = vadd.f32 %v5267, %v5673
        %v5726 = vadd.f32 %v5272, %v5678
        %v5727 = vadd.f32 %v5275, %v5681
        %v5728 = vadd.f32 %v5280, %v5686
        %v5729 = vadd.f32 %v5283, %v5689
        %v5730 = vadd.f32 %v5288, %v5694
        %v5731 = vadd.f32 %v5291, %v5697
        %v5732 = vmul.f32 %v5700, 0.5
        %v5733 = vmul.f32 %v5701, 0.5
        %v5734 = vmul.f32 %v5702, 0.5
        %v5735 = vmul.f32 %v5703, 0.5
        %v5736 = vmul.f32 %v5704, 0.5
        %v5737 = vmul.f32 %v5705, 0.5
        %v5738 = vmul.f32 %v5706, 0.5
        %v5739 = vmul.f32 %v5707, 0.5
        %v5740 = vmul.f32 %v5708, 0.5
        %v5741 = vmul.f32 %v5709, 0.5
        %v5742 = vmul.f32 %v5710, 0.5
        %v5743 = vmul.f32 %v5711, 0.5
        %v5744 = vmul.f32 %v5712, 0.5
        %v5745 = vmul.f32 %v5713, 0.5
        %v5746 = vmul.f32 %v5714, 0.5
        %v5747 = vmul.f32 %v5715, 0.5
        %v5748 = vmul.f32 %v5716, 0.5
        %v5749 = vmul.f32 %v5717, 0.5
        %v5750 = vmul.f32 %v5718, 0.5
        %v5751 = vmul.f32 %v5719, 0.5
        %v5752 = vmul.f32 %v5720, 0.5
        %v5753 = vmul.f32 %v5721, 0.5
        %v5754 = vmul.f32 %v5722, 0.5
        %v5755 = vmul.f32 %v5723, 0.5
        %v5756 = vmul.f32 %v5724, 0.5
        %v5757 = vmul.f32 %v5725, 0.5
        %v5758 = vmul.f32 %v5726, 0.5
        %v5759 = vmul.f32 %v5727, 0.5
        %v5760 = vmul.f32 %v5728, 0.5
        %v5761 = vmul.f32 %v5729, 0.5
        %v5762 = vmul.f32 %v5730, 0.5
        %v5763 = vmul.f32 %v5731, 0.5
        %v5764 = vmul.f32 %v5700, 0.044715
        %v5765 = vmul.f32 %v5701, 0.044715
        %v5766 = vmul.f32 %v5702, 0.044715
        %v5767 = vmul.f32 %v5703, 0.044715
        %v5768 = vmul.f32 %v5704, 0.044715
        %v5769 = vmul.f32 %v5705, 0.044715
        %v5770 = vmul.f32 %v5706, 0.044715
        %v5771 = vmul.f32 %v5707, 0.044715
        %v5772 = vmul.f32 %v5708, 0.044715
        %v5773 = vmul.f32 %v5709, 0.044715
        %v5774 = vmul.f32 %v5710, 0.044715
        %v5775 = vmul.f32 %v5711, 0.044715
        %v5776 = vmul.f32 %v5712, 0.044715
        %v5777 = vmul.f32 %v5713, 0.044715
        %v5778 = vmul.f32 %v5714, 0.044715
        %v5779 = vmul.f32 %v5715, 0.044715
        %v5780 = vmul.f32 %v5716, 0.044715
        %v5781 = vmul.f32 %v5717, 0.044715
        %v5782 = vmul.f32 %v5718, 0.044715
        %v5783 = vmul.f32 %v5719, 0.044715
        %v5784 = vmul.f32 %v5720, 0.044715
        %v5785 = vmul.f32 %v5721, 0.044715
        %v5786 = vmul.f32 %v5722, 0.044715
        %v5787 = vmul.f32 %v5723, 0.044715
        %v5788 = vmul.f32 %v5724, 0.044715
        %v5789 = vmul.f32 %v5725, 0.044715
        %v5790 = vmul.f32 %v5726, 0.044715
        %v5791 = vmul.f32 %v5727, 0.044715
        %v5792 = vmul.f32 %v5728, 0.044715
        %v5793 = vmul.f32 %v5729, 0.044715
        %v5794 = vmul.f32 %v5730, 0.044715
        %v5795 = vmul.f32 %v5731, 0.044715
        %v5796 = vmul.f32 %v5764, %v5700
        %v5797 = vmul.f32 %v5765, %v5701
        %v5798 = vmul.f32 %v5766, %v5702
        %v5799 = vmul.f32 %v5767, %v5703
        %v5800 = vmul.f32 %v5768, %v5704
        %v5801 = vmul.f32 %v5769, %v5705
        %v5802 = vmul.f32 %v5770, %v5706
        %v5803 = vmul.f32 %v5771, %v5707
        %v5804 = vmul.f32 %v5772, %v5708
        %v5805 = vmul.f32 %v5773, %v5709
        %v5806 = vmul.f32 %v5774, %v5710
        %v5807 = vmul.f32 %v5775, %v5711
        %v5808 = vmul.f32 %v5776, %v5712
        %v5809 = vmul.f32 %v5777, %v5713
        %v5810 = vmul.f32 %v5778, %v5714
        %v5811 = vmul.f32 %v5779, %v5715
        %v5812 = vmul.f32 %v5780, %v5716
        %v5813 = vmul.f32 %v5781, %v5717
        %v5814 = vmul.f32 %v5782, %v5718
        %v5815 = vmul.f32 %v5783, %v5719
        %v5816 = vmul.f32 %v5784, %v5720
        %v5817 = vmul.f32 %v5785, %v5721
        %v5818 = vmul.f32 %v5786, %v5722
        %v5819 = vmul.f32 %v5787, %v5723
        %v5820 = vmul.f32 %v5788, %v5724
        %v5821 = vmul.f32 %v5789, %v5725
        %v5822 = vmul.f32 %v5790, %v5726
        %v5823 = vmul.f32 %v5791, %v5727
        %v5824 = vmul.f32 %v5792, %v5728
        %v5825 = vmul.f32 %v5793, %v5729
        %v5826 = vmul.f32 %v5794, %v5730
        %v5827 = vmul.f32 %v5795, %v5731
        %v5828 = vmul.f32 %v5796, %v5700
        %v5829 = vmul.f32 %v5797, %v5701
        %v5830 = vmul.f32 %v5798, %v5702
        %v5831 = vmul.f32 %v5799, %v5703
        %v5832 = vmul.f32 %v5800, %v5704
        %v5833 = vmul.f32 %v5801, %v5705
        %v5834 = vmul.f32 %v5802, %v5706
        %v5835 = vmul.f32 %v5803, %v5707
        %v5836 = vmul.f32 %v5804, %v5708
        %v5837 = vmul.f32 %v5805, %v5709
        %v5838 = vmul.f32 %v5806, %v5710
        %v5839 = vmul.f32 %v5807, %v5711
        %v5840 = vmul.f32 %v5808, %v5712
        %v5841 = vmul.f32 %v5809, %v5713
        %v5842 = vmul.f32 %v5810, %v5714
        %v5843 = vmul.f32 %v5811, %v5715
        %v5844 = vmul.f32 %v5812, %v5716
        %v5845 = vmul.f32 %v5813, %v5717
        %v5846 = vmul.f32 %v5814, %v5718
        %v5847 = vmul.f32 %v5815, %v5719
        %v5848 = vmul.f32 %v5816, %v5720
        %v5849 = vmul.f32 %v5817, %v5721
        %v5850 = vmul.f32 %v5818, %v5722
        %v5851 = vmul.f32 %v5819, %v5723
        %v5852 = vmul.f32 %v5820, %v5724
        %v5853 = vmul.f32 %v5821, %v5725
        %v5854 = vmul.f32 %v5822, %v5726
        %v5855 = vmul.f32 %v5823, %v5727
        %v5856 = vmul.f32 %v5824, %v5728
        %v5857 = vmul.f32 %v5825, %v5729
        %v5858 = vmul.f32 %v5826, %v5730
        %v5859 = vmul.f32 %v5827, %v5731
        %v5860 = vadd.f32 %v5700, %v5828
        %v5861 = vadd.f32 %v5701, %v5829
        %v5862 = vadd.f32 %v5702, %v5830
        %v5863 = vadd.f32 %v5703, %v5831
        %v5864 = vadd.f32 %v5704, %v5832
        %v5865 = vadd.f32 %v5705, %v5833
        %v5866 = vadd.f32 %v5706, %v5834
        %v5867 = vadd.f32 %v5707, %v5835
        %v5868 = vadd.f32 %v5708, %v5836
        %v5869 = vadd.f32 %v5709, %v5837
        %v5870 = vadd.f32 %v5710, %v5838
        %v5871 = vadd.f32 %v5711, %v5839
        %v5872 = vadd.f32 %v5712, %v5840
        %v5873 = vadd.f32 %v5713, %v5841
        %v5874 = vadd.f32 %v5714, %v5842
        %v5875 = vadd.f32 %v5715, %v5843
        %v5876 = vadd.f32 %v5716, %v5844
        %v5877 = vadd.f32 %v5717, %v5845
        %v5878 = vadd.f32 %v5718, %v5846
        %v5879 = vadd.f32 %v5719, %v5847
        %v5880 = vadd.f32 %v5720, %v5848
        %v5881 = vadd.f32 %v5721, %v5849
        %v5882 = vadd.f32 %v5722, %v5850
        %v5883 = vadd.f32 %v5723, %v5851
        %v5884 = vadd.f32 %v5724, %v5852
        %v5885 = vadd.f32 %v5725, %v5853
        %v5886 = vadd.f32 %v5726, %v5854
        %v5887 = vadd.f32 %v5727, %v5855
        %v5888 = vadd.f32 %v5728, %v5856
        %v5889 = vadd.f32 %v5729, %v5857
        %v5890 = vadd.f32 %v5730, %v5858
        %v5891 = vadd.f32 %v5731, %v5859
        %v5892 = vmul.f32 %v5860, 0.7978846
        %v5893 = vmul.f32 %v5861, 0.7978846
        %v5894 = vmul.f32 %v5862, 0.7978846
        %v5895 = vmul.f32 %v5863, 0.7978846
        %v5896 = vmul.f32 %v5864, 0.7978846
        %v5897 = vmul.f32 %v5865, 0.7978846
        %v5898 = vmul.f32 %v5866, 0.7978846
        %v5899 = vmul.f32 %v5867, 0.7978846
        %v5900 = vmul.f32 %v5868, 0.7978846
        %v5901 = vmul.f32 %v5869, 0.7978846
        %v5902 = vmul.f32 %v5870, 0.7978846
        %v5903 = vmul.f32 %v5871, 0.7978846
        %v5904 = vmul.f32 %v5872, 0.7978846
        %v5905 = vmul.f32 %v5873, 0.7978846
        %v5906 = vmul.f32 %v5874, 0.7978846
        %v5907 = vmul.f32 %v5875, 0.7978846
        %v5908 = vmul.f32 %v5876, 0.7978846
        %v5909 = vmul.f32 %v5877, 0.7978846
        %v5910 = vmul.f32 %v5878, 0.7978846
        %v5911 = vmul.f32 %v5879, 0.7978846
        %v5912 = vmul.f32 %v5880, 0.7978846
        %v5913 = vmul.f32 %v5881, 0.7978846
        %v5914 = vmul.f32 %v5882, 0.7978846
        %v5915 = vmul.f32 %v5883, 0.7978846
        %v5916 = vmul.f32 %v5884, 0.7978846
        %v5917 = vmul.f32 %v5885, 0.7978846
        %v5918 = vmul.f32 %v5886, 0.7978846
        %v5919 = vmul.f32 %v5887, 0.7978846
        %v5920 = vmul.f32 %v5888, 0.7978846
        %v5921 = vmul.f32 %v5889, 0.7978846
        %v5922 = vmul.f32 %v5890, 0.7978846
        %v5923 = vmul.f32 %v5891, 0.7978846
        %v5924 = vtanh.pop %v5892
        %v5925 = vtanh.pop %v5893
        %v5926 = vtanh.pop %v5894
        %v5927 = vtanh.pop %v5895
        %v5928 = vtanh.pop %v5896
        %v5929 = vtanh.pop %v5897
        %v5930 = vtanh.pop %v5898
        %v5931 = vtanh.pop %v5899
        %v5932 = vtanh.pop %v5900
        %v5933 = vtanh.pop %v5901
        %v5934 = vtanh.pop %v5902
        %v5935 = vtanh.pop %v5903
        %v5936 = vtanh.pop %v5904
        %v5937 = vtanh.pop %v5905
        %v5938 = vtanh.pop %v5906
        %v5939 = vtanh.pop %v5907
        %v5940 = vtanh.pop %v5908
        %v5941 = vtanh.pop %v5909
        %v5942 = vtanh.pop %v5910
        %v5943 = vtanh.pop %v5911
        %v5944 = vtanh.pop %v5912
        %v5945 = vtanh.pop %v5913
        %v5946 = vtanh.pop %v5914
        %v5947 = vtanh.pop %v5915
        %v5948 = vtanh.pop %v5916
        %v5949 = vtanh.pop %v5917
        %v5950 = vtanh.pop %v5918
        %v5951 = vtanh.pop %v5919
        %v5952 = vtanh.pop %v5920
        %v5953 = vtanh.pop %v5921
        %v5954 = vtanh.pop %v5922
        %v5955 = vtanh.pop %v5923
        %v5956 = vadd.f32 %v5924, 1.0
        %v5957 = vadd.f32 %v5925, 1.0
        %v5958 = vadd.f32 %v5926, 1.0
        %v5959 = vadd.f32 %v5927, 1.0
        %v5960 = vadd.f32 %v5928, 1.0
        %v5961 = vadd.f32 %v5929, 1.0
        %v5962 = vadd.f32 %v5930, 1.0
        %v5963 = vadd.f32 %v5931, 1.0
        %v5964 = vadd.f32 %v5932, 1.0
        %v5965 = vadd.f32 %v5933, 1.0
        %v5966 = vadd.f32 %v5934, 1.0
        %v5967 = vadd.f32 %v5935, 1.0
        %v5968 = vadd.f32 %v5936, 1.0
        %v5969 = vadd.f32 %v5937, 1.0
        %v5970 = vadd.f32 %v5938, 1.0
        %v5971 = vadd.f32 %v5939, 1.0
        %v5972 = vadd.f32 %v5940, 1.0
        %v5973 = vadd.f32 %v5941, 1.0
        %v5974 = vadd.f32 %v5942, 1.0
        %v5975 = vadd.f32 %v5943, 1.0
        %v5976 = vadd.f32 %v5944, 1.0
        %v5977 = vadd.f32 %v5945, 1.0
        %v5978 = vadd.f32 %v5946, 1.0
        %v5979 = vadd.f32 %v5947, 1.0
        %v5980 = vadd.f32 %v5948, 1.0
        %v5981 = vadd.f32 %v5949, 1.0
        %v5982 = vadd.f32 %v5950, 1.0
        %v5983 = vadd.f32 %v5951, 1.0
        %v5984 = vadd.f32 %v5952, 1.0
        %v5985 = vadd.f32 %v5953, 1.0
        %v5986 = vadd.f32 %v5954, 1.0
        %v5987 = vadd.f32 %v5955, 1.0
        %v5988 = vmul.f32 %v5732, %v5956
        %v5989 = vmul.f32 %v5733, %v5957
        %v5990 = vmul.f32 %v5734, %v5958
        %v5991 = vmul.f32 %v5735, %v5959
        %v5992 = vmul.f32 %v5736, %v5960
        %v5993 = vmul.f32 %v5737, %v5961
        %v5994 = vmul.f32 %v5738, %v5962
        %v5995 = vmul.f32 %v5739, %v5963
        %v5996 = vmul.f32 %v5740, %v5964
        %v5997 = vmul.f32 %v5741, %v5965
        %v5998 = vmul.f32 %v5742, %v5966
        %v5999 = vmul.f32 %v5743, %v5967
        %v6000 = vmul.f32 %v5744, %v5968
        %v6001 = vmul.f32 %v5745, %v5969
        %v6002 = vmul.f32 %v5746, %v5970
        %v6003 = vmul.f32 %v5747, %v5971
        %v6004 = vmul.f32 %v5748, %v5972
        %v6005 = vmul.f32 %v5749, %v5973
        %v6006 = vmul.f32 %v5750, %v5974
        %v6007 = vmul.f32 %v5751, %v5975
        %v6008 = vmul.f32 %v5752, %v5976
        %v6009 = vmul.f32 %v5753, %v5977
        %v6010 = vmul.f32 %v5754, %v5978
        %v6011 = vmul.f32 %v5755, %v5979
        %v6012 = vmul.f32 %v5756, %v5980
        %v6013 = vmul.f32 %v5757, %v5981
        %v6014 = vmul.f32 %v5758, %v5982
        %v6015 = vmul.f32 %v5759, %v5983
        %v6016 = vmul.f32 %v5760, %v5984
        %v6017 = vmul.f32 %v5761, %v5985
        %v6018 = vmul.f32 %v5762, %v5986
        %v6019 = vmul.f32 %v5763, %v5987
        %6020 = vst [vmem:[%s217] sm:$0xff] %v5988
        %6021 = vst [vmem:[%s217 + $0x8] sm:$0xff] %v5989
        %6022 = vst [vmem:[%s217 + $0x10] sm:$0xff] %v5990
        %6023 = vst [vmem:[%s217 + $0x18] sm:$0xff] %v5991
        %6024 = vst [vmem:[%s217 + $0x20] sm:$0xff] %v5992
        %6025 = vst [vmem:[%s217 + $0x28] sm:$0xff] %v5993
        %6026 = vst [vmem:[%s217 + $0x30] sm:$0xff] %v5994
        %6027 = vst [vmem:[%s217 + $0x38] sm:$0xff] %v5995
        %6028 = vst [vmem:[%s217 + $0x40] sm:$0xff] %v5996
        %6029 = vst [vmem:[%s217 + $0x48] sm:$0xff] %v5997
        %6030 = vst [vmem:[%s217 + $0x50] sm:$0xff] %v5998
        %6031 = vst [vmem:[%s217 + $0x58] sm:$0xff] %v5999
        %6032 = vst [vmem:[%s217 + $0x60] sm:$0xff] %v6000
        %6033 = vst [vmem:[%s217 + $0x68] sm:$0xff] %v6001
        %6034 = vst [vmem:[%s217 + $0x70] sm:$0xff] %v6002
        %6035 = vst [vmem:[%s217 + $0x78] sm:$0xff] %v6003
        %6036 = vst [vmem:[%s217 + $0x80] sm:$0xff] %v6004
        %6037 = vst [vmem:[%s217 + $0x88] sm:$0xff] %v6005
        %6038 = vst [vmem:[%s217 + $0x90] sm:$0xff] %v6006
        %6039 = vst [vmem:[%s217 + $0x98] sm:$0xff] %v6007
        %6040 = vst [vmem:[%s217 + $0xa0] sm:$0xff] %v6008
        %6041 = vst [vmem:[%s217 + $0xa8] sm:$0xff] %v6009
        %6042 = vst [vmem:[%s217 + $0xb0] sm:$0xff] %v6010
        %6043 = vst [vmem:[%s217 + $0xb8] sm:$0xff] %v6011
        %6044 = vst [vmem:[%s217 + $0xc0] sm:$0xff] %v6012
        %6045 = vst [vmem:[%s217 + $0xc8] sm:$0xff] %v6013
        %6046 = vst [vmem:[%s217 + $0xd0] sm:$0xff] %v6014
        %6047 = vst [vmem:[%s217 + $0xd8] sm:$0xff] %v6015
        %6048 = vst [vmem:[%s217 + $0xe0] sm:$0xff] %v6016
        %6049 = vst [vmem:[%s217 + $0xe8] sm:$0xff] %v6017
        %6050 = vst [vmem:[%s217 + $0xf0] sm:$0xff] %v6018
        %6051 = vst [vmem:[%s217 + $0xf8] sm:$0xff] %v6019
        %s6052 = sand.u32 %s137, 1
        %s6053 = scalar_lea.sflag [#allocation4], %s6052
        %s6054 = sand.u32 %s137, 1
        %s6055 = smul.addr %s6054, 256
        %s6056 = scalar_lea.vmem [#allocation3], %s6055
        // Predicated region
        $region41: #{tpu_custom_call.1} parent=39 // pred_check
          %p6057 = pneg %p147
        $region42: #{tpu_custom_call.1} parent=39 // pred_check_branch
          %6059 = sbr.rel (%p6057) target = $region44
        $region43: #{tpu_custom_call.1} parent=39 // pred_region
          %s6061 = ssub.s32 4096, 4096
          %6062 = vsyncadd %s6053, %s6061
          %s6063 = smul.addr %s19, 32
          %s6064 = smul.addr %s6063, 128
          %s6065 = scalar_lea.hbm %s5, %s6064
          %s6066 = sshll.u32 %s6056, 4
          %s6067 = int_to_ptr.vmem [resolvable:$true] %s6066
          %6072 = dma.vmem_to_hbm [thread:$0]  %s6067, 4096, %s6065, %s6053, 128, 128, 8
        $region44: #{tpu_custom_call.1} parent=39 // pred_fallthru
          _
      $region40: #{tpu_custom_call.1} parent=5 // pred_fallthru
        _
      %p6073 = scmp.le.s32.totalorder 2, %s14
      // Predicated region
      $region45: #{tpu_custom_call.1} parent=5 // pred_check
        %p6074 = pneg %p6073
      $region46: #{tpu_custom_call.1} parent=5 // pred_check_branch
        %6076 = sbr.rel (%p6074) target = $region48
      $region47: #{tpu_custom_call.1} parent=5 // pred_region
        %s6077 = ssub.s32 %s14, 2
        // Predicated region
        $region49: #{tpu_custom_call.1} parent=47 // pred_check
          %p6078 = pneg %p153
        $region50: #{tpu_custom_call.1} parent=47 // pred_check_branch
          %6080 = sbr.rel (%p6078) target = $region52
        $region51: #{tpu_custom_call.1} parent=47 // pred_region
          %s6081 = sand.u32 %s138, 1
          %s6082 = scalar_lea.sflag [#allocation4], %s6081
          %s6083 = sand.u32 %s138, 1
          %s6084 = smul.addr %s6083, 256
          %s6085 = scalar_lea.vmem [#allocation3], %s6084
          %6086 = dma.done %s6082, 4096
        $region52: #{tpu_custom_call.1} parent=47 // pred_fallthru
          _
      $region48: #{tpu_custom_call.1} parent=5 // pred_fallthru
        _
    $region6: #{tpu_custom_call.1} parent=1 // loop_footer
      %s18 = sadd.s32 1, %s14
    $region7: #{tpu_custom_call.1} parent=1 // loop_footer_branch
      %13 = sbr.rel target = $region3
    $region8: #{tpu_custom_call.1} parent=1 // loop_exit
      _
    %6087 = vsyncpa [#allocation4], 1
    %s6088 = scalar_lea.sflag [#allocation4], 1
    %6089 = vsyncpa %s6088, 1

</llo_original>
